<compile_context>
chip_gen: v7x
topology: tpu7x:2x2x1
jax: 0.10.0
libtpu: 0.0.40
codegen_flags: <defaults>
</compile_context>

<pallas_src>
import jax
import jax.numpy as jnp
from jax.experimental import pallas as pl
from jax.experimental.pallas import tpu as pltpu

NEG_SLOPE = 0.01          # nn.LeakyReLU() default
BN_EPS = 1e-5             # nn.BatchNorm1d default
LANE = 128                # TPU lane width


def _round_up(n, m):
    return ((n + m - 1) // m) * m


# --------------------- per-generation budget derivation ---------------------

_FALLBACK_VMEM_CAP = 64 * 1024 * 1024     # conservative (v7x per-TC) fallback


def _vmem_capacity_bytes():
    try:
        return int(pltpu.get_tpu_info().vmem_capacity_bytes)
    except Exception:
        return _FALLBACK_VMEM_CAP


def _vmem_limit_bytes():
    cap = _vmem_capacity_bytes()
    # v5e/v6e (128 MiB physical) -> 96 MiB scoped; v7x (64 MiB/TC) -> ~48 MiB.
    return int(min(96 * 1024 * 1024, (cap * 3) // 4))


def _tile_p_max():
    # 512-1024 row tiles reach ~85% of HBM roofline vs ~63% at 256.
    return 1024 if _vmem_capacity_bytes() >= 100 * 1024 * 1024 else 512


def _pick_tile_p(p_true, kc_p, cout_p):
    """Row-tile size: as big as the VMEM budget allows, but keep nt >= 2 so
    the 'parallel' grid axis can still use both TensorCores (v7x megacore)."""
    tile = _tile_p_max()
    tile = min(tile, max(8, _round_up((p_true + 1) // 2, 8)))
    budget = _vmem_limit_bytes() // 2

    def bytes_needed(t):
        # double-buffered patches + double-buffered y + single-buffered weight
        return 2 * t * kc_p * 2 + 2 * t * cout_p * 2 + kc_p * cout_p * 2

    while tile > 8 and bytes_needed(tile) > budget:
        tile = max(8, _round_up(tile // 2, 8))
    return tile


def _cparams():
    return pltpu.CompilerParams(
        dimension_semantics=("parallel",),
        vmem_limit_bytes=_vmem_limit_bytes(),
    )


def _resident_spec(shape):
    """BlockSpec for a block that never changes across the grid: index (0,0),
    single-buffered (no point double-buffering an invariant weight block)."""
    buffered = getattr(pl, "Buffered", None)
    if buffered is not None:
        try:
            return pl.BlockSpec(shape, lambda i: (0, 0),
                                pipeline_mode=buffered(1))
        except TypeError:
            pass
    return pl.BlockSpec(shape, lambda i: (0, 0))


# ----------------------------- Pallas kernels ------------------------------

def _matmul_act_stats_kernel(p_ref, w_ref, y_ref, stats_ref):
    # p_ref: [TILE_P, kc_p] bf16, w_ref: [kc_p, cout_p] bf16 (resident)
    y = jnp.dot(p_ref[...], w_ref[...], preferred_element_type=jnp.float32)
    y = jnp.where(y >= 0, y, NEG_SLOPE * y)                 # LeakyReLU
    y_ref[...] = y.astype(y_ref.dtype)                      # bf16 activation
    # per-tile partial statistics for the (global) BatchNorm1d: two direct
    # row stores, no zeros broadcast / concat in the MXU-critical loop.
    stats_ref[0, 0:1, :] = jnp.sum(y, axis=0, keepdims=True)        # sum
    stats_ref[0, 1:2, :] = jnp.sum(y * y, axis=0, keepdims=True)    # sum of sq


def _bn_dual_add_kernel(y_ref, ysc_ref, sm_ref, bm_ref, ss_ref, bs_ref, o_ref):
    # Fused epilogue: bn2(main) + bn0_2(shortcut) + residual add, one pass.
    y = y_ref[...].astype(jnp.float32)
    s = ysc_ref[...].astype(jnp.float32)
    o_ref[...] = (y * sm_ref[...] + bm_ref[...]
                  + s * ss_ref[...] + bs_ref[...]).astype(o_ref.dtype)


def _matmul_kernel(p_ref, w_ref, o_ref):
    # plain strided-conv matmul (SparseConv3d pooling layer)
    o_ref[...] = jnp.dot(p_ref[...], w_ref[...],
                         preferred_element_type=jnp.float32).astype(o_ref.dtype)


# ------------------------------- JAX glue ----------------------------------

def _im2col(x, ksize, pads, strides):
    """x: [N, D, H, W, C] -> patches [N*Do*Ho*Wo, KD*KH*KW*C]."""
    kd, kh, kw = ksize
    pd, ph, pw = pads
    sd, sh, sw = strides
    N, D, H, W, C = x.shape
    xp = jnp.pad(x, ((0, 0), (pd, pd), (ph, ph), (pw, pw), (0, 0)))
    Do = (D + 2 * pd - kd) // sd + 1
    Ho = (H + 2 * ph - kh) // sh + 1
    Wo = (W + 2 * pw - kw) // sw + 1
    taps = []
    for a in range(kd):
        for b in range(kh):
            for c in range(kw):
                taps.append(
                    xp[:,
                       a:a + (Do - 1) * sd + 1:sd,
                       b:b + (Ho - 1) * sh + 1:sh,
                       c:c + (Wo - 1) * sw + 1:sw,
                       :])
    patches = jnp.stack(taps, axis=-2)                 # [N,Do,Ho,Wo,K,C]
    patches = patches.reshape(N * Do * Ho * Wo, kd * kh * kw * C)
    return patches, (N, Do, Ho, Wo)


def _pad_rows(a, mult):
    r = a.shape[0]
    rp = _round_up(r, mult)
    if rp != r:
        a = jnp.pad(a, ((0, rp - r), (0, 0)))
    return a


def _pad_kc(kc):
    """Pad the K*C contraction dim: multiple of 16 (bf16 sublane pack), 128
    when large enough that the inflation is negligible."""
    if kc % 128 == 0:
        return kc
    if kc >= 256:
        return _round_up(kc, 128)
    return _round_up(kc, 16)


def _prep_operands(patches, w, p_true, kc, cout):
    # NOTE: keep cout_p = round_up(cout, 128); on v6e/v7x round to 256 when
    # cout > 128 for full MXU N-width once the kernel is no longer HBM-bound.
    cout_p = _round_up(cout, LANE)
    kc_p = _pad_kc(kc)
    wm = jnp.pad(w.reshape(kc, cout),
                 ((0, kc_p - kc), (0, cout_p - cout))).astype(jnp.bfloat16)
    patches = patches.astype(jnp.bfloat16)
    if kc_p != kc:
        patches = jnp.pad(patches, ((0, 0), (0, kc_p - kc)))
    tile_p = _pick_tile_p(p_true, kc_p, cout_p)
    patches = _pad_rows(patches, tile_p)
    return patches, wm, cout_p, kc_p, tile_p


def _conv_act_stats(x, w, ksize, pads):
    """SubMConv3d (dense-equivalent, stride 1) -> LeakyReLU, plus exact
    training-mode BatchNorm1d batch statistics (gamma=1, beta=0).
    Returns (y [p_pad, cout_p] bf16, scale [1,cout_p], shift [1,cout_p], meta).
    The normalization itself is NOT applied here (it is folded either into the
    next layer's patch build or into the final fused epilogue kernel)."""
    patches, dims = _im2col(x, ksize, pads, (1, 1, 1))
    p_true, kc = patches.shape
    cout = w.shape[-1]
    patches, wm, cout_p, kc_p, tile_p = _prep_operands(patches, w, p_true, kc, cout)
    p_pad = patches.shape[0]
    nt = p_pad // tile_p

    # ---- pass 1: tiled matmul + LeakyReLU + per-tile partial BN stats ----
    y, stats = pl.pallas_call(
        _matmul_act_stats_kernel,
        out_shape=(jax.ShapeDtypeStruct((p_pad, cout_p), jnp.bfloat16),
                   jax.ShapeDtypeStruct((nt, 2, cout_p), jnp.float32)),
        grid=(nt,),
        in_specs=[pl.BlockSpec((tile_p, kc_p), lambda i: (i, 0)),
                  _resident_spec((kc_p, cout_p))],           # weight, 1-buffered
        out_specs=(pl.BlockSpec((tile_p, cout_p), lambda i: (i, 0)),
                   pl.BlockSpec((1, 2, cout_p), lambda i: (i, 0, 0))),
        compiler_params=_cparams(),
    )(patches, wm)

    # combine partial stats -> exact global batch statistics (padded rows and
    # padded lanes are zero and contribute nothing; divide by true row count)
    s = jnp.sum(stats[:, 0, :], axis=0)
    ss = jnp.sum(stats[:, 1, :], axis=0)
    mean = s / p_true
    var = jnp.maximum(ss / p_true - mean * mean, 0.0)   # biased batch variance
    inv = jax.lax.rsqrt(var + BN_EPS)
    scale = inv[None, :]                                # gamma = 1
    shift = (-mean * inv)[None, :]                      # beta = 0

    meta = (p_true, cout, dims, cout_p, tile_p, p_pad)
    return y, scale, shift, meta


def _bn_apply_dense(y, scale, shift, meta):
    """Apply y*scale+shift in JAX; XLA fuses it into the next layer's im2col
    pad/gather, so no standalone normalize streaming pass is needed."""
    p_true, cout, (N, Do, Ho, Wo), _, _, _ = meta
    yb = (y[:p_true, :cout].astype(jnp.float32)
          * scale[:, :cout] + shift[:, :cout])
    return yb.reshape(N, Do, Ho, Wo, cout)


def _bn_dual_add(y_m, scale_m, shift_m, y_s, scale_s, shift_s, meta,
                 out_dtype=jnp.float32):
    """Final fused epilogue: bn2(y_main) + bn0_2(y_shortcut) + residual add."""
    assert y_m.shape == y_s.shape
    p_true, cout, (N, Do, Ho, Wo), cout_p, tile_p, p_pad = meta
    nt = p_pad // tile_p
    out = pl.pallas_call(
        _bn_dual_add_kernel,
        out_shape=jax.ShapeDtypeStruct((p_pad, cout_p), out_dtype),
        grid=(nt,),
        in_specs=[pl.BlockSpec((tile_p, cout_p), lambda i: (i, 0)),
                  pl.BlockSpec((tile_p, cout_p), lambda i: (i, 0)),
                  _resident_spec((1, cout_p)),
                  _resident_spec((1, cout_p)),
                  _resident_spec((1, cout_p)),
                  _resident_spec((1, cout_p))],
        out_specs=pl.BlockSpec((tile_p, cout_p), lambda i: (i, 0)),
        compiler_params=_cparams(),
    )(y_m, y_s, scale_m, shift_m, scale_s, shift_s)
    return out[:p_true, :cout].reshape(N, Do, Ho, Wo, cout)


def _strided_conv(x, w, ksize, pads, strides, out_dtype=jnp.float32):
    """SparseConv3d (dense-equivalent strided conv), tiled matmul."""
    patches, (N, Do, Ho, Wo) = _im2col(x, ksize, pads, strides)
    p_true, kc = patches.shape
    cout = w.shape[-1]
    patches, wm, cout_p, kc_p, tile_p = _prep_operands(patches, w, p_true, kc, cout)
    p_pad = patches.shape[0]
    nt = p_pad // tile_p
    out = pl.pallas_call(
        _matmul_kernel,
        out_shape=jax.ShapeDtypeStruct((p_pad, cout_p), out_dtype),
        grid=(nt,),
        in_specs=[pl.BlockSpec((tile_p, kc_p), lambda i: (i, 0)),
                  _resident_spec((kc_p, cout_p))],
        out_specs=pl.BlockSpec((tile_p, cout_p), lambda i: (i, 0)),
        compiler_params=_cparams(),
    )(patches, wm)
    return out[:p_true, :cout].reshape(N, Do, Ho, Wo, cout)


def resblock_forward(x, params, pooling=True, height_pooling=False):
    """Forward pass of ResBlock.  x: [N, D, H, W, Cin] (channels-last)."""
    w1, w1_2, w2, w3, wpool = params

    # shortcut branch: conv3x1 -> act -> bn0 -> conv1x3 -> act -> (bn0_2 deferred)
    y1, sc1, sh1, m1 = _conv_act_stats(x, w1, (3, 1, 3), (1, 0, 1))
    x_sc = _bn_apply_dense(y1, sc1, sh1, m1)            # bn0, fused into next im2col
    y_sc, sc_s, sh_s, _ = _conv_act_stats(x_sc, w1_2, (1, 3, 3), (0, 1, 1))

    # main branch: conv1x3 -> act -> bn1 -> conv3x1 -> act -> (bn2 deferred)
    y2, sc2, sh2, m2 = _conv_act_stats(x, w2, (1, 3, 3), (0, 1, 1))
    x_m = _bn_apply_dense(y2, sc2, sh2, m2)             # bn1, fused into next im2col
    y3, sc3, sh3, m3 = _conv_act_stats(x_m, w3, (3, 1, 3), (1, 0, 1))

    # fused epilogue: bn2(main) + bn0_2(shortcut) + residual add, f32 output
    resA = _bn_dual_add(y3, sc3, sh3, y_sc, sc_s, sh_s, m3)

    if pooling:
        strides = (2, 2, 2) if height_pooling else (2, 2, 1)
        resB = _strided_conv(resA, wpool, (3, 3, 3), (1, 1, 1), strides)
        return resB, resA
    return resA


# --------------------------------- main -------------------------------------

if __name__ == "__main__":
    key = jax.random.PRNGKey(0)
    kx, k1, k2, k3, k4, k5 = jax.random.split(key, 6)

    N, D, H, W = 2, 8, 8, 8
    Cin, Cout = 4, 8

    x = jax.random.normal(kx, (N, D, H, W, Cin), jnp.float32)

    # Conv weights, shape [KD, KH, KW, Cin, Cout]
    w1 = 0.1 * jax.random.normal(k1, (3, 1, 3, Cin, Cout), jnp.float32)
    w1_2 = 0.1 * jax.random.normal(k2, (1, 3, 3, Cout, Cout), jnp.float32)
    w2 = 0.1 * jax.random.normal(k3, (1, 3, 3, Cin, Cout), jnp.float32)
    w3 = 0.1 * jax.random.normal(k4, (3, 1, 3, Cout, Cout), jnp.float32)
    wpool = 0.1 * jax.random.normal(k5, (3, 3, 3, Cout, Cout), jnp.float32)

    fwd = jax.jit(resblock_forward, static_argnames=("pooling", "height_pooling"))
    resB, resA = fwd(x, (w1, w1_2, w2, w3, wpool),
                     pooling=True, height_pooling=False)

    jax.block_until_ready((resB, resA))
    assert resA.shape == (N, D, H, W, Cout)
    assert resB.shape == (N, D // 2, H // 2, W, Cout)   # stride (2,2,1) pool
    assert bool(jnp.all(jnp.isfinite(resA))) and bool(jnp.all(jnp.isfinite(resB)))
    print("KERNEL_OK")
</pallas_src>

<mosaic_0001>
module attributes {stable_mosaic.version = 11 : i64} {
  func.func @_matmul_act_stats_kernel(%arg0: i32, %arg1: memref<512x48xbf16, #tpu.memory_space<vmem>>, %arg2: memref<48x128xbf16, #tpu.memory_space<vmem>>, %arg3: memref<512x128xbf16, #tpu.memory_space<vmem>>, %arg4: memref<1x2x128xf32, #tpu.memory_space<vmem>>) attributes {dimension_semantics = [#tpu.dimension_semantics<parallel>], iteration_bounds = array<i64: 2>, scalar_prefetch = 0 : i64, scratch_operands = 0 : i64, tpu.core_type = #tpu.core_type<tc>, window_params = [{transform_indices = @transform_0, window_bounds = array<i64: 512, 48>}, {pipeline_mode = #tpu.pipeline_mode<synchronous>, transform_indices = @transform_1, window_bounds = array<i64: 48, 128>}, {transform_indices = @transform_2, window_bounds = array<i64: 512, 128>}, {transform_indices = @transform_3, window_bounds = array<i64: 1, 2, 128>}]} {
    %c0 = arith.constant 0 : index
    %c0_0 = arith.constant 0 : index
    %0 = vector.load %arg1[%c0, %c0_0] : memref<512x48xbf16, #tpu.memory_space<vmem>>, vector<512x48xbf16>
    %c0_1 = arith.constant 0 : index
    %c0_2 = arith.constant 0 : index
    %1 = vector.load %arg2[%c0_1, %c0_2] : memref<48x128xbf16, #tpu.memory_space<vmem>>, vector<48x128xbf16>
    %cst = arith.constant dense<0.000000e+00> : vector<512x128xf32>
    %2 = tpu.matmul %0, %1, %cst {dimension_numbers = #tpu.dot_dimension_numbers<[1], [0], [0], [1], [0, 0, 1, 1], [], []>} : vector<512x48xbf16>, vector<48x128xbf16>, vector<512x128xf32> -> vector<512x128xf32>
    %cst_3 = arith.constant 0.000000e+00 : f32
    %3 = vector.broadcast %cst_3 : f32 to vector<512x128xf32>
    %4 = arith.cmpf oge, %2, %3 : vector<512x128xf32>
    %cst_4 = arith.constant 0.00999999977 : f32
    %5 = vector.broadcast %cst_4 : f32 to vector<512x128xf32>
    %6 = arith.mulf %5, %2 : vector<512x128xf32>
    %7 = arith.select %4, %2, %6 : vector<512x128xi1>, vector<512x128xf32>
    %8 = arith.truncf %7 : vector<512x128xf32> to vector<512x128xbf16>
    %c0_5 = arith.constant 0 : index
    %c0_6 = arith.constant 0 : index
    %9 = vector.load %arg3[%c0_5, %c0_6] : memref<512x128xbf16, #tpu.memory_space<vmem>>, vector<512x128xbf16>
    tpu.vector_store %arg3[%c0_5, %c0_6], %8 {strides = array<i32>} : memref<512x128xbf16, #tpu.memory_space<vmem>>, vector<512x128xbf16>,
    %cst_7 = arith.constant dense<0.000000e+00> : vector<128xf32>
    %10 = vector.multi_reduction <add>, %7, %cst_7 [0] : vector<512x128xf32> to vector<128xf32>
    %11 = vector.shape_cast %10 : vector<128xf32> to vector<1x128xf32>
    %c0_8 = arith.constant 0 : index
    %c0_9 = arith.constant 0 : index
    %c0_10 = arith.constant 0 : index
    %12 = vector.load %arg4[%c0_8, %c0_9, %c0_10] : memref<1x2x128xf32, #tpu.memory_space<vmem>>, vector<1x1x128xf32>
    %13 = vector.shape_cast %12 : vector<1x1x128xf32> to vector<1x128xf32>
    %14 = vector.shape_cast %11 : vector<1x128xf32> to vector<1x1x128xf32>
    tpu.vector_store %arg4[%c0_8, %c0_9, %c0_10], %14 {strides = array<i32>} : memref<1x2x128xf32, #tpu.memory_space<vmem>>, vector<1x1x128xf32>,
    %15 = arith.mulf %7, %7 : vector<512x128xf32>
    %cst_11 = arith.constant dense<0.000000e+00> : vector<128xf32>
    %16 = vector.multi_reduction <add>, %15, %cst_11 [0] : vector<512x128xf32> to vector<128xf32>
    %17 = vector.shape_cast %16 : vector<128xf32> to vector<1x128xf32>
    %c0_12 = arith.constant 0 : index
    %c1 = arith.constant 1 : index
    %c0_13 = arith.constant 0 : index
    %18 = vector.load %arg4[%c0_12, %c1, %c0_13] : memref<1x2x128xf32, #tpu.memory_space<vmem>>, vector<1x1x128xf32>
    %19 = vector.shape_cast %18 : vector<1x1x128xf32> to vector<1x128xf32>
    %20 = vector.shape_cast %17 : vector<1x128xf32> to vector<1x1x128xf32>
    tpu.vector_store %arg4[%c0_12, %c1, %c0_13], %20 {strides = array<i32>} : memref<1x2x128xf32, #tpu.memory_space<vmem>>, vector<1x1x128xf32>,
    return
  }
  func.func @transform_0(%arg0: i32) -> (i32, i32) {
    %c0_i32 = arith.constant 0 : i32
    %c0_i32_0 = arith.constant 0 : i32
    return %arg0, %c0_i32 : i32, i32
  }
  func.func @transform_1(%arg0: i32) -> (i32, i32) {
    %c0_i32 = arith.constant 0 : i32
    %c0_i32_0 = arith.constant 0 : i32
    %c0_i32_1 = arith.constant 0 : i32
    return %c0_i32, %c0_i32_0 : i32, i32
  }
  func.func @transform_2(%arg0: i32) -> (i32, i32) {
    %c0_i32 = arith.constant 0 : i32
    %c0_i32_0 = arith.constant 0 : i32
    return %arg0, %c0_i32 : i32, i32
  }
  func.func @transform_3(%arg0: i32) -> (i32, i32, i32) {
    %c0_i32 = arith.constant 0 : i32
    %c0_i32_0 = arith.constant 0 : i32
    %c0_i32_1 = arith.constant 0 : i32
    return %arg0, %c0_i32, %c0_i32_0 : i32, i32, i32
  }
}

module attributes {stable_mosaic.version = 11 : i64} {
  func.func @_matmul_act_stats_kernel(%arg0: i32, %arg1: memref<512x80xbf16, #tpu.memory_space<vmem>>, %arg2: memref<80x128xbf16, #tpu.memory_space<vmem>>, %arg3: memref<512x128xbf16, #tpu.memory_space<vmem>>, %arg4: memref<1x2x128xf32, #tpu.memory_space<vmem>>) attributes {dimension_semantics = [#tpu.dimension_semantics<parallel>], iteration_bounds = array<i64: 2>, scalar_prefetch = 0 : i64, scratch_operands = 0 : i64, tpu.core_type = #tpu.core_type<tc>, window_params = [{transform_indices = @transform_0, window_bounds = array<i64: 512, 80>}, {pipeline_mode = #tpu.pipeline_mode<synchronous>, transform_indices = @transform_1, window_bounds = array<i64: 80, 128>}, {transform_indices = @transform_2, window_bounds = array<i64: 512, 128>}, {transform_indices = @transform_3, window_bounds = array<i64: 1, 2, 128>}]} {
    %c0 = arith.constant 0 : index
    %c0_0 = arith.constant 0 : index
    %0 = vector.load %arg1[%c0, %c0_0] : memref<512x80xbf16, #tpu.memory_space<vmem>>, vector<512x80xbf16>
    %c0_1 = arith.constant 0 : index
    %c0_2 = arith.constant 0 : index
    %1 = vector.load %arg2[%c0_1, %c0_2] : memref<80x128xbf16, #tpu.memory_space<vmem>>, vector<80x128xbf16>
    %cst = arith.constant dense<0.000000e+00> : vector<512x128xf32>
    %2 = tpu.matmul %0, %1, %cst {dimension_numbers = #tpu.dot_dimension_numbers<[1], [0], [0], [1], [0, 0, 1, 1], [], []>} : vector<512x80xbf16>, vector<80x128xbf16>, vector<512x128xf32> -> vector<512x128xf32>
    %cst_3 = arith.constant 0.000000e+00 : f32
    %3 = vector.broadcast %cst_3 : f32 to vector<512x128xf32>
    %4 = arith.cmpf oge, %2, %3 : vector<512x128xf32>
    %cst_4 = arith.constant 0.00999999977 : f32
    %5 = vector.broadcast %cst_4 : f32 to vector<512x128xf32>
    %6 = arith.mulf %5, %2 : vector<512x128xf32>
    %7 = arith.select %4, %2, %6 : vector<512x128xi1>, vector<512x128xf32>
    %8 = arith.truncf %7 : vector<512x128xf32> to vector<512x128xbf16>
    %c0_5 = arith.constant 0 : index
    %c0_6 = arith.constant 0 : index
    %9 = vector.load %arg3[%c0_5, %c0_6] : memref<512x128xbf16, #tpu.memory_space<vmem>>, vector<512x128xbf16>
    tpu.vector_store %arg3[%c0_5, %c0_6], %8 {strides = array<i32>} : memref<512x128xbf16, #tpu.memory_space<vmem>>, vector<512x128xbf16>,
    %cst_7 = arith.constant dense<0.000000e+00> : vector<128xf32>
    %10 = vector.multi_reduction <add>, %7, %cst_7 [0] : vector<512x128xf32> to vector<128xf32>
    %11 = vector.shape_cast %10 : vector<128xf32> to vector<1x128xf32>
    %c0_8 = arith.constant 0 : index
    %c0_9 = arith.constant 0 : index
    %c0_10 = arith.constant 0 : index
    %12 = vector.load %arg4[%c0_8, %c0_9, %c0_10] : memref<1x2x128xf32, #tpu.memory_space<vmem>>, vector<1x1x128xf32>
    %13 = vector.shape_cast %12 : vector<1x1x128xf32> to vector<1x128xf32>
    %14 = vector.shape_cast %11 : vector<1x128xf32> to vector<1x1x128xf32>
    tpu.vector_store %arg4[%c0_8, %c0_9, %c0_10], %14 {strides = array<i32>} : memref<1x2x128xf32, #tpu.memory_space<vmem>>, vector<1x1x128xf32>,
    %15 = arith.mulf %7, %7 : vector<512x128xf32>
    %cst_11 = arith.constant dense<0.000000e+00> : vector<128xf32>
    %16 = vector.multi_reduction <add>, %15, %cst_11 [0] : vector<512x128xf32> to vector<128xf32>
    %17 = vector.shape_cast %16 : vector<128xf32> to vector<1x128xf32>
    %c0_12 = arith.constant 0 : index
    %c1 = arith.constant 1 : index
    %c0_13 = arith.constant 0 : index
    %18 = vector.load %arg4[%c0_12, %c1, %c0_13] : memref<1x2x128xf32, #tpu.memory_space<vmem>>, vector<1x1x128xf32>
    %19 = vector.shape_cast %18 : vector<1x1x128xf32> to vector<1x128xf32>
    %20 = vector.shape_cast %17 : vector<1x128xf32> to vector<1x1x128xf32>
    tpu.vector_store %arg4[%c0_12, %c1, %c0_13], %20 {strides = array<i32>} : memref<1x2x128xf32, #tpu.memory_space<vmem>>, vector<1x1x128xf32>,
    return
  }
  func.func @transform_0(%arg0: i32) -> (i32, i32) {
    %c0_i32 = arith.constant 0 : i32
    %c0_i32_0 = arith.constant 0 : i32
    return %arg0, %c0_i32 : i32, i32
  }
  func.func @transform_1(%arg0: i32) -> (i32, i32) {
    %c0_i32 = arith.constant 0 : i32
    %c0_i32_0 = arith.constant 0 : i32
    %c0_i32_1 = arith.constant 0 : i32
    return %c0_i32, %c0_i32_0 : i32, i32
  }
  func.func @transform_2(%arg0: i32) -> (i32, i32) {
    %c0_i32 = arith.constant 0 : i32
    %c0_i32_0 = arith.constant 0 : i32
    return %arg0, %c0_i32 : i32, i32
  }
  func.func @transform_3(%arg0: i32) -> (i32, i32, i32) {
    %c0_i32 = arith.constant 0 : i32
    %c0_i32_0 = arith.constant 0 : i32
    %c0_i32_1 = arith.constant 0 : i32
    return %arg0, %c0_i32, %c0_i32_0 : i32, i32, i32
  }
}

module attributes {stable_mosaic.version = 11 : i64} {
  func.func @_bn_dual_add_kernel(%arg0: i32, %arg1: memref<512x128xbf16, #tpu.memory_space<vmem>>, %arg2: memref<512x128xbf16, #tpu.memory_space<vmem>>, %arg3: memref<1x128xf32, #tpu.memory_space<vmem>>, %arg4: memref<1x128xf32, #tpu.memory_space<vmem>>, %arg5: memref<1x128xf32, #tpu.memory_space<vmem>>, %arg6: memref<1x128xf32, #tpu.memory_space<vmem>>, %arg7: memref<512x128xf32, #tpu.memory_space<vmem>>) attributes {dimension_semantics = [#tpu.dimension_semantics<parallel>], iteration_bounds = array<i64: 2>, scalar_prefetch = 0 : i64, scratch_operands = 0 : i64, tpu.core_type = #tpu.core_type<tc>, window_params = [{transform_indices = @transform_0, window_bounds = array<i64: 512, 128>}, {transform_indices = @transform_1, window_bounds = array<i64: 512, 128>}, {pipeline_mode = #tpu.pipeline_mode<synchronous>, transform_indices = @transform_2, window_bounds = array<i64: 1, 128>}, {pipeline_mode = #tpu.pipeline_mode<synchronous>, transform_indices = @transform_3, window_bounds = array<i64: 1, 128>}, {pipeline_mode = #tpu.pipeline_mode<synchronous>, transform_indices = @transform_4, window_bounds = array<i64: 1, 128>}, {pipeline_mode = #tpu.pipeline_mode<synchronous>, transform_indices = @transform_5, window_bounds = array<i64: 1, 128>}, {transform_indices = @transform_6, window_bounds = array<i64: 512, 128>}]} {
    %c0 = arith.constant 0 : index
    %c0_0 = arith.constant 0 : index
    %0 = vector.load %arg1[%c0, %c0_0] : memref<512x128xbf16, #tpu.memory_space<vmem>>, vector<512x128xbf16>
    %1 = arith.extf %0 : vector<512x128xbf16> to vector<512x128xf32>
    %c0_1 = arith.constant 0 : index
    %c0_2 = arith.constant 0 : index
    %2 = vector.load %arg2[%c0_1, %c0_2] : memref<512x128xbf16, #tpu.memory_space<vmem>>, vector<512x128xbf16>
    %3 = arith.extf %2 : vector<512x128xbf16> to vector<512x128xf32>
    %c0_3 = arith.constant 0 : index
    %c0_4 = arith.constant 0 : index
    %4 = vector.load %arg3[%c0_3, %c0_4] : memref<1x128xf32, #tpu.memory_space<vmem>>, vector<1x128xf32>
    %5 = vector.broadcast %4 : vector<1x128xf32> to vector<512x128xf32>
    %6 = arith.mulf %1, %5 : vector<512x128xf32>
    %c0_5 = arith.constant 0 : index
    %c0_6 = arith.constant 0 : index
    %7 = vector.load %arg4[%c0_5, %c0_6] : memref<1x128xf32, #tpu.memory_space<vmem>>, vector<1x128xf32>
    %8 = vector.broadcast %7 : vector<1x128xf32> to vector<512x128xf32>
    %9 = arith.addf %6, %8 : vector<512x128xf32>
    %c0_7 = arith.constant 0 : index
    %c0_8 = arith.constant 0 : index
    %10 = vector.load %arg5[%c0_7, %c0_8] : memref<1x128xf32, #tpu.memory_space<vmem>>, vector<1x128xf32>
    %11 = vector.broadcast %10 : vector<1x128xf32> to vector<512x128xf32>
    %12 = arith.mulf %3, %11 : vector<512x128xf32>
    %13 = arith.addf %9, %12 : vector<512x128xf32>
    %c0_9 = arith.constant 0 : index
    %c0_10 = arith.constant 0 : index
    %14 = vector.load %arg6[%c0_9, %c0_10] : memref<1x128xf32, #tpu.memory_space<vmem>>, vector<1x128xf32>
    %15 = vector.broadcast %14 : vector<1x128xf32> to vector<512x128xf32>
    %16 = arith.addf %13, %15 : vector<512x128xf32>
    %c0_11 = arith.constant 0 : index
    %c0_12 = arith.constant 0 : index
    %17 = vector.load %arg7[%c0_11, %c0_12] : memref<512x128xf32, #tpu.memory_space<vmem>>, vector<512x128xf32>
    tpu.vector_store %arg7[%c0_11, %c0_12], %16 {strides = array<i32>} : memref<512x128xf32, #tpu.memory_space<vmem>>, vector<512x128xf32>,
    return
  }
  func.func @transform_0(%arg0: i32) -> (i32, i32) {
    %c0_i32 = arith.constant 0 : i32
    %c0_i32_0 = arith.constant 0 : i32
    return %arg0, %c0_i32 : i32, i32
  }
  func.func @transform_1(%arg0: i32) -> (i32, i32) {
    %c0_i32 = arith.constant 0 : i32
    %c0_i32_0 = arith.constant 0 : i32
    return %arg0, %c0_i32 : i32, i32
  }
  func.func @transform_2(%arg0: i32) -> (i32, i32) {
    %c0_i32 = arith.constant 0 : i32
    %c0_i32_0 = arith.constant 0 : i32
    %c0_i32_1 = arith.constant 0 : i32
    return %c0_i32, %c0_i32_0 : i32, i32
  }
  func.func @transform_3(%arg0: i32) -> (i32, i32) {
    %c0_i32 = arith.constant 0 : i32
    %c0_i32_0 = arith.constant 0 : i32
    %c0_i32_1 = arith.constant 0 : i32
    return %c0_i32, %c0_i32_0 : i32, i32
  }
  func.func @transform_4(%arg0: i32) -> (i32, i32) {
    %c0_i32 = arith.constant 0 : i32
    %c0_i32_0 = arith.constant 0 : i32
    %c0_i32_1 = arith.constant 0 : i32
    return %c0_i32, %c0_i32_0 : i32, i32
  }
  func.func @transform_5(%arg0: i32) -> (i32, i32) {
    %c0_i32 = arith.constant 0 : i32
    %c0_i32_0 = arith.constant 0 : i32
    %c0_i32_1 = arith.constant 0 : i32
    return %c0_i32, %c0_i32_0 : i32, i32
  }
  func.func @transform_6(%arg0: i32) -> (i32, i32) {
    %c0_i32 = arith.constant 0 : i32
    %c0_i32_0 = arith.constant 0 : i32
    return %arg0, %c0_i32 : i32, i32
  }
}

module attributes {stable_mosaic.version = 11 : i64} {
  func.func @_matmul_kernel(%arg0: i32, %arg1: memref<128x224xbf16, #tpu.memory_space<vmem>>, %arg2: memref<224x128xbf16, #tpu.memory_space<vmem>>, %arg3: memref<128x128xf32, #tpu.memory_space<vmem>>) attributes {dimension_semantics = [#tpu.dimension_semantics<parallel>], iteration_bounds = array<i64: 2>, scalar_prefetch = 0 : i64, scratch_operands = 0 : i64, tpu.core_type = #tpu.core_type<tc>, window_params = [{transform_indices = @transform_0, window_bounds = array<i64: 128, 224>}, {pipeline_mode = #tpu.pipeline_mode<synchronous>, transform_indices = @transform_1, window_bounds = array<i64: 224, 128>}, {transform_indices = @transform_2, window_bounds = array<i64: 128, 128>}]} {
    %c0 = arith.constant 0 : index
    %c0_0 = arith.constant 0 : index
    %0 = vector.load %arg1[%c0, %c0_0] : memref<128x224xbf16, #tpu.memory_space<vmem>>, vector<128x224xbf16>
    %c0_1 = arith.constant 0 : index
    %c0_2 = arith.constant 0 : index
    %1 = vector.load %arg2[%c0_1, %c0_2] : memref<224x128xbf16, #tpu.memory_space<vmem>>, vector<224x128xbf16>
    %cst = arith.constant dense<0.000000e+00> : vector<128x128xf32>
    %2 = tpu.matmul %0, %1, %cst {dimension_numbers = #tpu.dot_dimension_numbers<[1], [0], [0], [1], [0, 0, 1, 1], [], []>} : vector<128x224xbf16>, vector<224x128xbf16>, vector<128x128xf32> -> vector<128x128xf32>
    %c0_3 = arith.constant 0 : index
    %c0_4 = arith.constant 0 : index
    %3 = vector.load %arg3[%c0_3, %c0_4] : memref<128x128xf32, #tpu.memory_space<vmem>>, vector<128x128xf32>
    tpu.vector_store %arg3[%c0_3, %c0_4], %2 {strides = array<i32>} : memref<128x128xf32, #tpu.memory_space<vmem>>, vector<128x128xf32>,
    return
  }
  func.func @transform_0(%arg0: i32) -> (i32, i32) {
    %c0_i32 = arith.constant 0 : i32
    %c0_i32_0 = arith.constant 0 : i32
    return %arg0, %c0_i32 : i32, i32
  }
  func.func @transform_1(%arg0: i32) -> (i32, i32) {
    %c0_i32 = arith.constant 0 : i32
    %c0_i32_0 = arith.constant 0 : i32
    %c0_i32_1 = arith.constant 0 : i32
    return %c0_i32, %c0_i32_0 : i32, i32
  }
  func.func @transform_2(%arg0: i32) -> (i32, i32) {
    %c0_i32 = arith.constant 0 : i32
    %c0_i32_0 = arith.constant 0 : i32
    return %arg0, %c0_i32 : i32, i32
  }
}

</mosaic_0001>

<llo_original>
// kernel: resblock_forward.6
$region0: #{resblock_forward.6}
  #allocation0 [shape = 'u32[]', space=smem, size = 0x4, offset = 0x4, fixed_abs, tag = 'smem constant byte address 0x4 - core index']
  #allocation1 [shape = 'u32[144,128]{1,0:T(1,128)}', space=vmem, size = 0x12000, scoped, tag = 'internal scratch']
  %s0 = inlined_call_operand.vmem [shape: bf16[1024,48], index: 0, kind: input, shape index: {}]
  %s1 = inlined_call_operand.vmem [shape: bf16[48,128], index: 1, kind: input, shape index: {}]
  %s2 = inlined_call_operand.vmem [shape: bf16[1024,128], index: 2, kind: output, shape index: {0}]
  %s3 = inlined_call_operand.vmem [shape: f32[2,2,128], index: 3, kind: output, shape index: {1}]
  %4 = xla_tuple %s2, %s3
  %s5 = sld [smem:[#allocation0]]
  $region49: #{resblock_forward.6} parent=0
    _
  %s7 = ssub.s32 1, %s5
  %s8 = scalar_select 0, %s7, %s5
  loop: start=0, step=1, limit=4
  $region2: #{resblock_forward.6} parent=0 // loop_pre_header
    _
  $region3: #{resblock_forward.6} parent=0 // loop_header
    %s10 = sphi 0, %s14
    %p11 = scmp.ge.s32.totalorder %s10, 4
    %s20 = sphi 0, %s22
    %s23 = sphi 0, %s20
    %s24 = sphi 0, %s23
    %s40 = sphi 0, %s24
    %s44 = sphi 0, %s44
    %s46 = sphi 0, %s44
    %s47 = sphi 0, %s46
    %s61 = sphi 0, %s47
    %s67 = sphi 0, %s69
    %s70 = sphi 0, %s67
    %s71 = sphi 0, %s70
    %s87 = sphi 0, %s71
    %s93 = sphi 0, %s95
    %s96 = sphi 0, %s93
    %s97 = sphi 0, %s96
    %s113 = sphi 0, %s97
  $region4: #{resblock_forward.6} parent=0 // loop_header_branch
    %13 = sbr.rel (%p11) target = $region8
  $region5: #{resblock_forward.6} parent=0 // loop_body
    %s15 = ssub.s32 %s10, 1
    %s16 = ssub.s32 %s10, 2
    %s17 = sadd.s32 %s10, 1
    %s18 = ssub.s32 %s10, %s17
    %p19 = scmp.eq.s32.totalorder %s18, 0
    %s21 = sadd.s32 %s20, 1
    %s22 = scalar_select %p19, %s20, %s21
    %p25 = pneg %p19
    %p26 = scmp.eq.s32.totalorder %s10, 1
    %p27 = por %p25, %p26
    %p28 = scmp.ne.s32.totalorder %s20, %s23
    %p29 = scmp.eq.s32.totalorder %s10, 0
    %p30 = por %p28, %p29
    %p31 = scmp.ne.s32.totalorder %s20, %s23
    %p32 = scmp.eq.s32.totalorder %s15, 1
    %p33 = por %p31, %p32
    %p34 = scmp.ne.s32.totalorder %s23, %s24
    %p35 = scmp.eq.s32.totalorder %s15, 0
    %p36 = por %p34, %p35
    %p37 = scmp.ne.s32.totalorder %s23, %s24
    %p38 = scmp.eq.s32.totalorder %s16, 1
    %p39 = por %p37, %p38
    %p41 = scmp.ne.s32.totalorder %s24, %s40
    %p42 = scmp.eq.s32.totalorder %s16, 0
    %p43 = por %p41, %p42
    %s45 = sadd.s32 %s44, 1
    %p48 = scmp.eq.s32.totalorder %s10, 1
    %p49 = scmp.ne.s32.totalorder %s44, %s46
    %p50 = scmp.eq.s32.totalorder %s10, 0
    %p51 = por %p49, %p50
    %p52 = scmp.ne.s32.totalorder %s44, %s46
    %p53 = scmp.eq.s32.totalorder %s15, 1
    %p54 = por %p52, %p53
    %p55 = scmp.ne.s32.totalorder %s46, %s47
    %p56 = scmp.eq.s32.totalorder %s15, 0
    %p57 = por %p55, %p56
    %p58 = scmp.ne.s32.totalorder %s46, %s47
    %p59 = scmp.eq.s32.totalorder %s16, 1
    %p60 = por %p58, %p59
    %p62 = scmp.ne.s32.totalorder %s47, %s61
    %p63 = scmp.eq.s32.totalorder %s16, 0
    %p64 = por %p62, %p63
    %s65 = ssub.s32 %s10, %s17
    %p66 = scmp.eq.s32.totalorder %s65, 0
    %s68 = sadd.s32 %s67, 1
    %s69 = scalar_select %p66, %s67, %s68
    %p72 = pneg %p66
    %p73 = scmp.eq.s32.totalorder %s10, 1
    %p74 = por %p72, %p73
    %p75 = scmp.ne.s32.totalorder %s67, %s70
    %p76 = scmp.eq.s32.totalorder %s10, 0
    %p77 = por %p75, %p76
    %p78 = scmp.ne.s32.totalorder %s67, %s70
    %p79 = scmp.eq.s32.totalorder %s15, 1
    %p80 = por %p78, %p79
    %p81 = scmp.ne.s32.totalorder %s70, %s71
    %p82 = scmp.eq.s32.totalorder %s15, 0
    %p83 = por %p81, %p82
    %p84 = scmp.ne.s32.totalorder %s70, %s71
    %p85 = scmp.eq.s32.totalorder %s16, 1
    %p86 = por %p84, %p85
    %p88 = scmp.ne.s32.totalorder %s71, %s87
    %p89 = scmp.eq.s32.totalorder %s16, 0
    %p90 = por %p88, %p89
    %s91 = ssub.s32 %s10, %s17
    %p92 = scmp.eq.s32.totalorder %s91, 0
    %s94 = sadd.s32 %s93, 1
    %s95 = scalar_select %p92, %s93, %s94
    %p98 = pneg %p92
    %p99 = scmp.eq.s32.totalorder %s10, 1
    %p100 = por %p98, %p99
    %p101 = scmp.ne.s32.totalorder %s93, %s96
    %p102 = scmp.eq.s32.totalorder %s10, 0
    %p103 = por %p101, %p102
    %p104 = scmp.ne.s32.totalorder %s93, %s96
    %p105 = scmp.eq.s32.totalorder %s15, 1
    %p106 = por %p104, %p105
    %p107 = scmp.ne.s32.totalorder %s96, %s97
    %p108 = scmp.eq.s32.totalorder %s15, 0
    %p109 = por %p107, %p108
    %p110 = scmp.ne.s32.totalorder %s96, %s97
    %p111 = scmp.eq.s32.totalorder %s16, 1
    %p112 = por %p110, %p111
    %p114 = scmp.ne.s32.totalorder %s97, %s113
    %p115 = scmp.eq.s32.totalorder %s16, 0
    %p116 = por %p114, %p115
    %p117 = scmp.le.s32.totalorder 1, %s10
    %p118 = scmp.lt.s32.totalorder %s10, 3
    %p119 = pnand %p117, %p118
    %p120 = pneg %p119
    // Predicated region
    $region9: #{resblock_forward.6} parent=5 // pred_check
      _
    $region10: #{resblock_forward.6} parent=5 // pred_check_branch
      %122 = sbr.rel (%p119) target = $region12
    $region11: #{resblock_forward.6} parent=5 // pred_region
      %s123 = ssub.s32 %s10, 1
      // Predicated region
      $region13: #{resblock_forward.6} parent=11 // pred_check
        %p124 = pneg %p57
      $region14: #{resblock_forward.6} parent=11 // pred_check_branch
        %126 = sbr.rel (%p124) target = $region16
      $region15: #{resblock_forward.6} parent=11 // pred_region
        _
      $region16: #{resblock_forward.6} parent=11 // pred_fallthru
        _
    $region12: #{resblock_forward.6} parent=5 // pred_fallthru
      _
    %p127 = scmp.lt.s32.totalorder %s10, 2
    // Predicated region
    $region17: #{resblock_forward.6} parent=5 // pred_check
      %p128 = pneg %p127
    $region18: #{resblock_forward.6} parent=5 // pred_check_branch
      %130 = sbr.rel (%p128) target = $region20
    $region19: #{resblock_forward.6} parent=5 // pred_region
      // Predicated region
      $region21: #{resblock_forward.6} parent=19 // pred_check
        %p131 = pneg %p30
      $region22: #{resblock_forward.6} parent=19 // pred_check_branch
        %133 = sbr.rel (%p131) target = $region24
      $region23: #{resblock_forward.6} parent=19 // pred_region
        %s134 = smul.u32 64, %s10
        %p135 = scmp.lt.s32.totalorder %s134, 127
        %s136 = scalar_select %p135, %s134, 127
        %s137 = smul.addr %s136, 4
        %s138 = scalar_lea.vmem %s0, %s137
        %s139 = smul.u32 64, %s10
      $region24: #{resblock_forward.6} parent=19 // pred_fallthru
        _
    $region20: #{resblock_forward.6} parent=5 // pred_fallthru
      _
    %p140 = scmp.le.s32.totalorder 1, %s10
    %p141 = scmp.lt.s32.totalorder %s10, 3
    %p142 = pnand %p140, %p141
    %p143 = pneg %p142
    // Predicated region
    $region25: #{resblock_forward.6} parent=5 // pred_check
      _
    $region26: #{resblock_forward.6} parent=5 // pred_check_branch
      %145 = sbr.rel (%p142) target = $region28
    $region27: #{resblock_forward.6} parent=5 // pred_region
      %s146 = ssub.s32 %s10, 1
      %s147 = smul.u32 64, %s15
      %p148 = scmp.lt.s32.totalorder %s147, 127
      %s149 = scalar_select %p148, %s147, 127
      %s150 = smul.addr %s149, 4
      %s151 = scalar_lea.vmem %s0, %s150
      %p152 = pneg %p36
      %p153 = pneg %p33
      %p154 = pneg %p57
      %p155 = pneg %p54
      %p156 = pneg %p83
      %p157 = pneg %p80
      %s158 = smul.u32 64, %s15
      %p159 = scmp.lt.s32.totalorder %s158, 127
      %s160 = scalar_select %p159, %s158, 127
      %s161 = smul.addr %s160, 4
      %s162 = scalar_lea.vmem %s2, %s161
      %p163 = pneg %p109
      %p164 = pneg %p106
      %p165 = scmp.lt.s32.totalorder %s15, 1
      %s166 = scalar_select %p165, %s15, 1
      %s167 = smul.addr %s166, 2
      %s168 = scalar_lea.vmem %s3, %s167
      %s169 = smul.u32 64, %s15
      %p170 = scmp.lt.s32.totalorder %s169, 127
      %s171 = scalar_select %p170, %s169, 127
      %s172 = smul.addr %s171, 4
      %s173 = scalar_lea.vmem %s0, %s172
      %s174 = smul.u32 64, %s15
      %s175 = smul.u32 64, %s15
      %p176 = scmp.lt.s32.totalorder %s175, 127
      %s177 = scalar_select %p176, %s175, 127
      %s178 = smul.addr %s177, 4
      %s179 = scalar_lea.vmem %s2, %s178
      %s180 = smul.u32 64, %s15
      %p181 = scmp.lt.s32.totalorder %s15, 1
      %s182 = scalar_select %p181, %s15, 1
      %s183 = smul.addr %s182, 2
      %s184 = scalar_lea.vmem %s3, %s183
      %v186 = vld [vmem:[%s173] sm:$0xf]
      %v187 = vld [vmem:[%s173 + $0x4] sm:$0xf]
      %v188 = vld [vmem:[%s173 + $0x8] sm:$0xf]
      %v189 = vld [vmem:[%s173 + $0xc] sm:$0xf]
      %v190 = vld [vmem:[%s173 + $0x10] sm:$0xf]
      %v191 = vld [vmem:[%s173 + $0x14] sm:$0xf]
      %v192 = vld [vmem:[%s173 + $0x18] sm:$0xf]
      %v193 = vld [vmem:[%s173 + $0x1c] sm:$0xf]
      %v194 = vld [vmem:[%s173 + $0x20] sm:$0xf]
      %v195 = vld [vmem:[%s173 + $0x24] sm:$0xf]
      %v196 = vld [vmem:[%s173 + $0x28] sm:$0xf]
      %v197 = vld [vmem:[%s173 + $0x2c] sm:$0xf]
      %v198 = vld [vmem:[%s173 + $0x30] sm:$0xf]
      %v199 = vld [vmem:[%s173 + $0x34] sm:$0xf]
      %v200 = vld [vmem:[%s173 + $0x38] sm:$0xf]
      %v201 = vld [vmem:[%s173 + $0x3c] sm:$0xf]
      %v202 = vld [vmem:[%s173 + $0x40] sm:$0xf]
      %v203 = vld [vmem:[%s173 + $0x44] sm:$0xf]
      %v204 = vld [vmem:[%s173 + $0x48] sm:$0xf]
      %v205 = vld [vmem:[%s173 + $0x4c] sm:$0xf]
      %v206 = vld [vmem:[%s173 + $0x50] sm:$0xf]
      %v207 = vld [vmem:[%s173 + $0x54] sm:$0xf]
      %v208 = vld [vmem:[%s173 + $0x58] sm:$0xf]
      %v209 = vld [vmem:[%s173 + $0x5c] sm:$0xf]
      %v210 = vld [vmem:[%s173 + $0x60] sm:$0xf]
      %v211 = vld [vmem:[%s173 + $0x64] sm:$0xf]
      %v212 = vld [vmem:[%s173 + $0x68] sm:$0xf]
      %v213 = vld [vmem:[%s173 + $0x6c] sm:$0xf]
      %v214 = vld [vmem:[%s173 + $0x70] sm:$0xf]
      %v215 = vld [vmem:[%s173 + $0x74] sm:$0xf]
      %v216 = vld [vmem:[%s173 + $0x78] sm:$0xf]
      %v217 = vld [vmem:[%s173 + $0x7c] sm:$0xf]
      %v218 = vld [vmem:[%s173 + $0x80] sm:$0xf]
      %v219 = vld [vmem:[%s173 + $0x84] sm:$0xf]
      %v220 = vld [vmem:[%s173 + $0x88] sm:$0xf]
      %v221 = vld [vmem:[%s173 + $0x8c] sm:$0xf]
      %v222 = vld [vmem:[%s173 + $0x90] sm:$0xf]
      %v223 = vld [vmem:[%s173 + $0x94] sm:$0xf]
      %v224 = vld [vmem:[%s173 + $0x98] sm:$0xf]
      %v225 = vld [vmem:[%s173 + $0x9c] sm:$0xf]
      %v226 = vld [vmem:[%s173 + $0xa0] sm:$0xf]
      %v227 = vld [vmem:[%s173 + $0xa4] sm:$0xf]
      %v228 = vld [vmem:[%s173 + $0xa8] sm:$0xf]
      %v229 = vld [vmem:[%s173 + $0xac] sm:$0xf]
      %v230 = vld [vmem:[%s173 + $0xb0] sm:$0xf]
      %v231 = vld [vmem:[%s173 + $0xb4] sm:$0xf]
      %v232 = vld [vmem:[%s173 + $0xb8] sm:$0xf]
      %v233 = vld [vmem:[%s173 + $0xbc] sm:$0xf]
      %v234 = vld [vmem:[%s173 + $0xc0] sm:$0xf]
      %v235 = vld [vmem:[%s173 + $0xc4] sm:$0xf]
      %v236 = vld [vmem:[%s173 + $0xc8] sm:$0xf]
      %v237 = vld [vmem:[%s173 + $0xcc] sm:$0xf]
      %v238 = vld [vmem:[%s173 + $0xd0] sm:$0xf]
      %v239 = vld [vmem:[%s173 + $0xd4] sm:$0xf]
      %v240 = vld [vmem:[%s173 + $0xd8] sm:$0xf]
      %v241 = vld [vmem:[%s173 + $0xdc] sm:$0xf]
      %v242 = vld [vmem:[%s173 + $0xe0] sm:$0xf]
      %v243 = vld [vmem:[%s173 + $0xe4] sm:$0xf]
      %v244 = vld [vmem:[%s173 + $0xe8] sm:$0xf]
      %v245 = vld [vmem:[%s173 + $0xec] sm:$0xf]
      %v246 = vld [vmem:[%s173 + $0xf0] sm:$0xf]
      %v247 = vld [vmem:[%s173 + $0xf4] sm:$0xf]
      %v248 = vld [vmem:[%s173 + $0xf8] sm:$0xf]
      %v249 = vld [vmem:[%s173 + $0xfc] sm:$0xf]
      %v250 = vld [vmem:[%s1] sm:$0xf]
      %v251 = vld [vmem:[%s1 + $0x4] sm:$0xf]
      %v252 = vld [vmem:[%s1 + $0x8] sm:$0xf]
      %v253 = vld [vmem:[%s1 + $0xc] sm:$0xf]
      %v254 = vld [vmem:[%s1 + $0x10] sm:$0xf]
      %v255 = vld [vmem:[%s1 + $0x14] sm:$0xf]
      %v320 = vunpack.c.l.b16 %v186
      %v321 = vunpack.c.l.b16 %v187
      %v322 = vunpack.c.l.b16 %v188
      %v323 = vunpack.c.l.b16 %v189
      %v324 = vunpack.c.l.b16 %v190
      %v325 = vunpack.c.l.b16 %v191
      %v326 = vunpack.c.l.b16 %v192
      %v327 = vunpack.c.l.b16 %v193
      %v328 = vunpack.c.l.b16 %v194
      %v329 = vunpack.c.l.b16 %v195
      %v330 = vunpack.c.l.b16 %v196
      %v331 = vunpack.c.l.b16 %v197
      %v332 = vunpack.c.l.b16 %v198
      %v333 = vunpack.c.l.b16 %v199
      %v334 = vunpack.c.l.b16 %v200
      %v335 = vunpack.c.l.b16 %v201
      %v336 = vunpack.c.l.b16 %v202
      %v337 = vunpack.c.l.b16 %v203
      %v338 = vunpack.c.l.b16 %v204
      %v339 = vunpack.c.l.b16 %v205
      %v340 = vunpack.c.l.b16 %v206
      %v341 = vunpack.c.l.b16 %v207
      %v342 = vunpack.c.l.b16 %v208
      %v343 = vunpack.c.l.b16 %v209
      %v344 = vunpack.c.l.b16 %v210
      %v345 = vunpack.c.l.b16 %v211
      %v346 = vunpack.c.l.b16 %v212
      %v347 = vunpack.c.l.b16 %v213
      %v348 = vunpack.c.l.b16 %v214
      %v349 = vunpack.c.l.b16 %v215
      %v350 = vunpack.c.l.b16 %v216
      %v351 = vunpack.c.l.b16 %v217
      %v352 = vunpack.c.l.b16 %v218
      %v353 = vunpack.c.l.b16 %v219
      %v354 = vunpack.c.l.b16 %v220
      %v355 = vunpack.c.l.b16 %v221
      %v356 = vunpack.c.l.b16 %v222
      %v357 = vunpack.c.l.b16 %v223
      %v358 = vunpack.c.l.b16 %v224
      %v359 = vunpack.c.l.b16 %v225
      %v360 = vunpack.c.l.b16 %v226
      %v361 = vunpack.c.l.b16 %v227
      %v362 = vunpack.c.l.b16 %v228
      %v363 = vunpack.c.l.b16 %v229
      %v364 = vunpack.c.l.b16 %v230
      %v365 = vunpack.c.l.b16 %v231
      %v366 = vunpack.c.l.b16 %v232
      %v367 = vunpack.c.l.b16 %v233
      %v368 = vunpack.c.l.b16 %v234
      %v369 = vunpack.c.l.b16 %v235
      %v370 = vunpack.c.l.b16 %v236
      %v371 = vunpack.c.l.b16 %v237
      %v372 = vunpack.c.l.b16 %v238
      %v373 = vunpack.c.l.b16 %v239
      %v374 = vunpack.c.l.b16 %v240
      %v375 = vunpack.c.l.b16 %v241
      %v376 = vunpack.c.l.b16 %v242
      %v377 = vunpack.c.l.b16 %v243
      %v378 = vunpack.c.l.b16 %v244
      %v379 = vunpack.c.l.b16 %v245
      %v380 = vunpack.c.l.b16 %v246
      %v381 = vunpack.c.l.b16 %v247
      %v382 = vunpack.c.l.b16 %v248
      %v383 = vunpack.c.l.b16 %v249
      %v384 = vpack.c.b16 %v321, %v320
      %v385 = vpack.c.b16 %v323, %v322
      %v386 = vpack.c.b16 %v325, %v324
      %v387 = vpack.c.b16 %v327, %v326
      %v388 = vpack.c.b16 %v329, %v328
      %v389 = vpack.c.b16 %v331, %v330
      %v390 = vpack.c.b16 %v333, %v332
      %v391 = vpack.c.b16 %v335, %v334
      %v392 = vpack.c.b16 %v337, %v336
      %v393 = vpack.c.b16 %v339, %v338
      %v394 = vpack.c.b16 %v341, %v340
      %v395 = vpack.c.b16 %v343, %v342
      %v396 = vpack.c.b16 %v345, %v344
      %v397 = vpack.c.b16 %v347, %v346
      %v398 = vpack.c.b16 %v349, %v348
      %v399 = vpack.c.b16 %v351, %v350
      %v400 = vpack.c.b16 %v353, %v352
      %v401 = vpack.c.b16 %v355, %v354
      %v402 = vpack.c.b16 %v357, %v356
      %v403 = vpack.c.b16 %v359, %v358
      %v404 = vpack.c.b16 %v361, %v360
      %v405 = vpack.c.b16 %v363, %v362
      %v406 = vpack.c.b16 %v365, %v364
      %v407 = vpack.c.b16 %v367, %v366
      %v408 = vpack.c.b16 %v369, %v368
      %v409 = vpack.c.b16 %v371, %v370
      %v410 = vpack.c.b16 %v373, %v372
      %v411 = vpack.c.b16 %v375, %v374
      %v412 = vpack.c.b16 %v377, %v376
      %v413 = vpack.c.b16 %v379, %v378
      %v414 = vpack.c.b16 %v381, %v380
      %v415 = vpack.c.b16 %v383, %v382
      %v422 = vunpack.c.l.b16 %v250
      %v423 = vunpack.c.l.b16 %v251
      %v424 = vunpack.c.l.b16 %v252
      %v425 = vunpack.c.l.b16 %v253
      %v426 = vunpack.c.l.b16 %v254
      %v427 = vunpack.c.l.b16 %v255
      %v428 = vpack.c.b16 %v423, %v422
      %v429 = vpack.c.b16 %v425, %v424
      %v430 = vpack.c.b16 %v427, %v426
      %vm434 = vcmask 392192
      %v436 = vsel %vm434, %v384, 0
      %v439 = vsel %vm434, %v385, 0
      %v442 = vsel %vm434, %v386, 0
      %v445 = vsel %vm434, %v387, 0
      %v448 = vsel %vm434, %v388, 0
      %v451 = vsel %vm434, %v389, 0
      %v454 = vsel %vm434, %v390, 0
      %v457 = vsel %vm434, %v391, 0
      %v460 = vsel %vm434, %v392, 0
      %v463 = vsel %vm434, %v393, 0
      %v466 = vsel %vm434, %v394, 0
      %v469 = vsel %vm434, %v395, 0
      %v472 = vsel %vm434, %v396, 0
      %v475 = vsel %vm434, %v397, 0
      %v478 = vsel %vm434, %v398, 0
      %v481 = vsel %vm434, %v399, 0
      %v484 = vsel %vm434, %v400, 0
      %v487 = vsel %vm434, %v401, 0
      %v490 = vsel %vm434, %v402, 0
      %v493 = vsel %vm434, %v403, 0
      %v496 = vsel %vm434, %v404, 0
      %v499 = vsel %vm434, %v405, 0
      %v502 = vsel %vm434, %v406, 0
      %v505 = vsel %vm434, %v407, 0
      %v508 = vsel %vm434, %v408, 0
      %v511 = vsel %vm434, %v409, 0
      %v514 = vsel %vm434, %v410, 0
      %v517 = vsel %vm434, %v411, 0
      %v520 = vsel %vm434, %v412, 0
      %v523 = vsel %vm434, %v413, 0
      %v526 = vsel %vm434, %v414, 0
      %v529 = vsel %vm434, %v415, 0
      %531 = vmatprep.subr.bf16.mxu0 0
      %532 = vmatpush1.bf16.msra.mxu0 %v428
      %533 = vmatprep.subr.bf16.mxu0 0
      %534 = vmatpush1.bf16.msra.mxu0 %v429
      %535 = vmatprep.subr.bf16.mxu0 0
      %536 = vmatpush1.bf16.msra.mxu0 %v430
      %537 = vmatprep.subr.bf16.mxu0 0
      %538 = vmatpush1.bf16.msra.mxu0 0
      %539 = vmatprep.subr.bf16.mxu0 0
      %540 = vmatpush1.bf16.msra.mxu0 0
      %541 = vmatprep.subr.bf16.mxu0 0
      %542 = vmatpush1.bf16.msra.mxu0 0
      %543 = vmatprep.subr.bf16.mxu0 0
      %544 = vmatpush1.bf16.msra.mxu0 0
      %545 = vmatprep.subr.bf16.mxu0 0
      %546 = vmatpush1.bf16.msra.mxu0 0
      %547 = vmatprep.subr.bf16.mxu0 0
      %548 = vmatpush1.bf16.msra.mxu0 0
      %549 = vmatprep.subr.bf16.mxu0 0
      %550 = vmatpush1.bf16.msra.mxu0 0
      %551 = vmatprep.subr.bf16.mxu0 0
      %552 = vmatpush1.bf16.msra.mxu0 0
      %553 = vmatprep.subr.bf16.mxu0 0
      %554 = vmatpush1.bf16.msra.mxu0 0
      %555 = vmatprep.subr.bf16.mxu0 0
      %556 = vmatpush1.bf16.msra.mxu0 0
      %557 = vmatprep.subr.bf16.mxu0 0
      %558 = vmatpush1.bf16.msra.mxu0 0
      %559 = vmatprep.subr.bf16.mxu0 0
      %560 = vmatpush1.bf16.msra.mxu0 0
      %561 = vmatprep.subr.bf16.mxu0 0
      %562 = vmatpush1.bf16.msra.mxu0 0
      %563 = vmatprep.mubr.bf16.mxu0 0
      %564 = vmatmul.mubr.bf16.gmra.mrb[0].mxu0 %v436
      %v565 = vpop.f32.mrb[0].mxu0
      %v566 = vadd.f32 0.0, %v565
      %v567 = vpop.f32.mrb[0].mxu0
      %v568 = vpop.f32.mrb[0].mxu0
      %v569 = vadd.f32 0.0, %v568
      %v570 = vpop.f32.mrb[0].mxu0
      %571 = vmatprep.mubr.bf16.mxu0 0
      %572 = vmatmul.mubr.bf16.gmra.mrb[0].mxu0 %v439
      %v573 = vpop.f32.mrb[0].mxu0
      %v574 = vadd.f32 0.0, %v573
      %v575 = vpop.f32.mrb[0].mxu0
      %v576 = vpop.f32.mrb[0].mxu0
      %v577 = vadd.f32 0.0, %v576
      %v578 = vpop.f32.mrb[0].mxu0
      %579 = vmatprep.mubr.bf16.mxu0 0
      %580 = vmatmul.mubr.bf16.gmra.mrb[0].mxu0 %v442
      %v581 = vpop.f32.mrb[0].mxu0
      %v582 = vadd.f32 0.0, %v581
      %v583 = vpop.f32.mrb[0].mxu0
      %v584 = vpop.f32.mrb[0].mxu0
      %v585 = vadd.f32 0.0, %v584
      %v586 = vpop.f32.mrb[0].mxu0
      %587 = vmatprep.mubr.bf16.mxu0 0
      %588 = vmatmul.mubr.bf16.gmra.mrb[0].mxu0 %v445
      %v589 = vpop.f32.mrb[0].mxu0
      %v590 = vadd.f32 0.0, %v589
      %v591 = vpop.f32.mrb[0].mxu0
      %v592 = vpop.f32.mrb[0].mxu0
      %v593 = vadd.f32 0.0, %v592
      %v594 = vpop.f32.mrb[0].mxu0
      %595 = vmatprep.mubr.bf16.mxu0 0
      %596 = vmatmul.mubr.bf16.gmra.mrb[0].mxu0 %v448
      %v597 = vpop.f32.mrb[0].mxu0
      %v598 = vadd.f32 0.0, %v597
      %v599 = vpop.f32.mrb[0].mxu0
      %v600 = vpop.f32.mrb[0].mxu0
      %v601 = vadd.f32 0.0, %v600
      %v602 = vpop.f32.mrb[0].mxu0
      %603 = vmatprep.mubr.bf16.mxu0 0
      %604 = vmatmul.mubr.bf16.gmra.mrb[0].mxu0 %v451
      %v605 = vpop.f32.mrb[0].mxu0
      %v606 = vadd.f32 0.0, %v605
      %v607 = vpop.f32.mrb[0].mxu0
      %v608 = vpop.f32.mrb[0].mxu0
      %v609 = vadd.f32 0.0, %v608
      %v610 = vpop.f32.mrb[0].mxu0
      %611 = vmatprep.mubr.bf16.mxu0 0
      %612 = vmatmul.mubr.bf16.gmra.mrb[0].mxu0 %v454
      %v613 = vpop.f32.mrb[0].mxu0
      %v614 = vadd.f32 0.0, %v613
      %v615 = vpop.f32.mrb[0].mxu0
      %v616 = vpop.f32.mrb[0].mxu0
      %v617 = vadd.f32 0.0, %v616
      %v618 = vpop.f32.mrb[0].mxu0
      %619 = vmatprep.mubr.bf16.mxu0 0
      %620 = vmatmul.mubr.bf16.gmra.mrb[0].mxu0 %v457
      %v621 = vpop.f32.mrb[0].mxu0
      %v622 = vadd.f32 0.0, %v621
      %v623 = vpop.f32.mrb[0].mxu0
      %v624 = vpop.f32.mrb[0].mxu0
      %v625 = vadd.f32 0.0, %v624
      %v626 = vpop.f32.mrb[0].mxu0
      %627 = vmatprep.mubr.bf16.mxu0 0
      %628 = vmatmul.mubr.bf16.gmra.mrb[0].mxu0 %v460
      %v629 = vpop.f32.mrb[0].mxu0
      %v630 = vadd.f32 0.0, %v629
      %v631 = vpop.f32.mrb[0].mxu0
      %v632 = vpop.f32.mrb[0].mxu0
      %v633 = vadd.f32 0.0, %v632
      %v634 = vpop.f32.mrb[0].mxu0
      %635 = vmatprep.mubr.bf16.mxu0 0
      %636 = vmatmul.mubr.bf16.gmra.mrb[0].mxu0 %v463
      %v637 = vpop.f32.mrb[0].mxu0
      %v638 = vadd.f32 0.0, %v637
      %v639 = vpop.f32.mrb[0].mxu0
      %v640 = vpop.f32.mrb[0].mxu0
      %v641 = vadd.f32 0.0, %v640
      %v642 = vpop.f32.mrb[0].mxu0
      %643 = vmatprep.mubr.bf16.mxu0 0
      %644 = vmatmul.mubr.bf16.gmra.mrb[0].mxu0 %v466
      %v645 = vpop.f32.mrb[0].mxu0
      %v646 = vadd.f32 0.0, %v645
      %v647 = vpop.f32.mrb[0].mxu0
      %v648 = vpop.f32.mrb[0].mxu0
      %v649 = vadd.f32 0.0, %v648
      %v650 = vpop.f32.mrb[0].mxu0
      %651 = vmatprep.mubr.bf16.mxu0 0
      %652 = vmatmul.mubr.bf16.gmra.mrb[0].mxu0 %v469
      %v653 = vpop.f32.mrb[0].mxu0
      %v654 = vadd.f32 0.0, %v653
      %v655 = vpop.f32.mrb[0].mxu0
      %v656 = vpop.f32.mrb[0].mxu0
      %v657 = vadd.f32 0.0, %v656
      %v658 = vpop.f32.mrb[0].mxu0
      %659 = vmatprep.mubr.bf16.mxu0 0
      %660 = vmatmul.mubr.bf16.gmra.mrb[0].mxu0 %v472
      %v661 = vpop.f32.mrb[0].mxu0
      %v662 = vadd.f32 0.0, %v661
      %v663 = vpop.f32.mrb[0].mxu0
      %v664 = vpop.f32.mrb[0].mxu0
      %v665 = vadd.f32 0.0, %v664
      %v666 = vpop.f32.mrb[0].mxu0
      %667 = vmatprep.mubr.bf16.mxu0 0
      %668 = vmatmul.mubr.bf16.gmra.mrb[0].mxu0 %v475
      %v669 = vpop.f32.mrb[0].mxu0
      %v670 = vadd.f32 0.0, %v669
      %v671 = vpop.f32.mrb[0].mxu0
      %v672 = vpop.f32.mrb[0].mxu0
      %v673 = vadd.f32 0.0, %v672
      %v674 = vpop.f32.mrb[0].mxu0
      %675 = vmatprep.mubr.bf16.mxu0 0
      %676 = vmatmul.mubr.bf16.gmra.mrb[0].mxu0 %v478
      %v677 = vpop.f32.mrb[0].mxu0
      %v678 = vadd.f32 0.0, %v677
      %v679 = vpop.f32.mrb[0].mxu0
      %v680 = vpop.f32.mrb[0].mxu0
      %v681 = vadd.f32 0.0, %v680
      %v682 = vpop.f32.mrb[0].mxu0
      %683 = vmatprep.mubr.bf16.mxu0 0
      %684 = vmatmul.mubr.bf16.gmra.mrb[0].mxu0 %v481
      %v685 = vpop.f32.mrb[0].mxu0
      %v686 = vadd.f32 0.0, %v685
      %v687 = vpop.f32.mrb[0].mxu0
      %v688 = vpop.f32.mrb[0].mxu0
      %v689 = vadd.f32 0.0, %v688
      %v690 = vpop.f32.mrb[0].mxu0
      %691 = vmatprep.mubr.bf16.mxu0 0
      %692 = vmatmul.mubr.bf16.gmra.mrb[0].mxu0 %v484
      %v693 = vpop.f32.mrb[0].mxu0
      %v694 = vadd.f32 0.0, %v693
      %v695 = vpop.f32.mrb[0].mxu0
      %v696 = vpop.f32.mrb[0].mxu0
      %v697 = vadd.f32 0.0, %v696
      %v698 = vpop.f32.mrb[0].mxu0
      %699 = vmatprep.mubr.bf16.mxu0 0
      %700 = vmatmul.mubr.bf16.gmra.mrb[0].mxu0 %v487
      %v701 = vpop.f32.mrb[0].mxu0
      %v702 = vadd.f32 0.0, %v701
      %v703 = vpop.f32.mrb[0].mxu0
      %v704 = vpop.f32.mrb[0].mxu0
      %v705 = vadd.f32 0.0, %v704
      %v706 = vpop.f32.mrb[0].mxu0
      %707 = vmatprep.mubr.bf16.mxu0 0
      %708 = vmatmul.mubr.bf16.gmra.mrb[0].mxu0 %v490
      %v709 = vpop.f32.mrb[0].mxu0
      %v710 = vadd.f32 0.0, %v709
      %v711 = vpop.f32.mrb[0].mxu0
      %v712 = vpop.f32.mrb[0].mxu0
      %v713 = vadd.f32 0.0, %v712
      %v714 = vpop.f32.mrb[0].mxu0
      %715 = vmatprep.mubr.bf16.mxu0 0
      %716 = vmatmul.mubr.bf16.gmra.mrb[0].mxu0 %v493
      %v717 = vpop.f32.mrb[0].mxu0
      %v718 = vadd.f32 0.0, %v717
      %v719 = vpop.f32.mrb[0].mxu0
      %v720 = vpop.f32.mrb[0].mxu0
      %v721 = vadd.f32 0.0, %v720
      %v722 = vpop.f32.mrb[0].mxu0
      %723 = vmatprep.mubr.bf16.mxu0 0
      %724 = vmatmul.mubr.bf16.gmra.mrb[0].mxu0 %v496
      %v725 = vpop.f32.mrb[0].mxu0
      %v726 = vadd.f32 0.0, %v725
      %v727 = vpop.f32.mrb[0].mxu0
      %v728 = vpop.f32.mrb[0].mxu0
      %v729 = vadd.f32 0.0, %v728
      %v730 = vpop.f32.mrb[0].mxu0
      %731 = vmatprep.mubr.bf16.mxu0 0
      %732 = vmatmul.mubr.bf16.gmra.mrb[0].mxu0 %v499
      %v733 = vpop.f32.mrb[0].mxu0
      %v734 = vadd.f32 0.0, %v733
      %v735 = vpop.f32.mrb[0].mxu0
      %v736 = vpop.f32.mrb[0].mxu0
      %v737 = vadd.f32 0.0, %v736
      %v738 = vpop.f32.mrb[0].mxu0
      %739 = vmatprep.mubr.bf16.mxu0 0
      %740 = vmatmul.mubr.bf16.gmra.mrb[0].mxu0 %v502
      %v741 = vpop.f32.mrb[0].mxu0
      %v742 = vadd.f32 0.0, %v741
      %v743 = vpop.f32.mrb[0].mxu0
      %v744 = vpop.f32.mrb[0].mxu0
      %v745 = vadd.f32 0.0, %v744
      %v746 = vpop.f32.mrb[0].mxu0
      %747 = vmatprep.mubr.bf16.mxu0 0
      %748 = vmatmul.mubr.bf16.gmra.mrb[0].mxu0 %v505
      %v749 = vpop.f32.mrb[0].mxu0
      %v750 = vadd.f32 0.0, %v749
      %v751 = vpop.f32.mrb[0].mxu0
      %v752 = vpop.f32.mrb[0].mxu0
      %v753 = vadd.f32 0.0, %v752
      %v754 = vpop.f32.mrb[0].mxu0
      %755 = vmatprep.mubr.bf16.mxu0 0
      %756 = vmatmul.mubr.bf16.gmra.mrb[0].mxu0 %v508
      %v757 = vpop.f32.mrb[0].mxu0
      %v758 = vadd.f32 0.0, %v757
      %v759 = vpop.f32.mrb[0].mxu0
      %v760 = vpop.f32.mrb[0].mxu0
      %v761 = vadd.f32 0.0, %v760
      %v762 = vpop.f32.mrb[0].mxu0
      %763 = vmatprep.mubr.bf16.mxu0 0
      %764 = vmatmul.mubr.bf16.gmra.mrb[0].mxu0 %v511
      %v765 = vpop.f32.mrb[0].mxu0
      %v766 = vadd.f32 0.0, %v765
      %v767 = vpop.f32.mrb[0].mxu0
      %v768 = vpop.f32.mrb[0].mxu0
      %v769 = vadd.f32 0.0, %v768
      %v770 = vpop.f32.mrb[0].mxu0
      %771 = vmatprep.mubr.bf16.mxu0 0
      %772 = vmatmul.mubr.bf16.gmra.mrb[0].mxu0 %v514
      %v773 = vpop.f32.mrb[0].mxu0
      %v774 = vadd.f32 0.0, %v773
      %v775 = vpop.f32.mrb[0].mxu0
      %v776 = vpop.f32.mrb[0].mxu0
      %v777 = vadd.f32 0.0, %v776
      %v778 = vpop.f32.mrb[0].mxu0
      %779 = vmatprep.mubr.bf16.mxu0 0
      %780 = vmatmul.mubr.bf16.gmra.mrb[0].mxu0 %v517
      %v781 = vpop.f32.mrb[0].mxu0
      %v782 = vadd.f32 0.0, %v781
      %v783 = vpop.f32.mrb[0].mxu0
      %v784 = vpop.f32.mrb[0].mxu0
      %v785 = vadd.f32 0.0, %v784
      %v786 = vpop.f32.mrb[0].mxu0
      %787 = vmatprep.mubr.bf16.mxu0 0
      %788 = vmatmul.mubr.bf16.gmra.mrb[0].mxu0 %v520
      %v789 = vpop.f32.mrb[0].mxu0
      %v790 = vadd.f32 0.0, %v789
      %v791 = vpop.f32.mrb[0].mxu0
      %v792 = vpop.f32.mrb[0].mxu0
      %v793 = vadd.f32 0.0, %v792
      %v794 = vpop.f32.mrb[0].mxu0
      %795 = vmatprep.mubr.bf16.mxu0 0
      %796 = vmatmul.mubr.bf16.gmra.mrb[0].mxu0 %v523
      %v797 = vpop.f32.mrb[0].mxu0
      %v798 = vadd.f32 0.0, %v797
      %v799 = vpop.f32.mrb[0].mxu0
      %v800 = vpop.f32.mrb[0].mxu0
      %v801 = vadd.f32 0.0, %v800
      %v802 = vpop.f32.mrb[0].mxu0
      %803 = vmatprep.mubr.bf16.mxu0 0
      %804 = vmatmul.mubr.bf16.gmra.mrb[0].mxu0 %v526
      %v805 = vpop.f32.mrb[0].mxu0
      %v806 = vadd.f32 0.0, %v805
      %v807 = vpop.f32.mrb[0].mxu0
      %v808 = vpop.f32.mrb[0].mxu0
      %v809 = vadd.f32 0.0, %v808
      %v810 = vpop.f32.mrb[0].mxu0
      %811 = vmatprep.mubr.bf16.mxu0 0
      %812 = vmatmul.mubr.bf16.gmra.mrb[0].mxu0 %v529
      %v813 = vpop.f32.mrb[0].mxu0
      %v814 = vadd.f32 0.0, %v813
      %v815 = vpop.f32.mrb[0].mxu0
      %v816 = vpop.f32.mrb[0].mxu0
      %v817 = vadd.f32 0.0, %v816
      %v818 = vpop.f32.mrb[0].mxu0
      %819 = vdwg.mxu0
      %vm820 = vcmp.ge.f32.partialorder %v566, 0.0
      %vm821 = vcmp.ge.f32.partialorder %v569, 0.0
      %vm822 = vcmp.ge.f32.partialorder %v574, 0.0
      %vm823 = vcmp.ge.f32.partialorder %v577, 0.0
      %vm824 = vcmp.ge.f32.partialorder %v582, 0.0
      %vm825 = vcmp.ge.f32.partialorder %v585, 0.0
      %vm826 = vcmp.ge.f32.partialorder %v590, 0.0
      %vm827 = vcmp.ge.f32.partialorder %v593, 0.0
      %vm828 = vcmp.ge.f32.partialorder %v598, 0.0
      %vm829 = vcmp.ge.f32.partialorder %v601, 0.0
      %vm830 = vcmp.ge.f32.partialorder %v606, 0.0
      %vm831 = vcmp.ge.f32.partialorder %v609, 0.0
      %vm832 = vcmp.ge.f32.partialorder %v614, 0.0
      %vm833 = vcmp.ge.f32.partialorder %v617, 0.0
      %vm834 = vcmp.ge.f32.partialorder %v622, 0.0
      %vm835 = vcmp.ge.f32.partialorder %v625, 0.0
      %vm836 = vcmp.ge.f32.partialorder %v630, 0.0
      %vm837 = vcmp.ge.f32.partialorder %v633, 0.0
      %vm838 = vcmp.ge.f32.partialorder %v638, 0.0
      %vm839 = vcmp.ge.f32.partialorder %v641, 0.0
      %vm840 = vcmp.ge.f32.partialorder %v646, 0.0
      %vm841 = vcmp.ge.f32.partialorder %v649, 0.0
      %vm842 = vcmp.ge.f32.partialorder %v654, 0.0
      %vm843 = vcmp.ge.f32.partialorder %v657, 0.0
      %vm844 = vcmp.ge.f32.partialorder %v662, 0.0
      %vm845 = vcmp.ge.f32.partialorder %v665, 0.0
      %vm846 = vcmp.ge.f32.partialorder %v670, 0.0
      %vm847 = vcmp.ge.f32.partialorder %v673, 0.0
      %vm848 = vcmp.ge.f32.partialorder %v678, 0.0
      %vm849 = vcmp.ge.f32.partialorder %v681, 0.0
      %vm850 = vcmp.ge.f32.partialorder %v686, 0.0
      %vm851 = vcmp.ge.f32.partialorder %v689, 0.0
      %vm852 = vcmp.ge.f32.partialorder %v694, 0.0
      %vm853 = vcmp.ge.f32.partialorder %v697, 0.0
      %vm854 = vcmp.ge.f32.partialorder %v702, 0.0
      %vm855 = vcmp.ge.f32.partialorder %v705, 0.0
      %vm856 = vcmp.ge.f32.partialorder %v710, 0.0
      %vm857 = vcmp.ge.f32.partialorder %v713, 0.0
      %vm858 = vcmp.ge.f32.partialorder %v718, 0.0
      %vm859 = vcmp.ge.f32.partialorder %v721, 0.0
      %vm860 = vcmp.ge.f32.partialorder %v726, 0.0
      %vm861 = vcmp.ge.f32.partialorder %v729, 0.0
      %vm862 = vcmp.ge.f32.partialorder %v734, 0.0
      %vm863 = vcmp.ge.f32.partialorder %v737, 0.0
      %vm864 = vcmp.ge.f32.partialorder %v742, 0.0
      %vm865 = vcmp.ge.f32.partialorder %v745, 0.0
      %vm866 = vcmp.ge.f32.partialorder %v750, 0.0
      %vm867 = vcmp.ge.f32.partialorder %v753, 0.0
      %vm868 = vcmp.ge.f32.partialorder %v758, 0.0
      %vm869 = vcmp.ge.f32.partialorder %v761, 0.0
      %vm870 = vcmp.ge.f32.partialorder %v766, 0.0
      %vm871 = vcmp.ge.f32.partialorder %v769, 0.0
      %vm872 = vcmp.ge.f32.partialorder %v774, 0.0
      %vm873 = vcmp.ge.f32.partialorder %v777, 0.0
      %vm874 = vcmp.ge.f32.partialorder %v782, 0.0
      %vm875 = vcmp.ge.f32.partialorder %v785, 0.0
      %vm876 = vcmp.ge.f32.partialorder %v790, 0.0
      %vm877 = vcmp.ge.f32.partialorder %v793, 0.0
      %vm878 = vcmp.ge.f32.partialorder %v798, 0.0
      %vm879 = vcmp.ge.f32.partialorder %v801, 0.0
      %vm880 = vcmp.ge.f32.partialorder %v806, 0.0
      %vm881 = vcmp.ge.f32.partialorder %v809, 0.0
      %vm882 = vcmp.ge.f32.partialorder %v814, 0.0
      %vm883 = vcmp.ge.f32.partialorder %v817, 0.0
      %v884 = vmul.f32 %v566, 0.01
      %v885 = vmul.f32 %v569, 0.01
      %v886 = vmul.f32 %v574, 0.01
      %v887 = vmul.f32 %v577, 0.01
      %v888 = vmul.f32 %v582, 0.01
      %v889 = vmul.f32 %v585, 0.01
      %v890 = vmul.f32 %v590, 0.01
      %v891 = vmul.f32 %v593, 0.01
      %v892 = vmul.f32 %v598, 0.01
      %v893 = vmul.f32 %v601, 0.01
      %v894 = vmul.f32 %v606, 0.01
      %v895 = vmul.f32 %v609, 0.01
      %v896 = vmul.f32 %v614, 0.01
      %v897 = vmul.f32 %v617, 0.01
      %v898 = vmul.f32 %v622, 0.01
      %v899 = vmul.f32 %v625, 0.01
      %v900 = vmul.f32 %v630, 0.01
      %v901 = vmul.f32 %v633, 0.01
      %v902 = vmul.f32 %v638, 0.01
      %v903 = vmul.f32 %v641, 0.01
      %v904 = vmul.f32 %v646, 0.01
      %v905 = vmul.f32 %v649, 0.01
      %v906 = vmul.f32 %v654, 0.01
      %v907 = vmul.f32 %v657, 0.01
      %v908 = vmul.f32 %v662, 0.01
      %v909 = vmul.f32 %v665, 0.01
      %v910 = vmul.f32 %v670, 0.01
      %v911 = vmul.f32 %v673, 0.01
      %v912 = vmul.f32 %v678, 0.01
      %v913 = vmul.f32 %v681, 0.01
      %v914 = vmul.f32 %v686, 0.01
      %v915 = vmul.f32 %v689, 0.01
      %v916 = vmul.f32 %v694, 0.01
      %v917 = vmul.f32 %v697, 0.01
      %v918 = vmul.f32 %v702, 0.01
      %v919 = vmul.f32 %v705, 0.01
      %v920 = vmul.f32 %v710, 0.01
      %v921 = vmul.f32 %v713, 0.01
      %v922 = vmul.f32 %v718, 0.01
      %v923 = vmul.f32 %v721, 0.01
      %v924 = vmul.f32 %v726, 0.01
      %v925 = vmul.f32 %v729, 0.01
      %v926 = vmul.f32 %v734, 0.01
      %v927 = vmul.f32 %v737, 0.01
      %v928 = vmul.f32 %v742, 0.01
      %v929 = vmul.f32 %v745, 0.01
      %v930 = vmul.f32 %v750, 0.01
      %v931 = vmul.f32 %v753, 0.01
      %v932 = vmul.f32 %v758, 0.01
      %v933 = vmul.f32 %v761, 0.01
      %v934 = vmul.f32 %v766, 0.01
      %v935 = vmul.f32 %v769, 0.01
      %v936 = vmul.f32 %v774, 0.01
      %v937 = vmul.f32 %v777, 0.01
      %v938 = vmul.f32 %v782, 0.01
      %v939 = vmul.f32 %v785, 0.01
      %v940 = vmul.f32 %v790, 0.01
      %v941 = vmul.f32 %v793, 0.01
      %v942 = vmul.f32 %v798, 0.01
      %v943 = vmul.f32 %v801, 0.01
      %v944 = vmul.f32 %v806, 0.01
      %v945 = vmul.f32 %v809, 0.01
      %v946 = vmul.f32 %v814, 0.01
      %v947 = vmul.f32 %v817, 0.01
      %v948 = vsel %vm820, %v566, %v884
      %v949 = vsel %vm821, %v569, %v885
      %v950 = vsel %vm822, %v574, %v886
      %v951 = vsel %vm823, %v577, %v887
      %v952 = vsel %vm824, %v582, %v888
      %v953 = vsel %vm825, %v585, %v889
      %v954 = vsel %vm826, %v590, %v890
      %v955 = vsel %vm827, %v593, %v891
      %v956 = vsel %vm828, %v598, %v892
      %v957 = vsel %vm829, %v601, %v893
      %v958 = vsel %vm830, %v606, %v894
      %v959 = vsel %vm831, %v609, %v895
      %v960 = vsel %vm832, %v614, %v896
      %v961 = vsel %vm833, %v617, %v897
      %v962 = vsel %vm834, %v622, %v898
      %v963 = vsel %vm835, %v625, %v899
      %v964 = vsel %vm836, %v630, %v900
      %v965 = vsel %vm837, %v633, %v901
      %v966 = vsel %vm838, %v638, %v902
      %v967 = vsel %vm839, %v641, %v903
      %v968 = vsel %vm840, %v646, %v904
      %v969 = vsel %vm841, %v649, %v905
      %v970 = vsel %vm842, %v654, %v906
      %v971 = vsel %vm843, %v657, %v907
      %v972 = vsel %vm844, %v662, %v908
      %v973 = vsel %vm845, %v665, %v909
      %v974 = vsel %vm846, %v670, %v910
      %v975 = vsel %vm847, %v673, %v911
      %v976 = vsel %vm848, %v678, %v912
      %v977 = vsel %vm849, %v681, %v913
      %v978 = vsel %vm850, %v686, %v914
      %v979 = vsel %vm851, %v689, %v915
      %v980 = vsel %vm852, %v694, %v916
      %v981 = vsel %vm853, %v697, %v917
      %v982 = vsel %vm854, %v702, %v918
      %v983 = vsel %vm855, %v705, %v919
      %v984 = vsel %vm856, %v710, %v920
      %v985 = vsel %vm857, %v713, %v921
      %v986 = vsel %vm858, %v718, %v922
      %v987 = vsel %vm859, %v721, %v923
      %v988 = vsel %vm860, %v726, %v924
      %v989 = vsel %vm861, %v729, %v925
      %v990 = vsel %vm862, %v734, %v926
      %v991 = vsel %vm863, %v737, %v927
      %v992 = vsel %vm864, %v742, %v928
      %v993 = vsel %vm865, %v745, %v929
      %v994 = vsel %vm866, %v750, %v930
      %v995 = vsel %vm867, %v753, %v931
      %v996 = vsel %vm868, %v758, %v932
      %v997 = vsel %vm869, %v761, %v933
      %v998 = vsel %vm870, %v766, %v934
      %v999 = vsel %vm871, %v769, %v935
      %v1000 = vsel %vm872, %v774, %v936
      %v1001 = vsel %vm873, %v777, %v937
      %v1002 = vsel %vm874, %v782, %v938
      %v1003 = vsel %vm875, %v785, %v939
      %v1004 = vsel %vm876, %v790, %v940
      %v1005 = vsel %vm877, %v793, %v941
      %v1006 = vsel %vm878, %v798, %v942
      %v1007 = vsel %vm879, %v801, %v943
      %v1008 = vsel %vm880, %v806, %v944
      %v1009 = vsel %vm881, %v809, %v945
      %v1010 = vsel %vm882, %v814, %v946
      %v1011 = vsel %vm883, %v817, %v947
      %v1012 = vpack.c.bf16 %v949, %v948
      %v1013 = vpack.c.bf16 %v951, %v950
      %v1014 = vpack.c.bf16 %v953, %v952
      %v1015 = vpack.c.bf16 %v955, %v954
      %v1016 = vpack.c.bf16 %v957, %v956
      %v1017 = vpack.c.bf16 %v959, %v958
      %v1018 = vpack.c.bf16 %v961, %v960
      %v1019 = vpack.c.bf16 %v963, %v962
      %v1020 = vpack.c.bf16 %v965, %v964
      %v1021 = vpack.c.bf16 %v967, %v966
      %v1022 = vpack.c.bf16 %v969, %v968
      %v1023 = vpack.c.bf16 %v971, %v970
      %v1024 = vpack.c.bf16 %v973, %v972
      %v1025 = vpack.c.bf16 %v975, %v974
      %v1026 = vpack.c.bf16 %v977, %v976
      %v1027 = vpack.c.bf16 %v979, %v978
      %v1028 = vpack.c.bf16 %v981, %v980
      %v1029 = vpack.c.bf16 %v983, %v982
      %v1030 = vpack.c.bf16 %v985, %v984
      %v1031 = vpack.c.bf16 %v987, %v986
      %v1032 = vpack.c.bf16 %v989, %v988
      %v1033 = vpack.c.bf16 %v991, %v990
      %v1034 = vpack.c.bf16 %v993, %v992
      %v1035 = vpack.c.bf16 %v995, %v994
      %v1036 = vpack.c.bf16 %v997, %v996
      %v1037 = vpack.c.bf16 %v999, %v998
      %v1038 = vpack.c.bf16 %v1001, %v1000
      %v1039 = vpack.c.bf16 %v1003, %v1002
      %v1040 = vpack.c.bf16 %v1005, %v1004
      %v1041 = vpack.c.bf16 %v1007, %v1006
      %v1042 = vpack.c.bf16 %v1009, %v1008
      %v1043 = vpack.c.bf16 %v1011, %v1010
      %v1076 = vunpack.c.l.b16 %v1012
      %v1077 = vunpack.c.h.b16 %v1012
      %v1078 = vunpack.c.l.b16 %v1013
      %v1079 = vunpack.c.h.b16 %v1013
      %v1080 = vunpack.c.l.b16 %v1014
      %v1081 = vunpack.c.h.b16 %v1014
      %v1082 = vunpack.c.l.b16 %v1015
      %v1083 = vunpack.c.h.b16 %v1015
      %v1084 = vunpack.c.l.b16 %v1016
      %v1085 = vunpack.c.h.b16 %v1016
      %v1086 = vunpack.c.l.b16 %v1017
      %v1087 = vunpack.c.h.b16 %v1017
      %v1088 = vunpack.c.l.b16 %v1018
      %v1089 = vunpack.c.h.b16 %v1018
      %v1090 = vunpack.c.l.b16 %v1019
      %v1091 = vunpack.c.h.b16 %v1019
      %v1092 = vunpack.c.l.b16 %v1020
      %v1093 = vunpack.c.h.b16 %v1020
      %v1094 = vunpack.c.l.b16 %v1021
      %v1095 = vunpack.c.h.b16 %v1021
      %v1096 = vunpack.c.l.b16 %v1022
      %v1097 = vunpack.c.h.b16 %v1022
      %v1098 = vunpack.c.l.b16 %v1023
      %v1099 = vunpack.c.h.b16 %v1023
      %v1100 = vunpack.c.l.b16 %v1024
      %v1101 = vunpack.c.h.b16 %v1024
      %v1102 = vunpack.c.l.b16 %v1025
      %v1103 = vunpack.c.h.b16 %v1025
      %v1104 = vunpack.c.l.b16 %v1026
      %v1105 = vunpack.c.h.b16 %v1026
      %v1106 = vunpack.c.l.b16 %v1027
      %v1107 = vunpack.c.h.b16 %v1027
      %v1108 = vunpack.c.l.b16 %v1028
      %v1109 = vunpack.c.h.b16 %v1028
      %v1110 = vunpack.c.l.b16 %v1029
      %v1111 = vunpack.c.h.b16 %v1029
      %v1112 = vunpack.c.l.b16 %v1030
      %v1113 = vunpack.c.h.b16 %v1030
      %v1114 = vunpack.c.l.b16 %v1031
      %v1115 = vunpack.c.h.b16 %v1031
      %v1116 = vunpack.c.l.b16 %v1032
      %v1117 = vunpack.c.h.b16 %v1032
      %v1118 = vunpack.c.l.b16 %v1033
      %v1119 = vunpack.c.h.b16 %v1033
      %v1120 = vunpack.c.l.b16 %v1034
      %v1121 = vunpack.c.h.b16 %v1034
      %v1122 = vunpack.c.l.b16 %v1035
      %v1123 = vunpack.c.h.b16 %v1035
      %v1124 = vunpack.c.l.b16 %v1036
      %v1125 = vunpack.c.h.b16 %v1036
      %v1126 = vunpack.c.l.b16 %v1037
      %v1127 = vunpack.c.h.b16 %v1037
      %v1128 = vunpack.c.l.b16 %v1038
      %v1129 = vunpack.c.h.b16 %v1038
      %v1130 = vunpack.c.l.b16 %v1039
      %v1131 = vunpack.c.h.b16 %v1039
      %v1132 = vunpack.c.l.b16 %v1040
      %v1133 = vunpack.c.h.b16 %v1040
      %v1134 = vunpack.c.l.b16 %v1041
      %v1135 = vunpack.c.h.b16 %v1041
      %v1136 = vunpack.c.l.b16 %v1042
      %v1137 = vunpack.c.h.b16 %v1042
      %v1138 = vunpack.c.l.b16 %v1043
      %v1139 = vunpack.c.h.b16 %v1043
      %v1140 = vpack.c.b16 %v1076, %v1076
      %v1141 = vpack.c.b16 %v1077, %v1077
      %v1142 = vpack.c.b16 %v1078, %v1078
      %v1143 = vpack.c.b16 %v1079, %v1079
      %v1144 = vpack.c.b16 %v1080, %v1080
      %v1145 = vpack.c.b16 %v1081, %v1081
      %v1146 = vpack.c.b16 %v1082, %v1082
      %v1147 = vpack.c.b16 %v1083, %v1083
      %v1148 = vpack.c.b16 %v1084, %v1084
      %v1149 = vpack.c.b16 %v1085, %v1085
      %v1150 = vpack.c.b16 %v1086, %v1086
      %v1151 = vpack.c.b16 %v1087, %v1087
      %v1152 = vpack.c.b16 %v1088, %v1088
      %v1153 = vpack.c.b16 %v1089, %v1089
      %v1154 = vpack.c.b16 %v1090, %v1090
      %v1155 = vpack.c.b16 %v1091, %v1091
      %v1156 = vpack.c.b16 %v1092, %v1092
      %v1157 = vpack.c.b16 %v1093, %v1093
      %v1158 = vpack.c.b16 %v1094, %v1094
      %v1159 = vpack.c.b16 %v1095, %v1095
      %v1160 = vpack.c.b16 %v1096, %v1096
      %v1161 = vpack.c.b16 %v1097, %v1097
      %v1162 = vpack.c.b16 %v1098, %v1098
      %v1163 = vpack.c.b16 %v1099, %v1099
      %v1164 = vpack.c.b16 %v1100, %v1100
      %v1165 = vpack.c.b16 %v1101, %v1101
      %v1166 = vpack.c.b16 %v1102, %v1102
      %v1167 = vpack.c.b16 %v1103, %v1103
      %v1168 = vpack.c.b16 %v1104, %v1104
      %v1169 = vpack.c.b16 %v1105, %v1105
      %v1170 = vpack.c.b16 %v1106, %v1106
      %v1171 = vpack.c.b16 %v1107, %v1107
      %v1172 = vpack.c.b16 %v1108, %v1108
      %v1173 = vpack.c.b16 %v1109, %v1109
      %v1174 = vpack.c.b16 %v1110, %v1110
      %v1175 = vpack.c.b16 %v1111, %v1111
      %v1176 = vpack.c.b16 %v1112, %v1112
      %v1177 = vpack.c.b16 %v1113, %v1113
      %v1178 = vpack.c.b16 %v1114, %v1114
      %v1179 = vpack.c.b16 %v1115, %v1115
      %v1180 = vpack.c.b16 %v1116, %v1116
      %v1181 = vpack.c.b16 %v1117, %v1117
      %v1182 = vpack.c.b16 %v1118, %v1118
      %v1183 = vpack.c.b16 %v1119, %v1119
      %v1184 = vpack.c.b16 %v1120, %v1120
      %v1185 = vpack.c.b16 %v1121, %v1121
      %v1186 = vpack.c.b16 %v1122, %v1122
      %v1187 = vpack.c.b16 %v1123, %v1123
      %v1188 = vpack.c.b16 %v1124, %v1124
      %v1189 = vpack.c.b16 %v1125, %v1125
      %v1190 = vpack.c.b16 %v1126, %v1126
      %v1191 = vpack.c.b16 %v1127, %v1127
      %v1192 = vpack.c.b16 %v1128, %v1128
      %v1193 = vpack.c.b16 %v1129, %v1129
      %v1194 = vpack.c.b16 %v1130, %v1130
      %v1195 = vpack.c.b16 %v1131, %v1131
      %v1196 = vpack.c.b16 %v1132, %v1132
      %v1197 = vpack.c.b16 %v1133, %v1133
      %v1198 = vpack.c.b16 %v1134, %v1134
      %v1199 = vpack.c.b16 %v1135, %v1135
      %v1200 = vpack.c.b16 %v1136, %v1136
      %v1201 = vpack.c.b16 %v1137, %v1137
      %v1202 = vpack.c.b16 %v1138, %v1138
      %v1203 = vpack.c.b16 %v1139, %v1139
      %1268 = vst [vmem:[%s179] sm:$0xf] %v1140
      %1269 = vst [vmem:[%s179 + $0x4] sm:$0xf] %v1141
      %1270 = vst [vmem:[%s179 + $0x8] sm:$0xf] %v1142
      %1271 = vst [vmem:[%s179 + $0xc] sm:$0xf] %v1143
      %1272 = vst [vmem:[%s179 + $0x10] sm:$0xf] %v1144
      %1273 = vst [vmem:[%s179 + $0x14] sm:$0xf] %v1145
      %1274 = vst [vmem:[%s179 + $0x18] sm:$0xf] %v1146
      %1275 = vst [vmem:[%s179 + $0x1c] sm:$0xf] %v1147
      %1276 = vst [vmem:[%s179 + $0x20] sm:$0xf] %v1148
      %1277 = vst [vmem:[%s179 + $0x24] sm:$0xf] %v1149
      %1278 = vst [vmem:[%s179 + $0x28] sm:$0xf] %v1150
      %1279 = vst [vmem:[%s179 + $0x2c] sm:$0xf] %v1151
      %1280 = vst [vmem:[%s179 + $0x30] sm:$0xf] %v1152
      %1281 = vst [vmem:[%s179 + $0x34] sm:$0xf] %v1153
      %1282 = vst [vmem:[%s179 + $0x38] sm:$0xf] %v1154
      %1283 = vst [vmem:[%s179 + $0x3c] sm:$0xf] %v1155
      %1284 = vst [vmem:[%s179 + $0x40] sm:$0xf] %v1156
      %1285 = vst [vmem:[%s179 + $0x44] sm:$0xf] %v1157
      %1286 = vst [vmem:[%s179 + $0x48] sm:$0xf] %v1158
      %1287 = vst [vmem:[%s179 + $0x4c] sm:$0xf] %v1159
      %1288 = vst [vmem:[%s179 + $0x50] sm:$0xf] %v1160
      %1289 = vst [vmem:[%s179 + $0x54] sm:$0xf] %v1161
      %1290 = vst [vmem:[%s179 + $0x58] sm:$0xf] %v1162
      %1291 = vst [vmem:[%s179 + $0x5c] sm:$0xf] %v1163
      %1292 = vst [vmem:[%s179 + $0x60] sm:$0xf] %v1164
      %1293 = vst [vmem:[%s179 + $0x64] sm:$0xf] %v1165
      %1294 = vst [vmem:[%s179 + $0x68] sm:$0xf] %v1166
      %1295 = vst [vmem:[%s179 + $0x6c] sm:$0xf] %v1167
      %1296 = vst [vmem:[%s179 + $0x70] sm:$0xf] %v1168
      %1297 = vst [vmem:[%s179 + $0x74] sm:$0xf] %v1169
      %1298 = vst [vmem:[%s179 + $0x78] sm:$0xf] %v1170
      %1299 = vst [vmem:[%s179 + $0x7c] sm:$0xf] %v1171
      %1300 = vst [vmem:[%s179 + $0x80] sm:$0xf] %v1172
      %1301 = vst [vmem:[%s179 + $0x84] sm:$0xf] %v1173
      %1302 = vst [vmem:[%s179 + $0x88] sm:$0xf] %v1174
      %1303 = vst [vmem:[%s179 + $0x8c] sm:$0xf] %v1175
      %1304 = vst [vmem:[%s179 + $0x90] sm:$0xf] %v1176
      %1305 = vst [vmem:[%s179 + $0x94] sm:$0xf] %v1177
      %1306 = vst [vmem:[%s179 + $0x98] sm:$0xf] %v1178
      %1307 = vst [vmem:[%s179 + $0x9c] sm:$0xf] %v1179
      %1308 = vst [vmem:[%s179 + $0xa0] sm:$0xf] %v1180
      %1309 = vst [vmem:[%s179 + $0xa4] sm:$0xf] %v1181
      %1310 = vst [vmem:[%s179 + $0xa8] sm:$0xf] %v1182
      %1311 = vst [vmem:[%s179 + $0xac] sm:$0xf] %v1183
      %1312 = vst [vmem:[%s179 + $0xb0] sm:$0xf] %v1184
      %1313 = vst [vmem:[%s179 + $0xb4] sm:$0xf] %v1185
      %1314 = vst [vmem:[%s179 + $0xb8] sm:$0xf] %v1186
      %1315 = vst [vmem:[%s179 + $0xbc] sm:$0xf] %v1187
      %1316 = vst [vmem:[%s179 + $0xc0] sm:$0xf] %v1188
      %1317 = vst [vmem:[%s179 + $0xc4] sm:$0xf] %v1189
      %1318 = vst [vmem:[%s179 + $0xc8] sm:$0xf] %v1190
      %1319 = vst [vmem:[%s179 + $0xcc] sm:$0xf] %v1191
      %1320 = vst [vmem:[%s179 + $0xd0] sm:$0xf] %v1192
      %1321 = vst [vmem:[%s179 + $0xd4] sm:$0xf] %v1193
      %1322 = vst [vmem:[%s179 + $0xd8] sm:$0xf] %v1194
      %1323 = vst [vmem:[%s179 + $0xdc] sm:$0xf] %v1195
      %1324 = vst [vmem:[%s179 + $0xe0] sm:$0xf] %v1196
      %1325 = vst [vmem:[%s179 + $0xe4] sm:$0xf] %v1197
      %1326 = vst [vmem:[%s179 + $0xe8] sm:$0xf] %v1198
      %1327 = vst [vmem:[%s179 + $0xec] sm:$0xf] %v1199
      %1328 = vst [vmem:[%s179 + $0xf0] sm:$0xf] %v1200
      %1329 = vst [vmem:[%s179 + $0xf4] sm:$0xf] %v1201
      %1330 = vst [vmem:[%s179 + $0xf8] sm:$0xf] %v1202
      %1331 = vst [vmem:[%s179 + $0xfc] sm:$0xf] %v1203
      %v1332 = vadd.f32 %v948, %v949
      %v1333 = vadd.f32 %v1332, %v950
      %v1334 = vadd.f32 %v1333, %v951
      %v1335 = vadd.f32 %v1334, %v952
      %v1336 = vadd.f32 %v1335, %v953
      %v1337 = vadd.f32 %v1336, %v954
      %v1338 = vadd.f32 %v1337, %v955
      %v1339 = vadd.f32 %v1338, %v956
      %v1340 = vadd.f32 %v1339, %v957
      %v1341 = vadd.f32 %v1340, %v958
      %v1342 = vadd.f32 %v1341, %v959
      %v1343 = vadd.f32 %v1342, %v960
      %v1344 = vadd.f32 %v1343, %v961
      %v1345 = vadd.f32 %v1344, %v962
      %v1346 = vadd.f32 %v1345, %v963
      %v1347 = vadd.f32 %v1346, %v964
      %v1348 = vadd.f32 %v1347, %v965
      %v1349 = vadd.f32 %v1348, %v966
      %v1350 = vadd.f32 %v1349, %v967
      %v1351 = vadd.f32 %v1350, %v968
      %v1352 = vadd.f32 %v1351, %v969
      %v1353 = vadd.f32 %v1352, %v970
      %v1354 = vadd.f32 %v1353, %v971
      %v1355 = vadd.f32 %v1354, %v972
      %v1356 = vadd.f32 %v1355, %v973
      %v1357 = vadd.f32 %v1356, %v974
      %v1358 = vadd.f32 %v1357, %v975
      %v1359 = vadd.f32 %v1358, %v976
      %v1360 = vadd.f32 %v1359, %v977
      %v1361 = vadd.f32 %v1360, %v978
      %v1362 = vadd.f32 %v1361, %v979
      %v1363 = vadd.f32 %v1362, %v980
      %v1364 = vadd.f32 %v1363, %v981
      %v1365 = vadd.f32 %v1364, %v982
      %v1366 = vadd.f32 %v1365, %v983
      %v1367 = vadd.f32 %v1366, %v984
      %v1368 = vadd.f32 %v1367, %v985
      %v1369 = vadd.f32 %v1368, %v986
      %v1370 = vadd.f32 %v1369, %v987
      %v1371 = vadd.f32 %v1370, %v988
      %v1372 = vadd.f32 %v1371, %v989
      %v1373 = vadd.f32 %v1372, %v990
      %v1374 = vadd.f32 %v1373, %v991
      %v1375 = vadd.f32 %v1374, %v992
      %v1376 = vadd.f32 %v1375, %v993
      %v1377 = vadd.f32 %v1376, %v994
      %v1378 = vadd.f32 %v1377, %v995
      %v1379 = vadd.f32 %v1378, %v996
      %v1380 = vadd.f32 %v1379, %v997
      %v1381 = vadd.f32 %v1380, %v998
      %v1382 = vadd.f32 %v1381, %v999
      %v1383 = vadd.f32 %v1382, %v1000
      %v1384 = vadd.f32 %v1383, %v1001
      %v1385 = vadd.f32 %v1384, %v1002
      %v1386 = vadd.f32 %v1385, %v1003
      %v1387 = vadd.f32 %v1386, %v1004
      %v1388 = vadd.f32 %v1387, %v1005
      %v1389 = vadd.f32 %v1388, %v1006
      %v1390 = vadd.f32 %v1389, %v1007
      %v1391 = vadd.f32 %v1390, %v1008
      %v1392 = vadd.f32 %v1391, %v1009
      %v1393 = vadd.f32 %v1392, %v1010
      %v1394 = vadd.f32 %v1393, %v1011
      %v1395 = vrot.slane %v1394, 4
      %v1396 = vadd.f32 %v1394, %v1395
      %v1397 = vrot.slane %v1396, 2
      %v1398 = vadd.f32 %v1396, %v1397
      %v1399 = vrot.slane %v1398, 1
      %v1400 = vadd.f32 %v1398, %v1399
      %1401 = vst [vmem:[%s184] sm:$0x1] %v1400
      %v1402 = vmul.f32 %v948, %v948
      %v1403 = vmul.f32 %v949, %v949
      %v1404 = vmul.f32 %v950, %v950
      %v1405 = vmul.f32 %v951, %v951
      %v1406 = vmul.f32 %v952, %v952
      %v1407 = vmul.f32 %v953, %v953
      %v1408 = vmul.f32 %v954, %v954
      %v1409 = vmul.f32 %v955, %v955
      %v1410 = vmul.f32 %v956, %v956
      %v1411 = vmul.f32 %v957, %v957
      %v1412 = vmul.f32 %v958, %v958
      %v1413 = vmul.f32 %v959, %v959
      %v1414 = vmul.f32 %v960, %v960
      %v1415 = vmul.f32 %v961, %v961
      %v1416 = vmul.f32 %v962, %v962
      %v1417 = vmul.f32 %v963, %v963
      %v1418 = vmul.f32 %v964, %v964
      %v1419 = vmul.f32 %v965, %v965
      %v1420 = vmul.f32 %v966, %v966
      %v1421 = vmul.f32 %v967, %v967
      %v1422 = vmul.f32 %v968, %v968
      %v1423 = vmul.f32 %v969, %v969
      %v1424 = vmul.f32 %v970, %v970
      %v1425 = vmul.f32 %v971, %v971
      %v1426 = vmul.f32 %v972, %v972
      %v1427 = vmul.f32 %v973, %v973
      %v1428 = vmul.f32 %v974, %v974
      %v1429 = vmul.f32 %v975, %v975
      %v1430 = vmul.f32 %v976, %v976
      %v1431 = vmul.f32 %v977, %v977
      %v1432 = vmul.f32 %v978, %v978
      %v1433 = vmul.f32 %v979, %v979
      %v1434 = vmul.f32 %v980, %v980
      %v1435 = vmul.f32 %v981, %v981
      %v1436 = vmul.f32 %v982, %v982
      %v1437 = vmul.f32 %v983, %v983
      %v1438 = vmul.f32 %v984, %v984
      %v1439 = vmul.f32 %v985, %v985
      %v1440 = vmul.f32 %v986, %v986
      %v1441 = vmul.f32 %v987, %v987
      %v1442 = vmul.f32 %v988, %v988
      %v1443 = vmul.f32 %v989, %v989
      %v1444 = vmul.f32 %v990, %v990
      %v1445 = vmul.f32 %v991, %v991
      %v1446 = vmul.f32 %v992, %v992
      %v1447 = vmul.f32 %v993, %v993
      %v1448 = vmul.f32 %v994, %v994
      %v1449 = vmul.f32 %v995, %v995
      %v1450 = vmul.f32 %v996, %v996
      %v1451 = vmul.f32 %v997, %v997
      %v1452 = vmul.f32 %v998, %v998
      %v1453 = vmul.f32 %v999, %v999
      %v1454 = vmul.f32 %v1000, %v1000
      %v1455 = vmul.f32 %v1001, %v1001
      %v1456 = vmul.f32 %v1002, %v1002
      %v1457 = vmul.f32 %v1003, %v1003
      %v1458 = vmul.f32 %v1004, %v1004
      %v1459 = vmul.f32 %v1005, %v1005
      %v1460 = vmul.f32 %v1006, %v1006
      %v1461 = vmul.f32 %v1007, %v1007
      %v1462 = vmul.f32 %v1008, %v1008
      %v1463 = vmul.f32 %v1009, %v1009
      %v1464 = vmul.f32 %v1010, %v1010
      %v1465 = vmul.f32 %v1011, %v1011
      %v1466 = vadd.f32 %v1402, %v1403
      %v1467 = vadd.f32 %v1466, %v1404
      %v1468 = vadd.f32 %v1467, %v1405
      %v1469 = vadd.f32 %v1468, %v1406
      %v1470 = vadd.f32 %v1469, %v1407
      %v1471 = vadd.f32 %v1470, %v1408
      %v1472 = vadd.f32 %v1471, %v1409
      %v1473 = vadd.f32 %v1472, %v1410
      %v1474 = vadd.f32 %v1473, %v1411
      %v1475 = vadd.f32 %v1474, %v1412
      %v1476 = vadd.f32 %v1475, %v1413
      %v1477 = vadd.f32 %v1476, %v1414
      %v1478 = vadd.f32 %v1477, %v1415
      %v1479 = vadd.f32 %v1478, %v1416
      %v1480 = vadd.f32 %v1479, %v1417
      %v1481 = vadd.f32 %v1480, %v1418
      %v1482 = vadd.f32 %v1481, %v1419
      %v1483 = vadd.f32 %v1482, %v1420
      %v1484 = vadd.f32 %v1483, %v1421
      %v1485 = vadd.f32 %v1484, %v1422
      %v1486 = vadd.f32 %v1485, %v1423
      %v1487 = vadd.f32 %v1486, %v1424
      %v1488 = vadd.f32 %v1487, %v1425
      %v1489 = vadd.f32 %v1488, %v1426
      %v1490 = vadd.f32 %v1489, %v1427
      %v1491 = vadd.f32 %v1490, %v1428
      %v1492 = vadd.f32 %v1491, %v1429
      %v1493 = vadd.f32 %v1492, %v1430
      %v1494 = vadd.f32 %v1493, %v1431
      %v1495 = vadd.f32 %v1494, %v1432
      %v1496 = vadd.f32 %v1495, %v1433
      %v1497 = vadd.f32 %v1496, %v1434
      %v1498 = vadd.f32 %v1497, %v1435
      %v1499 = vadd.f32 %v1498, %v1436
      %v1500 = vadd.f32 %v1499, %v1437
      %v1501 = vadd.f32 %v1500, %v1438
      %v1502 = vadd.f32 %v1501, %v1439
      %v1503 = vadd.f32 %v1502, %v1440
      %v1504 = vadd.f32 %v1503, %v1441
      %v1505 = vadd.f32 %v1504, %v1442
      %v1506 = vadd.f32 %v1505, %v1443
      %v1507 = vadd.f32 %v1506, %v1444
      %v1508 = vadd.f32 %v1507, %v1445
      %v1509 = vadd.f32 %v1508, %v1446
      %v1510 = vadd.f32 %v1509, %v1447
      %v1511 = vadd.f32 %v1510, %v1448
      %v1512 = vadd.f32 %v1511, %v1449
      %v1513 = vadd.f32 %v1512, %v1450
      %v1514 = vadd.f32 %v1513, %v1451
      %v1515 = vadd.f32 %v1514, %v1452
      %v1516 = vadd.f32 %v1515, %v1453
      %v1517 = vadd.f32 %v1516, %v1454
      %v1518 = vadd.f32 %v1517, %v1455
      %v1519 = vadd.f32 %v1518, %v1456
      %v1520 = vadd.f32 %v1519, %v1457
      %v1521 = vadd.f32 %v1520, %v1458
      %v1522 = vadd.f32 %v1521, %v1459
      %v1523 = vadd.f32 %v1522, %v1460
      %v1524 = vadd.f32 %v1523, %v1461
      %v1525 = vadd.f32 %v1524, %v1462
      %v1526 = vadd.f32 %v1525, %v1463
      %v1527 = vadd.f32 %v1526, %v1464
      %v1528 = vadd.f32 %v1527, %v1465
      %v1529 = vrot.slane %v1528, 4
      %v1530 = vadd.f32 %v1528, %v1529
      %v1531 = vrot.slane %v1530, 2
      %v1532 = vadd.f32 %v1530, %v1531
      %v1533 = vrot.slane %v1532, 1
      %v1534 = vadd.f32 %v1532, %v1533
      %1535 = vst [vmem:[%s184 + $0x1] sm:$0x1] %v1534
      %s1536 = smul.u32 64, %s15
      %p1537 = scmp.lt.s32.totalorder %s1536, 127
      %s1538 = scalar_select %p1537, %s1536, 127
      %s1539 = smul.addr %s1538, 4
      %s1540 = scalar_lea.vmem %s2, %s1539
      %p1541 = scmp.lt.s32.totalorder %s15, 1
      %s1542 = scalar_select %p1541, %s15, 1
      %s1543 = smul.addr %s1542, 2
      %s1544 = scalar_lea.vmem %s3, %s1543
      // Predicated region
      $region29: #{resblock_forward.6} parent=27 // pred_check
        %p1545 = pneg %p80
      $region30: #{resblock_forward.6} parent=27 // pred_check_branch
        %1547 = sbr.rel (%p1545) target = $region32
      $region31: #{resblock_forward.6} parent=27 // pred_region
        %s1548 = smul.u32 64, %s15
      $region32: #{resblock_forward.6} parent=27 // pred_fallthru
        _
      // Predicated region
      $region33: #{resblock_forward.6} parent=27 // pred_check
        %p1549 = pneg %p106
      $region34: #{resblock_forward.6} parent=27 // pred_check_branch
        %1551 = sbr.rel (%p1549) target = $region36
      $region35: #{resblock_forward.6} parent=27 // pred_region
        _
      $region36: #{resblock_forward.6} parent=27 // pred_fallthru
        _
    $region28: #{resblock_forward.6} parent=5 // pred_fallthru
      _
    %p1552 = scmp.le.s32.totalorder 2, %s10
    // Predicated region
    $region37: #{resblock_forward.6} parent=5 // pred_check
      %p1553 = pneg %p1552
    $region38: #{resblock_forward.6} parent=5 // pred_check_branch
      %1555 = sbr.rel (%p1553) target = $region40
    $region39: #{resblock_forward.6} parent=5 // pred_region
      %s1556 = ssub.s32 %s10, 2
      // Predicated region
      $region41: #{resblock_forward.6} parent=39 // pred_check
        %p1557 = pneg %p86
      $region42: #{resblock_forward.6} parent=39 // pred_check_branch
        %1559 = sbr.rel (%p1557) target = $region44
      $region43: #{resblock_forward.6} parent=39 // pred_region
        %s1560 = smul.u32 64, %s16
        %p1561 = scmp.lt.s32.totalorder %s1560, 127
        %s1562 = scalar_select %p1561, %s1560, 127
        %s1563 = smul.addr %s1562, 4
        %s1564 = scalar_lea.vmem %s2, %s1563
      $region44: #{resblock_forward.6} parent=39 // pred_fallthru
        _
      // Predicated region
      $region45: #{resblock_forward.6} parent=39 // pred_check
        %p1565 = pneg %p112
      $region46: #{resblock_forward.6} parent=39 // pred_check_branch
        %1567 = sbr.rel (%p1565) target = $region48
      $region47: #{resblock_forward.6} parent=39 // pred_region
        %p1568 = scmp.lt.s32.totalorder %s16, 1
        %s1569 = scalar_select %p1568, %s16, 1
        %s1570 = smul.addr %s1569, 2
        %s1571 = scalar_lea.vmem %s3, %s1570
      $region48: #{resblock_forward.6} parent=39 // pred_fallthru
        _
    $region40: #{resblock_forward.6} parent=5 // pred_fallthru
      _
  $region6: #{resblock_forward.6} parent=0 // loop_footer
    %s14 = sadd.s32 1, %s10
  $region7: #{resblock_forward.6} parent=0 // loop_footer_branch
    %9 = sbr.rel target = $region3
  $region8: #{resblock_forward.6} parent=0 // loop_exit
    _

// kernel: resblock_forward.9
$region0: #{resblock_forward.9}
  #allocation0 [shape = 'u32[]', space=smem, size = 0x4, offset = 0x4, fixed_abs, tag = 'smem constant byte address 0x4 - core index']
  #allocation1 [shape = 'u32[144,128]{1,0:T(1,128)}', space=vmem, size = 0x12000, scoped, tag = 'internal scratch']
  %s0 = inlined_call_operand.vmem [shape: bf16[1024,80], index: 0, kind: input, shape index: {}]
  %s1 = inlined_call_operand.vmem [shape: bf16[80,128], index: 1, kind: input, shape index: {}]
  %s2 = inlined_call_operand.vmem [shape: bf16[1024,128], index: 2, kind: output, shape index: {0}]
  %s3 = inlined_call_operand.vmem [shape: f32[2,2,128], index: 3, kind: output, shape index: {1}]
  %4 = xla_tuple %s2, %s3
  %s5 = sld [smem:[#allocation0]]
  $region49: #{resblock_forward.9} parent=0
    _
  %s7 = ssub.s32 1, %s5
  %s8 = scalar_select 0, %s7, %s5
  loop: start=0, step=1, limit=4
  $region2: #{resblock_forward.9} parent=0 // loop_pre_header
    _
  $region3: #{resblock_forward.9} parent=0 // loop_header
    %s10 = sphi 0, %s14
    %p11 = scmp.ge.s32.totalorder %s10, 4
    %s20 = sphi 0, %s22
    %s23 = sphi 0, %s20
    %s24 = sphi 0, %s23
    %s40 = sphi 0, %s24
    %s44 = sphi 0, %s44
    %s46 = sphi 0, %s44
    %s47 = sphi 0, %s46
    %s61 = sphi 0, %s47
    %s67 = sphi 0, %s69
    %s70 = sphi 0, %s67
    %s71 = sphi 0, %s70
    %s87 = sphi 0, %s71
    %s93 = sphi 0, %s95
    %s96 = sphi 0, %s93
    %s97 = sphi 0, %s96
    %s113 = sphi 0, %s97
  $region4: #{resblock_forward.9} parent=0 // loop_header_branch
    %13 = sbr.rel (%p11) target = $region8
  $region5: #{resblock_forward.9} parent=0 // loop_body
    %s15 = ssub.s32 %s10, 1
    %s16 = ssub.s32 %s10, 2
    %s17 = sadd.s32 %s10, 1
    %s18 = ssub.s32 %s10, %s17
    %p19 = scmp.eq.s32.totalorder %s18, 0
    %s21 = sadd.s32 %s20, 1
    %s22 = scalar_select %p19, %s20, %s21
    %p25 = pneg %p19
    %p26 = scmp.eq.s32.totalorder %s10, 1
    %p27 = por %p25, %p26
    %p28 = scmp.ne.s32.totalorder %s20, %s23
    %p29 = scmp.eq.s32.totalorder %s10, 0
    %p30 = por %p28, %p29
    %p31 = scmp.ne.s32.totalorder %s20, %s23
    %p32 = scmp.eq.s32.totalorder %s15, 1
    %p33 = por %p31, %p32
    %p34 = scmp.ne.s32.totalorder %s23, %s24
    %p35 = scmp.eq.s32.totalorder %s15, 0
    %p36 = por %p34, %p35
    %p37 = scmp.ne.s32.totalorder %s23, %s24
    %p38 = scmp.eq.s32.totalorder %s16, 1
    %p39 = por %p37, %p38
    %p41 = scmp.ne.s32.totalorder %s24, %s40
    %p42 = scmp.eq.s32.totalorder %s16, 0
    %p43 = por %p41, %p42
    %s45 = sadd.s32 %s44, 1
    %p48 = scmp.eq.s32.totalorder %s10, 1
    %p49 = scmp.ne.s32.totalorder %s44, %s46
    %p50 = scmp.eq.s32.totalorder %s10, 0
    %p51 = por %p49, %p50
    %p52 = scmp.ne.s32.totalorder %s44, %s46
    %p53 = scmp.eq.s32.totalorder %s15, 1
    %p54 = por %p52, %p53
    %p55 = scmp.ne.s32.totalorder %s46, %s47
    %p56 = scmp.eq.s32.totalorder %s15, 0
    %p57 = por %p55, %p56
    %p58 = scmp.ne.s32.totalorder %s46, %s47
    %p59 = scmp.eq.s32.totalorder %s16, 1
    %p60 = por %p58, %p59
    %p62 = scmp.ne.s32.totalorder %s47, %s61
    %p63 = scmp.eq.s32.totalorder %s16, 0
    %p64 = por %p62, %p63
    %s65 = ssub.s32 %s10, %s17
    %p66 = scmp.eq.s32.totalorder %s65, 0
    %s68 = sadd.s32 %s67, 1
    %s69 = scalar_select %p66, %s67, %s68
    %p72 = pneg %p66
    %p73 = scmp.eq.s32.totalorder %s10, 1
    %p74 = por %p72, %p73
    %p75 = scmp.ne.s32.totalorder %s67, %s70
    %p76 = scmp.eq.s32.totalorder %s10, 0
    %p77 = por %p75, %p76
    %p78 = scmp.ne.s32.totalorder %s67, %s70
    %p79 = scmp.eq.s32.totalorder %s15, 1
    %p80 = por %p78, %p79
    %p81 = scmp.ne.s32.totalorder %s70, %s71
    %p82 = scmp.eq.s32.totalorder %s15, 0
    %p83 = por %p81, %p82
    %p84 = scmp.ne.s32.totalorder %s70, %s71
    %p85 = scmp.eq.s32.totalorder %s16, 1
    %p86 = por %p84, %p85
    %p88 = scmp.ne.s32.totalorder %s71, %s87
    %p89 = scmp.eq.s32.totalorder %s16, 0
    %p90 = por %p88, %p89
    %s91 = ssub.s32 %s10, %s17
    %p92 = scmp.eq.s32.totalorder %s91, 0
    %s94 = sadd.s32 %s93, 1
    %s95 = scalar_select %p92, %s93, %s94
    %p98 = pneg %p92
    %p99 = scmp.eq.s32.totalorder %s10, 1
    %p100 = por %p98, %p99
    %p101 = scmp.ne.s32.totalorder %s93, %s96
    %p102 = scmp.eq.s32.totalorder %s10, 0
    %p103 = por %p101, %p102
    %p104 = scmp.ne.s32.totalorder %s93, %s96
    %p105 = scmp.eq.s32.totalorder %s15, 1
    %p106 = por %p104, %p105
    %p107 = scmp.ne.s32.totalorder %s96, %s97
    %p108 = scmp.eq.s32.totalorder %s15, 0
    %p109 = por %p107, %p108
    %p110 = scmp.ne.s32.totalorder %s96, %s97
    %p111 = scmp.eq.s32.totalorder %s16, 1
    %p112 = por %p110, %p111
    %p114 = scmp.ne.s32.totalorder %s97, %s113
    %p115 = scmp.eq.s32.totalorder %s16, 0
    %p116 = por %p114, %p115
    %p117 = scmp.le.s32.totalorder 1, %s10
    %p118 = scmp.lt.s32.totalorder %s10, 3
    %p119 = pnand %p117, %p118
    %p120 = pneg %p119
    // Predicated region
    $region9: #{resblock_forward.9} parent=5 // pred_check
      _
    $region10: #{resblock_forward.9} parent=5 // pred_check_branch
      %122 = sbr.rel (%p119) target = $region12
    $region11: #{resblock_forward.9} parent=5 // pred_region
      %s123 = ssub.s32 %s10, 1
      // Predicated region
      $region13: #{resblock_forward.9} parent=11 // pred_check
        %p124 = pneg %p57
      $region14: #{resblock_forward.9} parent=11 // pred_check_branch
        %126 = sbr.rel (%p124) target = $region16
      $region15: #{resblock_forward.9} parent=11 // pred_region
        _
      $region16: #{resblock_forward.9} parent=11 // pred_fallthru
        _
    $region12: #{resblock_forward.9} parent=5 // pred_fallthru
      _
    %p127 = scmp.lt.s32.totalorder %s10, 2
    // Predicated region
    $region17: #{resblock_forward.9} parent=5 // pred_check
      %p128 = pneg %p127
    $region18: #{resblock_forward.9} parent=5 // pred_check_branch
      %130 = sbr.rel (%p128) target = $region20
    $region19: #{resblock_forward.9} parent=5 // pred_region
      // Predicated region
      $region21: #{resblock_forward.9} parent=19 // pred_check
        %p131 = pneg %p30
      $region22: #{resblock_forward.9} parent=19 // pred_check_branch
        %133 = sbr.rel (%p131) target = $region24
      $region23: #{resblock_forward.9} parent=19 // pred_region
        %s134 = smul.u32 64, %s10
        %p135 = scmp.lt.s32.totalorder %s134, 127
        %s136 = scalar_select %p135, %s134, 127
        %s137 = smul.addr %s136, 4
        %s138 = scalar_lea.vmem %s0, %s137
        %s139 = smul.u32 64, %s10
      $region24: #{resblock_forward.9} parent=19 // pred_fallthru
        _
    $region20: #{resblock_forward.9} parent=5 // pred_fallthru
      _
    %p140 = scmp.le.s32.totalorder 1, %s10
    %p141 = scmp.lt.s32.totalorder %s10, 3
    %p142 = pnand %p140, %p141
    %p143 = pneg %p142
    // Predicated region
    $region25: #{resblock_forward.9} parent=5 // pred_check
      _
    $region26: #{resblock_forward.9} parent=5 // pred_check_branch
      %145 = sbr.rel (%p142) target = $region28
    $region27: #{resblock_forward.9} parent=5 // pred_region
      %s146 = ssub.s32 %s10, 1
      %s147 = smul.u32 64, %s15
      %p148 = scmp.lt.s32.totalorder %s147, 127
      %s149 = scalar_select %p148, %s147, 127
      %s150 = smul.addr %s149, 4
      %s151 = scalar_lea.vmem %s0, %s150
      %p152 = pneg %p36
      %p153 = pneg %p33
      %p154 = pneg %p57
      %p155 = pneg %p54
      %p156 = pneg %p83
      %p157 = pneg %p80
      %s158 = smul.u32 64, %s15
      %p159 = scmp.lt.s32.totalorder %s158, 127
      %s160 = scalar_select %p159, %s158, 127
      %s161 = smul.addr %s160, 4
      %s162 = scalar_lea.vmem %s2, %s161
      %p163 = pneg %p109
      %p164 = pneg %p106
      %p165 = scmp.lt.s32.totalorder %s15, 1
      %s166 = scalar_select %p165, %s15, 1
      %s167 = smul.addr %s166, 2
      %s168 = scalar_lea.vmem %s3, %s167
      %s169 = smul.u32 64, %s15
      %p170 = scmp.lt.s32.totalorder %s169, 127
      %s171 = scalar_select %p170, %s169, 127
      %s172 = smul.addr %s171, 4
      %s173 = scalar_lea.vmem %s0, %s172
      %s174 = smul.u32 64, %s15
      %s175 = smul.u32 64, %s15
      %p176 = scmp.lt.s32.totalorder %s175, 127
      %s177 = scalar_select %p176, %s175, 127
      %s178 = smul.addr %s177, 4
      %s179 = scalar_lea.vmem %s2, %s178
      %s180 = smul.u32 64, %s15
      %p181 = scmp.lt.s32.totalorder %s15, 1
      %s182 = scalar_select %p181, %s15, 1
      %s183 = smul.addr %s182, 2
      %s184 = scalar_lea.vmem %s3, %s183
      %v186 = vld [vmem:[%s173] sm:$0xf]
      %v187 = vld [vmem:[%s173 + $0x4] sm:$0xf]
      %v188 = vld [vmem:[%s173 + $0x8] sm:$0xf]
      %v189 = vld [vmem:[%s173 + $0xc] sm:$0xf]
      %v190 = vld [vmem:[%s173 + $0x10] sm:$0xf]
      %v191 = vld [vmem:[%s173 + $0x14] sm:$0xf]
      %v192 = vld [vmem:[%s173 + $0x18] sm:$0xf]
      %v193 = vld [vmem:[%s173 + $0x1c] sm:$0xf]
      %v194 = vld [vmem:[%s173 + $0x20] sm:$0xf]
      %v195 = vld [vmem:[%s173 + $0x24] sm:$0xf]
      %v196 = vld [vmem:[%s173 + $0x28] sm:$0xf]
      %v197 = vld [vmem:[%s173 + $0x2c] sm:$0xf]
      %v198 = vld [vmem:[%s173 + $0x30] sm:$0xf]
      %v199 = vld [vmem:[%s173 + $0x34] sm:$0xf]
      %v200 = vld [vmem:[%s173 + $0x38] sm:$0xf]
      %v201 = vld [vmem:[%s173 + $0x3c] sm:$0xf]
      %v202 = vld [vmem:[%s173 + $0x40] sm:$0xf]
      %v203 = vld [vmem:[%s173 + $0x44] sm:$0xf]
      %v204 = vld [vmem:[%s173 + $0x48] sm:$0xf]
      %v205 = vld [vmem:[%s173 + $0x4c] sm:$0xf]
      %v206 = vld [vmem:[%s173 + $0x50] sm:$0xf]
      %v207 = vld [vmem:[%s173 + $0x54] sm:$0xf]
      %v208 = vld [vmem:[%s173 + $0x58] sm:$0xf]
      %v209 = vld [vmem:[%s173 + $0x5c] sm:$0xf]
      %v210 = vld [vmem:[%s173 + $0x60] sm:$0xf]
      %v211 = vld [vmem:[%s173 + $0x64] sm:$0xf]
      %v212 = vld [vmem:[%s173 + $0x68] sm:$0xf]
      %v213 = vld [vmem:[%s173 + $0x6c] sm:$0xf]
      %v214 = vld [vmem:[%s173 + $0x70] sm:$0xf]
      %v215 = vld [vmem:[%s173 + $0x74] sm:$0xf]
      %v216 = vld [vmem:[%s173 + $0x78] sm:$0xf]
      %v217 = vld [vmem:[%s173 + $0x7c] sm:$0xf]
      %v218 = vld [vmem:[%s173 + $0x80] sm:$0xf]
      %v219 = vld [vmem:[%s173 + $0x84] sm:$0xf]
      %v220 = vld [vmem:[%s173 + $0x88] sm:$0xf]
      %v221 = vld [vmem:[%s173 + $0x8c] sm:$0xf]
      %v222 = vld [vmem:[%s173 + $0x90] sm:$0xf]
      %v223 = vld [vmem:[%s173 + $0x94] sm:$0xf]
      %v224 = vld [vmem:[%s173 + $0x98] sm:$0xf]
      %v225 = vld [vmem:[%s173 + $0x9c] sm:$0xf]
      %v226 = vld [vmem:[%s173 + $0xa0] sm:$0xf]
      %v227 = vld [vmem:[%s173 + $0xa4] sm:$0xf]
      %v228 = vld [vmem:[%s173 + $0xa8] sm:$0xf]
      %v229 = vld [vmem:[%s173 + $0xac] sm:$0xf]
      %v230 = vld [vmem:[%s173 + $0xb0] sm:$0xf]
      %v231 = vld [vmem:[%s173 + $0xb4] sm:$0xf]
      %v232 = vld [vmem:[%s173 + $0xb8] sm:$0xf]
      %v233 = vld [vmem:[%s173 + $0xbc] sm:$0xf]
      %v234 = vld [vmem:[%s173 + $0xc0] sm:$0xf]
      %v235 = vld [vmem:[%s173 + $0xc4] sm:$0xf]
      %v236 = vld [vmem:[%s173 + $0xc8] sm:$0xf]
      %v237 = vld [vmem:[%s173 + $0xcc] sm:$0xf]
      %v238 = vld [vmem:[%s173 + $0xd0] sm:$0xf]
      %v239 = vld [vmem:[%s173 + $0xd4] sm:$0xf]
      %v240 = vld [vmem:[%s173 + $0xd8] sm:$0xf]
      %v241 = vld [vmem:[%s173 + $0xdc] sm:$0xf]
      %v242 = vld [vmem:[%s173 + $0xe0] sm:$0xf]
      %v243 = vld [vmem:[%s173 + $0xe4] sm:$0xf]
      %v244 = vld [vmem:[%s173 + $0xe8] sm:$0xf]
      %v245 = vld [vmem:[%s173 + $0xec] sm:$0xf]
      %v246 = vld [vmem:[%s173 + $0xf0] sm:$0xf]
      %v247 = vld [vmem:[%s173 + $0xf4] sm:$0xf]
      %v248 = vld [vmem:[%s173 + $0xf8] sm:$0xf]
      %v249 = vld [vmem:[%s173 + $0xfc] sm:$0xf]
      %v250 = vld [vmem:[%s1] sm:$0xf]
      %v251 = vld [vmem:[%s1 + $0x4] sm:$0xf]
      %v252 = vld [vmem:[%s1 + $0x8] sm:$0xf]
      %v253 = vld [vmem:[%s1 + $0xc] sm:$0xf]
      %v254 = vld [vmem:[%s1 + $0x10] sm:$0xf]
      %v255 = vld [vmem:[%s1 + $0x14] sm:$0xf]
      %v256 = vld [vmem:[%s1 + $0x18] sm:$0xf]
      %v257 = vld [vmem:[%s1 + $0x1c] sm:$0xf]
      %v258 = vld [vmem:[%s1 + $0x20] sm:$0xf]
      %v259 = vld [vmem:[%s1 + $0x24] sm:$0xf]
      %v324 = vunpack.c.l.b16 %v186
      %v325 = vunpack.c.l.b16 %v187
      %v326 = vunpack.c.l.b16 %v188
      %v327 = vunpack.c.l.b16 %v189
      %v328 = vunpack.c.l.b16 %v190
      %v329 = vunpack.c.l.b16 %v191
      %v330 = vunpack.c.l.b16 %v192
      %v331 = vunpack.c.l.b16 %v193
      %v332 = vunpack.c.l.b16 %v194
      %v333 = vunpack.c.l.b16 %v195
      %v334 = vunpack.c.l.b16 %v196
      %v335 = vunpack.c.l.b16 %v197
      %v336 = vunpack.c.l.b16 %v198
      %v337 = vunpack.c.l.b16 %v199
      %v338 = vunpack.c.l.b16 %v200
      %v339 = vunpack.c.l.b16 %v201
      %v340 = vunpack.c.l.b16 %v202
      %v341 = vunpack.c.l.b16 %v203
      %v342 = vunpack.c.l.b16 %v204
      %v343 = vunpack.c.l.b16 %v205
      %v344 = vunpack.c.l.b16 %v206
      %v345 = vunpack.c.l.b16 %v207
      %v346 = vunpack.c.l.b16 %v208
      %v347 = vunpack.c.l.b16 %v209
      %v348 = vunpack.c.l.b16 %v210
      %v349 = vunpack.c.l.b16 %v211
      %v350 = vunpack.c.l.b16 %v212
      %v351 = vunpack.c.l.b16 %v213
      %v352 = vunpack.c.l.b16 %v214
      %v353 = vunpack.c.l.b16 %v215
      %v354 = vunpack.c.l.b16 %v216
      %v355 = vunpack.c.l.b16 %v217
      %v356 = vunpack.c.l.b16 %v218
      %v357 = vunpack.c.l.b16 %v219
      %v358 = vunpack.c.l.b16 %v220
      %v359 = vunpack.c.l.b16 %v221
      %v360 = vunpack.c.l.b16 %v222
      %v361 = vunpack.c.l.b16 %v223
      %v362 = vunpack.c.l.b16 %v224
      %v363 = vunpack.c.l.b16 %v225
      %v364 = vunpack.c.l.b16 %v226
      %v365 = vunpack.c.l.b16 %v227
      %v366 = vunpack.c.l.b16 %v228
      %v367 = vunpack.c.l.b16 %v229
      %v368 = vunpack.c.l.b16 %v230
      %v369 = vunpack.c.l.b16 %v231
      %v370 = vunpack.c.l.b16 %v232
      %v371 = vunpack.c.l.b16 %v233
      %v372 = vunpack.c.l.b16 %v234
      %v373 = vunpack.c.l.b16 %v235
      %v374 = vunpack.c.l.b16 %v236
      %v375 = vunpack.c.l.b16 %v237
      %v376 = vunpack.c.l.b16 %v238
      %v377 = vunpack.c.l.b16 %v239
      %v378 = vunpack.c.l.b16 %v240
      %v379 = vunpack.c.l.b16 %v241
      %v380 = vunpack.c.l.b16 %v242
      %v381 = vunpack.c.l.b16 %v243
      %v382 = vunpack.c.l.b16 %v244
      %v383 = vunpack.c.l.b16 %v245
      %v384 = vunpack.c.l.b16 %v246
      %v385 = vunpack.c.l.b16 %v247
      %v386 = vunpack.c.l.b16 %v248
      %v387 = vunpack.c.l.b16 %v249
      %v388 = vpack.c.b16 %v325, %v324
      %v389 = vpack.c.b16 %v327, %v326
      %v390 = vpack.c.b16 %v329, %v328
      %v391 = vpack.c.b16 %v331, %v330
      %v392 = vpack.c.b16 %v333, %v332
      %v393 = vpack.c.b16 %v335, %v334
      %v394 = vpack.c.b16 %v337, %v336
      %v395 = vpack.c.b16 %v339, %v338
      %v396 = vpack.c.b16 %v341, %v340
      %v397 = vpack.c.b16 %v343, %v342
      %v398 = vpack.c.b16 %v345, %v344
      %v399 = vpack.c.b16 %v347, %v346
      %v400 = vpack.c.b16 %v349, %v348
      %v401 = vpack.c.b16 %v351, %v350
      %v402 = vpack.c.b16 %v353, %v352
      %v403 = vpack.c.b16 %v355, %v354
      %v404 = vpack.c.b16 %v357, %v356
      %v405 = vpack.c.b16 %v359, %v358
      %v406 = vpack.c.b16 %v361, %v360
      %v407 = vpack.c.b16 %v363, %v362
      %v408 = vpack.c.b16 %v365, %v364
      %v409 = vpack.c.b16 %v367, %v366
      %v410 = vpack.c.b16 %v369, %v368
      %v411 = vpack.c.b16 %v371, %v370
      %v412 = vpack.c.b16 %v373, %v372
      %v413 = vpack.c.b16 %v375, %v374
      %v414 = vpack.c.b16 %v377, %v376
      %v415 = vpack.c.b16 %v379, %v378
      %v416 = vpack.c.b16 %v381, %v380
      %v417 = vpack.c.b16 %v383, %v382
      %v418 = vpack.c.b16 %v385, %v384
      %v419 = vpack.c.b16 %v387, %v386
      %v430 = vunpack.c.l.b16 %v250
      %v431 = vunpack.c.l.b16 %v251
      %v432 = vunpack.c.l.b16 %v252
      %v433 = vunpack.c.l.b16 %v253
      %v434 = vunpack.c.l.b16 %v254
      %v435 = vunpack.c.l.b16 %v255
      %v436 = vunpack.c.l.b16 %v256
      %v437 = vunpack.c.l.b16 %v257
      %v438 = vunpack.c.l.b16 %v258
      %v439 = vunpack.c.l.b16 %v259
      %v440 = vpack.c.b16 %v431, %v430
      %v441 = vpack.c.b16 %v433, %v432
      %v442 = vpack.c.b16 %v435, %v434
      %v443 = vpack.c.b16 %v437, %v436
      %v444 = vpack.c.b16 %v439, %v438
      %vm450 = vcmask 654336
      %v452 = vsel %vm450, %v388, 0
      %v455 = vsel %vm450, %v389, 0
      %v458 = vsel %vm450, %v390, 0
      %v461 = vsel %vm450, %v391, 0
      %v464 = vsel %vm450, %v392, 0
      %v467 = vsel %vm450, %v393, 0
      %v470 = vsel %vm450, %v394, 0
      %v473 = vsel %vm450, %v395, 0
      %v476 = vsel %vm450, %v396, 0
      %v479 = vsel %vm450, %v397, 0
      %v482 = vsel %vm450, %v398, 0
      %v485 = vsel %vm450, %v399, 0
      %v488 = vsel %vm450, %v400, 0
      %v491 = vsel %vm450, %v401, 0
      %v494 = vsel %vm450, %v402, 0
      %v497 = vsel %vm450, %v403, 0
      %v500 = vsel %vm450, %v404, 0
      %v503 = vsel %vm450, %v405, 0
      %v506 = vsel %vm450, %v406, 0
      %v509 = vsel %vm450, %v407, 0
      %v512 = vsel %vm450, %v408, 0
      %v515 = vsel %vm450, %v409, 0
      %v518 = vsel %vm450, %v410, 0
      %v521 = vsel %vm450, %v411, 0
      %v524 = vsel %vm450, %v412, 0
      %v527 = vsel %vm450, %v413, 0
      %v530 = vsel %vm450, %v414, 0
      %v533 = vsel %vm450, %v415, 0
      %v536 = vsel %vm450, %v416, 0
      %v539 = vsel %vm450, %v417, 0
      %v542 = vsel %vm450, %v418, 0
      %v545 = vsel %vm450, %v419, 0
      %547 = vmatprep.subr.bf16.mxu0 0
      %548 = vmatpush1.bf16.msra.mxu0 %v440
      %549 = vmatprep.subr.bf16.mxu0 0
      %550 = vmatpush1.bf16.msra.mxu0 %v441
      %551 = vmatprep.subr.bf16.mxu0 0
      %552 = vmatpush1.bf16.msra.mxu0 %v442
      %553 = vmatprep.subr.bf16.mxu0 0
      %554 = vmatpush1.bf16.msra.mxu0 %v443
      %555 = vmatprep.subr.bf16.mxu0 0
      %556 = vmatpush1.bf16.msra.mxu0 %v444
      %557 = vmatprep.subr.bf16.mxu0 0
      %558 = vmatpush1.bf16.msra.mxu0 0
      %559 = vmatprep.subr.bf16.mxu0 0
      %560 = vmatpush1.bf16.msra.mxu0 0
      %561 = vmatprep.subr.bf16.mxu0 0
      %562 = vmatpush1.bf16.msra.mxu0 0
      %563 = vmatprep.subr.bf16.mxu0 0
      %564 = vmatpush1.bf16.msra.mxu0 0
      %565 = vmatprep.subr.bf16.mxu0 0
      %566 = vmatpush1.bf16.msra.mxu0 0
      %567 = vmatprep.subr.bf16.mxu0 0
      %568 = vmatpush1.bf16.msra.mxu0 0
      %569 = vmatprep.subr.bf16.mxu0 0
      %570 = vmatpush1.bf16.msra.mxu0 0
      %571 = vmatprep.subr.bf16.mxu0 0
      %572 = vmatpush1.bf16.msra.mxu0 0
      %573 = vmatprep.subr.bf16.mxu0 0
      %574 = vmatpush1.bf16.msra.mxu0 0
      %575 = vmatprep.subr.bf16.mxu0 0
      %576 = vmatpush1.bf16.msra.mxu0 0
      %577 = vmatprep.subr.bf16.mxu0 0
      %578 = vmatpush1.bf16.msra.mxu0 0
      %579 = vmatprep.mubr.bf16.mxu0 0
      %580 = vmatmul.mubr.bf16.gmra.mrb[0].mxu0 %v452
      %v581 = vpop.f32.mrb[0].mxu0
      %v582 = vadd.f32 0.0, %v581
      %v583 = vpop.f32.mrb[0].mxu0
      %v584 = vpop.f32.mrb[0].mxu0
      %v585 = vadd.f32 0.0, %v584
      %v586 = vpop.f32.mrb[0].mxu0
      %587 = vmatprep.mubr.bf16.mxu0 0
      %588 = vmatmul.mubr.bf16.gmra.mrb[0].mxu0 %v455
      %v589 = vpop.f32.mrb[0].mxu0
      %v590 = vadd.f32 0.0, %v589
      %v591 = vpop.f32.mrb[0].mxu0
      %v592 = vpop.f32.mrb[0].mxu0
      %v593 = vadd.f32 0.0, %v592
      %v594 = vpop.f32.mrb[0].mxu0
      %595 = vmatprep.mubr.bf16.mxu0 0
      %596 = vmatmul.mubr.bf16.gmra.mrb[0].mxu0 %v458
      %v597 = vpop.f32.mrb[0].mxu0
      %v598 = vadd.f32 0.0, %v597
      %v599 = vpop.f32.mrb[0].mxu0
      %v600 = vpop.f32.mrb[0].mxu0
      %v601 = vadd.f32 0.0, %v600
      %v602 = vpop.f32.mrb[0].mxu0
      %603 = vmatprep.mubr.bf16.mxu0 0
      %604 = vmatmul.mubr.bf16.gmra.mrb[0].mxu0 %v461
      %v605 = vpop.f32.mrb[0].mxu0
      %v606 = vadd.f32 0.0, %v605
      %v607 = vpop.f32.mrb[0].mxu0
      %v608 = vpop.f32.mrb[0].mxu0
      %v609 = vadd.f32 0.0, %v608
      %v610 = vpop.f32.mrb[0].mxu0
      %611 = vmatprep.mubr.bf16.mxu0 0
      %612 = vmatmul.mubr.bf16.gmra.mrb[0].mxu0 %v464
      %v613 = vpop.f32.mrb[0].mxu0
      %v614 = vadd.f32 0.0, %v613
      %v615 = vpop.f32.mrb[0].mxu0
      %v616 = vpop.f32.mrb[0].mxu0
      %v617 = vadd.f32 0.0, %v616
      %v618 = vpop.f32.mrb[0].mxu0
      %619 = vmatprep.mubr.bf16.mxu0 0
      %620 = vmatmul.mubr.bf16.gmra.mrb[0].mxu0 %v467
      %v621 = vpop.f32.mrb[0].mxu0
      %v622 = vadd.f32 0.0, %v621
      %v623 = vpop.f32.mrb[0].mxu0
      %v624 = vpop.f32.mrb[0].mxu0
      %v625 = vadd.f32 0.0, %v624
      %v626 = vpop.f32.mrb[0].mxu0
      %627 = vmatprep.mubr.bf16.mxu0 0
      %628 = vmatmul.mubr.bf16.gmra.mrb[0].mxu0 %v470
      %v629 = vpop.f32.mrb[0].mxu0
      %v630 = vadd.f32 0.0, %v629
      %v631 = vpop.f32.mrb[0].mxu0
      %v632 = vpop.f32.mrb[0].mxu0
      %v633 = vadd.f32 0.0, %v632
      %v634 = vpop.f32.mrb[0].mxu0
      %635 = vmatprep.mubr.bf16.mxu0 0
      %636 = vmatmul.mubr.bf16.gmra.mrb[0].mxu0 %v473
      %v637 = vpop.f32.mrb[0].mxu0
      %v638 = vadd.f32 0.0, %v637
      %v639 = vpop.f32.mrb[0].mxu0
      %v640 = vpop.f32.mrb[0].mxu0
      %v641 = vadd.f32 0.0, %v640
      %v642 = vpop.f32.mrb[0].mxu0
      %643 = vmatprep.mubr.bf16.mxu0 0
      %644 = vmatmul.mubr.bf16.gmra.mrb[0].mxu0 %v476
      %v645 = vpop.f32.mrb[0].mxu0
      %v646 = vadd.f32 0.0, %v645
      %v647 = vpop.f32.mrb[0].mxu0
      %v648 = vpop.f32.mrb[0].mxu0
      %v649 = vadd.f32 0.0, %v648
      %v650 = vpop.f32.mrb[0].mxu0
      %651 = vmatprep.mubr.bf16.mxu0 0
      %652 = vmatmul.mubr.bf16.gmra.mrb[0].mxu0 %v479
      %v653 = vpop.f32.mrb[0].mxu0
      %v654 = vadd.f32 0.0, %v653
      %v655 = vpop.f32.mrb[0].mxu0
      %v656 = vpop.f32.mrb[0].mxu0
      %v657 = vadd.f32 0.0, %v656
      %v658 = vpop.f32.mrb[0].mxu0
      %659 = vmatprep.mubr.bf16.mxu0 0
      %660 = vmatmul.mubr.bf16.gmra.mrb[0].mxu0 %v482
      %v661 = vpop.f32.mrb[0].mxu0
      %v662 = vadd.f32 0.0, %v661
      %v663 = vpop.f32.mrb[0].mxu0
      %v664 = vpop.f32.mrb[0].mxu0
      %v665 = vadd.f32 0.0, %v664
      %v666 = vpop.f32.mrb[0].mxu0
      %667 = vmatprep.mubr.bf16.mxu0 0
      %668 = vmatmul.mubr.bf16.gmra.mrb[0].mxu0 %v485
      %v669 = vpop.f32.mrb[0].mxu0
      %v670 = vadd.f32 0.0, %v669
      %v671 = vpop.f32.mrb[0].mxu0
      %v672 = vpop.f32.mrb[0].mxu0
      %v673 = vadd.f32 0.0, %v672
      %v674 = vpop.f32.mrb[0].mxu0
      %675 = vmatprep.mubr.bf16.mxu0 0
      %676 = vmatmul.mubr.bf16.gmra.mrb[0].mxu0 %v488
      %v677 = vpop.f32.mrb[0].mxu0
      %v678 = vadd.f32 0.0, %v677
      %v679 = vpop.f32.mrb[0].mxu0
      %v680 = vpop.f32.mrb[0].mxu0
      %v681 = vadd.f32 0.0, %v680
      %v682 = vpop.f32.mrb[0].mxu0
      %683 = vmatprep.mubr.bf16.mxu0 0
      %684 = vmatmul.mubr.bf16.gmra.mrb[0].mxu0 %v491
      %v685 = vpop.f32.mrb[0].mxu0
      %v686 = vadd.f32 0.0, %v685
      %v687 = vpop.f32.mrb[0].mxu0
      %v688 = vpop.f32.mrb[0].mxu0
      %v689 = vadd.f32 0.0, %v688
      %v690 = vpop.f32.mrb[0].mxu0
      %691 = vmatprep.mubr.bf16.mxu0 0
      %692 = vmatmul.mubr.bf16.gmra.mrb[0].mxu0 %v494
      %v693 = vpop.f32.mrb[0].mxu0
      %v694 = vadd.f32 0.0, %v693
      %v695 = vpop.f32.mrb[0].mxu0
      %v696 = vpop.f32.mrb[0].mxu0
      %v697 = vadd.f32 0.0, %v696
      %v698 = vpop.f32.mrb[0].mxu0
      %699 = vmatprep.mubr.bf16.mxu0 0
      %700 = vmatmul.mubr.bf16.gmra.mrb[0].mxu0 %v497
      %v701 = vpop.f32.mrb[0].mxu0
      %v702 = vadd.f32 0.0, %v701
      %v703 = vpop.f32.mrb[0].mxu0
      %v704 = vpop.f32.mrb[0].mxu0
      %v705 = vadd.f32 0.0, %v704
      %v706 = vpop.f32.mrb[0].mxu0
      %707 = vmatprep.mubr.bf16.mxu0 0
      %708 = vmatmul.mubr.bf16.gmra.mrb[0].mxu0 %v500
      %v709 = vpop.f32.mrb[0].mxu0
      %v710 = vadd.f32 0.0, %v709
      %v711 = vpop.f32.mrb[0].mxu0
      %v712 = vpop.f32.mrb[0].mxu0
      %v713 = vadd.f32 0.0, %v712
      %v714 = vpop.f32.mrb[0].mxu0
      %715 = vmatprep.mubr.bf16.mxu0 0
      %716 = vmatmul.mubr.bf16.gmra.mrb[0].mxu0 %v503
      %v717 = vpop.f32.mrb[0].mxu0
      %v718 = vadd.f32 0.0, %v717
      %v719 = vpop.f32.mrb[0].mxu0
      %v720 = vpop.f32.mrb[0].mxu0
      %v721 = vadd.f32 0.0, %v720
      %v722 = vpop.f32.mrb[0].mxu0
      %723 = vmatprep.mubr.bf16.mxu0 0
      %724 = vmatmul.mubr.bf16.gmra.mrb[0].mxu0 %v506
      %v725 = vpop.f32.mrb[0].mxu0
      %v726 = vadd.f32 0.0, %v725
      %v727 = vpop.f32.mrb[0].mxu0
      %v728 = vpop.f32.mrb[0].mxu0
      %v729 = vadd.f32 0.0, %v728
      %v730 = vpop.f32.mrb[0].mxu0
      %731 = vmatprep.mubr.bf16.mxu0 0
      %732 = vmatmul.mubr.bf16.gmra.mrb[0].mxu0 %v509
      %v733 = vpop.f32.mrb[0].mxu0
      %v734 = vadd.f32 0.0, %v733
      %v735 = vpop.f32.mrb[0].mxu0
      %v736 = vpop.f32.mrb[0].mxu0
      %v737 = vadd.f32 0.0, %v736
      %v738 = vpop.f32.mrb[0].mxu0
      %739 = vmatprep.mubr.bf16.mxu0 0
      %740 = vmatmul.mubr.bf16.gmra.mrb[0].mxu0 %v512
      %v741 = vpop.f32.mrb[0].mxu0
      %v742 = vadd.f32 0.0, %v741
      %v743 = vpop.f32.mrb[0].mxu0
      %v744 = vpop.f32.mrb[0].mxu0
      %v745 = vadd.f32 0.0, %v744
      %v746 = vpop.f32.mrb[0].mxu0
      %747 = vmatprep.mubr.bf16.mxu0 0
      %748 = vmatmul.mubr.bf16.gmra.mrb[0].mxu0 %v515
      %v749 = vpop.f32.mrb[0].mxu0
      %v750 = vadd.f32 0.0, %v749
      %v751 = vpop.f32.mrb[0].mxu0
      %v752 = vpop.f32.mrb[0].mxu0
      %v753 = vadd.f32 0.0, %v752
      %v754 = vpop.f32.mrb[0].mxu0
      %755 = vmatprep.mubr.bf16.mxu0 0
      %756 = vmatmul.mubr.bf16.gmra.mrb[0].mxu0 %v518
      %v757 = vpop.f32.mrb[0].mxu0
      %v758 = vadd.f32 0.0, %v757
      %v759 = vpop.f32.mrb[0].mxu0
      %v760 = vpop.f32.mrb[0].mxu0
      %v761 = vadd.f32 0.0, %v760
      %v762 = vpop.f32.mrb[0].mxu0
      %763 = vmatprep.mubr.bf16.mxu0 0
      %764 = vmatmul.mubr.bf16.gmra.mrb[0].mxu0 %v521
      %v765 = vpop.f32.mrb[0].mxu0
      %v766 = vadd.f32 0.0, %v765
      %v767 = vpop.f32.mrb[0].mxu0
      %v768 = vpop.f32.mrb[0].mxu0
      %v769 = vadd.f32 0.0, %v768
      %v770 = vpop.f32.mrb[0].mxu0
      %771 = vmatprep.mubr.bf16.mxu0 0
      %772 = vmatmul.mubr.bf16.gmra.mrb[0].mxu0 %v524
      %v773 = vpop.f32.mrb[0].mxu0
      %v774 = vadd.f32 0.0, %v773
      %v775 = vpop.f32.mrb[0].mxu0
      %v776 = vpop.f32.mrb[0].mxu0
      %v777 = vadd.f32 0.0, %v776
      %v778 = vpop.f32.mrb[0].mxu0
      %779 = vmatprep.mubr.bf16.mxu0 0
      %780 = vmatmul.mubr.bf16.gmra.mrb[0].mxu0 %v527
      %v781 = vpop.f32.mrb[0].mxu0
      %v782 = vadd.f32 0.0, %v781
      %v783 = vpop.f32.mrb[0].mxu0
      %v784 = vpop.f32.mrb[0].mxu0
      %v785 = vadd.f32 0.0, %v784
      %v786 = vpop.f32.mrb[0].mxu0
      %787 = vmatprep.mubr.bf16.mxu0 0
      %788 = vmatmul.mubr.bf16.gmra.mrb[0].mxu0 %v530
      %v789 = vpop.f32.mrb[0].mxu0
      %v790 = vadd.f32 0.0, %v789
      %v791 = vpop.f32.mrb[0].mxu0
      %v792 = vpop.f32.mrb[0].mxu0
      %v793 = vadd.f32 0.0, %v792
      %v794 = vpop.f32.mrb[0].mxu0
      %795 = vmatprep.mubr.bf16.mxu0 0
      %796 = vmatmul.mubr.bf16.gmra.mrb[0].mxu0 %v533
      %v797 = vpop.f32.mrb[0].mxu0
      %v798 = vadd.f32 0.0, %v797
      %v799 = vpop.f32.mrb[0].mxu0
      %v800 = vpop.f32.mrb[0].mxu0
      %v801 = vadd.f32 0.0, %v800
      %v802 = vpop.f32.mrb[0].mxu0
      %803 = vmatprep.mubr.bf16.mxu0 0
      %804 = vmatmul.mubr.bf16.gmra.mrb[0].mxu0 %v536
      %v805 = vpop.f32.mrb[0].mxu0
      %v806 = vadd.f32 0.0, %v805
      %v807 = vpop.f32.mrb[0].mxu0
      %v808 = vpop.f32.mrb[0].mxu0
      %v809 = vadd.f32 0.0, %v808
      %v810 = vpop.f32.mrb[0].mxu0
      %811 = vmatprep.mubr.bf16.mxu0 0
      %812 = vmatmul.mubr.bf16.gmra.mrb[0].mxu0 %v539
      %v813 = vpop.f32.mrb[0].mxu0
      %v814 = vadd.f32 0.0, %v813
      %v815 = vpop.f32.mrb[0].mxu0
      %v816 = vpop.f32.mrb[0].mxu0
      %v817 = vadd.f32 0.0, %v816
      %v818 = vpop.f32.mrb[0].mxu0
      %819 = vmatprep.mubr.bf16.mxu0 0
      %820 = vmatmul.mubr.bf16.gmra.mrb[0].mxu0 %v542
      %v821 = vpop.f32.mrb[0].mxu0
      %v822 = vadd.f32 0.0, %v821
      %v823 = vpop.f32.mrb[0].mxu0
      %v824 = vpop.f32.mrb[0].mxu0
      %v825 = vadd.f32 0.0, %v824
      %v826 = vpop.f32.mrb[0].mxu0
      %827 = vmatprep.mubr.bf16.mxu0 0
      %828 = vmatmul.mubr.bf16.gmra.mrb[0].mxu0 %v545
      %v829 = vpop.f32.mrb[0].mxu0
      %v830 = vadd.f32 0.0, %v829
      %v831 = vpop.f32.mrb[0].mxu0
      %v832 = vpop.f32.mrb[0].mxu0
      %v833 = vadd.f32 0.0, %v832
      %v834 = vpop.f32.mrb[0].mxu0
      %835 = vdwg.mxu0
      %vm836 = vcmp.ge.f32.partialorder %v582, 0.0
      %vm837 = vcmp.ge.f32.partialorder %v585, 0.0
      %vm838 = vcmp.ge.f32.partialorder %v590, 0.0
      %vm839 = vcmp.ge.f32.partialorder %v593, 0.0
      %vm840 = vcmp.ge.f32.partialorder %v598, 0.0
      %vm841 = vcmp.ge.f32.partialorder %v601, 0.0
      %vm842 = vcmp.ge.f32.partialorder %v606, 0.0
      %vm843 = vcmp.ge.f32.partialorder %v609, 0.0
      %vm844 = vcmp.ge.f32.partialorder %v614, 0.0
      %vm845 = vcmp.ge.f32.partialorder %v617, 0.0
      %vm846 = vcmp.ge.f32.partialorder %v622, 0.0
      %vm847 = vcmp.ge.f32.partialorder %v625, 0.0
      %vm848 = vcmp.ge.f32.partialorder %v630, 0.0
      %vm849 = vcmp.ge.f32.partialorder %v633, 0.0
      %vm850 = vcmp.ge.f32.partialorder %v638, 0.0
      %vm851 = vcmp.ge.f32.partialorder %v641, 0.0
      %vm852 = vcmp.ge.f32.partialorder %v646, 0.0
      %vm853 = vcmp.ge.f32.partialorder %v649, 0.0
      %vm854 = vcmp.ge.f32.partialorder %v654, 0.0
      %vm855 = vcmp.ge.f32.partialorder %v657, 0.0
      %vm856 = vcmp.ge.f32.partialorder %v662, 0.0
      %vm857 = vcmp.ge.f32.partialorder %v665, 0.0
      %vm858 = vcmp.ge.f32.partialorder %v670, 0.0
      %vm859 = vcmp.ge.f32.partialorder %v673, 0.0
      %vm860 = vcmp.ge.f32.partialorder %v678, 0.0
      %vm861 = vcmp.ge.f32.partialorder %v681, 0.0
      %vm862 = vcmp.ge.f32.partialorder %v686, 0.0
      %vm863 = vcmp.ge.f32.partialorder %v689, 0.0
      %vm864 = vcmp.ge.f32.partialorder %v694, 0.0
      %vm865 = vcmp.ge.f32.partialorder %v697, 0.0
      %vm866 = vcmp.ge.f32.partialorder %v702, 0.0
      %vm867 = vcmp.ge.f32.partialorder %v705, 0.0
      %vm868 = vcmp.ge.f32.partialorder %v710, 0.0
      %vm869 = vcmp.ge.f32.partialorder %v713, 0.0
      %vm870 = vcmp.ge.f32.partialorder %v718, 0.0
      %vm871 = vcmp.ge.f32.partialorder %v721, 0.0
      %vm872 = vcmp.ge.f32.partialorder %v726, 0.0
      %vm873 = vcmp.ge.f32.partialorder %v729, 0.0
      %vm874 = vcmp.ge.f32.partialorder %v734, 0.0
      %vm875 = vcmp.ge.f32.partialorder %v737, 0.0
      %vm876 = vcmp.ge.f32.partialorder %v742, 0.0
      %vm877 = vcmp.ge.f32.partialorder %v745, 0.0
      %vm878 = vcmp.ge.f32.partialorder %v750, 0.0
      %vm879 = vcmp.ge.f32.partialorder %v753, 0.0
      %vm880 = vcmp.ge.f32.partialorder %v758, 0.0
      %vm881 = vcmp.ge.f32.partialorder %v761, 0.0
      %vm882 = vcmp.ge.f32.partialorder %v766, 0.0
      %vm883 = vcmp.ge.f32.partialorder %v769, 0.0
      %vm884 = vcmp.ge.f32.partialorder %v774, 0.0
      %vm885 = vcmp.ge.f32.partialorder %v777, 0.0
      %vm886 = vcmp.ge.f32.partialorder %v782, 0.0
      %vm887 = vcmp.ge.f32.partialorder %v785, 0.0
      %vm888 = vcmp.ge.f32.partialorder %v790, 0.0
      %vm889 = vcmp.ge.f32.partialorder %v793, 0.0
      %vm890 = vcmp.ge.f32.partialorder %v798, 0.0
      %vm891 = vcmp.ge.f32.partialorder %v801, 0.0
      %vm892 = vcmp.ge.f32.partialorder %v806, 0.0
      %vm893 = vcmp.ge.f32.partialorder %v809, 0.0
      %vm894 = vcmp.ge.f32.partialorder %v814, 0.0
      %vm895 = vcmp.ge.f32.partialorder %v817, 0.0
      %vm896 = vcmp.ge.f32.partialorder %v822, 0.0
      %vm897 = vcmp.ge.f32.partialorder %v825, 0.0
      %vm898 = vcmp.ge.f32.partialorder %v830, 0.0
      %vm899 = vcmp.ge.f32.partialorder %v833, 0.0
      %v900 = vmul.f32 %v582, 0.01
      %v901 = vmul.f32 %v585, 0.01
      %v902 = vmul.f32 %v590, 0.01
      %v903 = vmul.f32 %v593, 0.01
      %v904 = vmul.f32 %v598, 0.01
      %v905 = vmul.f32 %v601, 0.01
      %v906 = vmul.f32 %v606, 0.01
      %v907 = vmul.f32 %v609, 0.01
      %v908 = vmul.f32 %v614, 0.01
      %v909 = vmul.f32 %v617, 0.01
      %v910 = vmul.f32 %v622, 0.01
      %v911 = vmul.f32 %v625, 0.01
      %v912 = vmul.f32 %v630, 0.01
      %v913 = vmul.f32 %v633, 0.01
      %v914 = vmul.f32 %v638, 0.01
      %v915 = vmul.f32 %v641, 0.01
      %v916 = vmul.f32 %v646, 0.01
      %v917 = vmul.f32 %v649, 0.01
      %v918 = vmul.f32 %v654, 0.01
      %v919 = vmul.f32 %v657, 0.01
      %v920 = vmul.f32 %v662, 0.01
      %v921 = vmul.f32 %v665, 0.01
      %v922 = vmul.f32 %v670, 0.01
      %v923 = vmul.f32 %v673, 0.01
      %v924 = vmul.f32 %v678, 0.01
      %v925 = vmul.f32 %v681, 0.01
      %v926 = vmul.f32 %v686, 0.01
      %v927 = vmul.f32 %v689, 0.01
      %v928 = vmul.f32 %v694, 0.01
      %v929 = vmul.f32 %v697, 0.01
      %v930 = vmul.f32 %v702, 0.01
      %v931 = vmul.f32 %v705, 0.01
      %v932 = vmul.f32 %v710, 0.01
      %v933 = vmul.f32 %v713, 0.01
      %v934 = vmul.f32 %v718, 0.01
      %v935 = vmul.f32 %v721, 0.01
      %v936 = vmul.f32 %v726, 0.01
      %v937 = vmul.f32 %v729, 0.01
      %v938 = vmul.f32 %v734, 0.01
      %v939 = vmul.f32 %v737, 0.01
      %v940 = vmul.f32 %v742, 0.01
      %v941 = vmul.f32 %v745, 0.01
      %v942 = vmul.f32 %v750, 0.01
      %v943 = vmul.f32 %v753, 0.01
      %v944 = vmul.f32 %v758, 0.01
      %v945 = vmul.f32 %v761, 0.01
      %v946 = vmul.f32 %v766, 0.01
      %v947 = vmul.f32 %v769, 0.01
      %v948 = vmul.f32 %v774, 0.01
      %v949 = vmul.f32 %v777, 0.01
      %v950 = vmul.f32 %v782, 0.01
      %v951 = vmul.f32 %v785, 0.01
      %v952 = vmul.f32 %v790, 0.01
      %v953 = vmul.f32 %v793, 0.01
      %v954 = vmul.f32 %v798, 0.01
      %v955 = vmul.f32 %v801, 0.01
      %v956 = vmul.f32 %v806, 0.01
      %v957 = vmul.f32 %v809, 0.01
      %v958 = vmul.f32 %v814, 0.01
      %v959 = vmul.f32 %v817, 0.01
      %v960 = vmul.f32 %v822, 0.01
      %v961 = vmul.f32 %v825, 0.01
      %v962 = vmul.f32 %v830, 0.01
      %v963 = vmul.f32 %v833, 0.01
      %v964 = vsel %vm836, %v582, %v900
      %v965 = vsel %vm837, %v585, %v901
      %v966 = vsel %vm838, %v590, %v902
      %v967 = vsel %vm839, %v593, %v903
      %v968 = vsel %vm840, %v598, %v904
      %v969 = vsel %vm841, %v601, %v905
      %v970 = vsel %vm842, %v606, %v906
      %v971 = vsel %vm843, %v609, %v907
      %v972 = vsel %vm844, %v614, %v908
      %v973 = vsel %vm845, %v617, %v909
      %v974 = vsel %vm846, %v622, %v910
      %v975 = vsel %vm847, %v625, %v911
      %v976 = vsel %vm848, %v630, %v912
      %v977 = vsel %vm849, %v633, %v913
      %v978 = vsel %vm850, %v638, %v914
      %v979 = vsel %vm851, %v641, %v915
      %v980 = vsel %vm852, %v646, %v916
      %v981 = vsel %vm853, %v649, %v917
      %v982 = vsel %vm854, %v654, %v918
      %v983 = vsel %vm855, %v657, %v919
      %v984 = vsel %vm856, %v662, %v920
      %v985 = vsel %vm857, %v665, %v921
      %v986 = vsel %vm858, %v670, %v922
      %v987 = vsel %vm859, %v673, %v923
      %v988 = vsel %vm860, %v678, %v924
      %v989 = vsel %vm861, %v681, %v925
      %v990 = vsel %vm862, %v686, %v926
      %v991 = vsel %vm863, %v689, %v927
      %v992 = vsel %vm864, %v694, %v928
      %v993 = vsel %vm865, %v697, %v929
      %v994 = vsel %vm866, %v702, %v930
      %v995 = vsel %vm867, %v705, %v931
      %v996 = vsel %vm868, %v710, %v932
      %v997 = vsel %vm869, %v713, %v933
      %v998 = vsel %vm870, %v718, %v934
      %v999 = vsel %vm871, %v721, %v935
      %v1000 = vsel %vm872, %v726, %v936
      %v1001 = vsel %vm873, %v729, %v937
      %v1002 = vsel %vm874, %v734, %v938
      %v1003 = vsel %vm875, %v737, %v939
      %v1004 = vsel %vm876, %v742, %v940
      %v1005 = vsel %vm877, %v745, %v941
      %v1006 = vsel %vm878, %v750, %v942
      %v1007 = vsel %vm879, %v753, %v943
      %v1008 = vsel %vm880, %v758, %v944
      %v1009 = vsel %vm881, %v761, %v945
      %v1010 = vsel %vm882, %v766, %v946
      %v1011 = vsel %vm883, %v769, %v947
      %v1012 = vsel %vm884, %v774, %v948
      %v1013 = vsel %vm885, %v777, %v949
      %v1014 = vsel %vm886, %v782, %v950
      %v1015 = vsel %vm887, %v785, %v951
      %v1016 = vsel %vm888, %v790, %v952
      %v1017 = vsel %vm889, %v793, %v953
      %v1018 = vsel %vm890, %v798, %v954
      %v1019 = vsel %vm891, %v801, %v955
      %v1020 = vsel %vm892, %v806, %v956
      %v1021 = vsel %vm893, %v809, %v957
      %v1022 = vsel %vm894, %v814, %v958
      %v1023 = vsel %vm895, %v817, %v959
      %v1024 = vsel %vm896, %v822, %v960
      %v1025 = vsel %vm897, %v825, %v961
      %v1026 = vsel %vm898, %v830, %v962
      %v1027 = vsel %vm899, %v833, %v963
      %v1028 = vpack.c.bf16 %v965, %v964
      %v1029 = vpack.c.bf16 %v967, %v966
      %v1030 = vpack.c.bf16 %v969, %v968
      %v1031 = vpack.c.bf16 %v971, %v970
      %v1032 = vpack.c.bf16 %v973, %v972
      %v1033 = vpack.c.bf16 %v975, %v974
      %v1034 = vpack.c.bf16 %v977, %v976
      %v1035 = vpack.c.bf16 %v979, %v978
      %v1036 = vpack.c.bf16 %v981, %v980
      %v1037 = vpack.c.bf16 %v983, %v982
      %v1038 = vpack.c.bf16 %v985, %v984
      %v1039 = vpack.c.bf16 %v987, %v986
      %v1040 = vpack.c.bf16 %v989, %v988
      %v1041 = vpack.c.bf16 %v991, %v990
      %v1042 = vpack.c.bf16 %v993, %v992
      %v1043 = vpack.c.bf16 %v995, %v994
      %v1044 = vpack.c.bf16 %v997, %v996
      %v1045 = vpack.c.bf16 %v999, %v998
      %v1046 = vpack.c.bf16 %v1001, %v1000
      %v1047 = vpack.c.bf16 %v1003, %v1002
      %v1048 = vpack.c.bf16 %v1005, %v1004
      %v1049 = vpack.c.bf16 %v1007, %v1006
      %v1050 = vpack.c.bf16 %v1009, %v1008
      %v1051 = vpack.c.bf16 %v1011, %v1010
      %v1052 = vpack.c.bf16 %v1013, %v1012
      %v1053 = vpack.c.bf16 %v1015, %v1014
      %v1054 = vpack.c.bf16 %v1017, %v1016
      %v1055 = vpack.c.bf16 %v1019, %v1018
      %v1056 = vpack.c.bf16 %v1021, %v1020
      %v1057 = vpack.c.bf16 %v1023, %v1022
      %v1058 = vpack.c.bf16 %v1025, %v1024
      %v1059 = vpack.c.bf16 %v1027, %v1026
      %v1092 = vunpack.c.l.b16 %v1028
      %v1093 = vunpack.c.h.b16 %v1028
      %v1094 = vunpack.c.l.b16 %v1029
      %v1095 = vunpack.c.h.b16 %v1029
      %v1096 = vunpack.c.l.b16 %v1030
      %v1097 = vunpack.c.h.b16 %v1030
      %v1098 = vunpack.c.l.b16 %v1031
      %v1099 = vunpack.c.h.b16 %v1031
      %v1100 = vunpack.c.l.b16 %v1032
      %v1101 = vunpack.c.h.b16 %v1032
      %v1102 = vunpack.c.l.b16 %v1033
      %v1103 = vunpack.c.h.b16 %v1033
      %v1104 = vunpack.c.l.b16 %v1034
      %v1105 = vunpack.c.h.b16 %v1034
      %v1106 = vunpack.c.l.b16 %v1035
      %v1107 = vunpack.c.h.b16 %v1035
      %v1108 = vunpack.c.l.b16 %v1036
      %v1109 = vunpack.c.h.b16 %v1036
      %v1110 = vunpack.c.l.b16 %v1037
      %v1111 = vunpack.c.h.b16 %v1037
      %v1112 = vunpack.c.l.b16 %v1038
      %v1113 = vunpack.c.h.b16 %v1038
      %v1114 = vunpack.c.l.b16 %v1039
      %v1115 = vunpack.c.h.b16 %v1039
      %v1116 = vunpack.c.l.b16 %v1040
      %v1117 = vunpack.c.h.b16 %v1040
      %v1118 = vunpack.c.l.b16 %v1041
      %v1119 = vunpack.c.h.b16 %v1041
      %v1120 = vunpack.c.l.b16 %v1042
      %v1121 = vunpack.c.h.b16 %v1042
      %v1122 = vunpack.c.l.b16 %v1043
      %v1123 = vunpack.c.h.b16 %v1043
      %v1124 = vunpack.c.l.b16 %v1044
      %v1125 = vunpack.c.h.b16 %v1044
      %v1126 = vunpack.c.l.b16 %v1045
      %v1127 = vunpack.c.h.b16 %v1045
      %v1128 = vunpack.c.l.b16 %v1046
      %v1129 = vunpack.c.h.b16 %v1046
      %v1130 = vunpack.c.l.b16 %v1047
      %v1131 = vunpack.c.h.b16 %v1047
      %v1132 = vunpack.c.l.b16 %v1048
      %v1133 = vunpack.c.h.b16 %v1048
      %v1134 = vunpack.c.l.b16 %v1049
      %v1135 = vunpack.c.h.b16 %v1049
      %v1136 = vunpack.c.l.b16 %v1050
      %v1137 = vunpack.c.h.b16 %v1050
      %v1138 = vunpack.c.l.b16 %v1051
      %v1139 = vunpack.c.h.b16 %v1051
      %v1140 = vunpack.c.l.b16 %v1052
      %v1141 = vunpack.c.h.b16 %v1052
      %v1142 = vunpack.c.l.b16 %v1053
      %v1143 = vunpack.c.h.b16 %v1053
      %v1144 = vunpack.c.l.b16 %v1054
      %v1145 = vunpack.c.h.b16 %v1054
      %v1146 = vunpack.c.l.b16 %v1055
      %v1147 = vunpack.c.h.b16 %v1055
      %v1148 = vunpack.c.l.b16 %v1056
      %v1149 = vunpack.c.h.b16 %v1056
      %v1150 = vunpack.c.l.b16 %v1057
      %v1151 = vunpack.c.h.b16 %v1057
      %v1152 = vunpack.c.l.b16 %v1058
      %v1153 = vunpack.c.h.b16 %v1058
      %v1154 = vunpack.c.l.b16 %v1059
      %v1155 = vunpack.c.h.b16 %v1059
      %v1156 = vpack.c.b16 %v1092, %v1092
      %v1157 = vpack.c.b16 %v1093, %v1093
      %v1158 = vpack.c.b16 %v1094, %v1094
      %v1159 = vpack.c.b16 %v1095, %v1095
      %v1160 = vpack.c.b16 %v1096, %v1096
      %v1161 = vpack.c.b16 %v1097, %v1097
      %v1162 = vpack.c.b16 %v1098, %v1098
      %v1163 = vpack.c.b16 %v1099, %v1099
      %v1164 = vpack.c.b16 %v1100, %v1100
      %v1165 = vpack.c.b16 %v1101, %v1101
      %v1166 = vpack.c.b16 %v1102, %v1102
      %v1167 = vpack.c.b16 %v1103, %v1103
      %v1168 = vpack.c.b16 %v1104, %v1104
      %v1169 = vpack.c.b16 %v1105, %v1105
      %v1170 = vpack.c.b16 %v1106, %v1106
      %v1171 = vpack.c.b16 %v1107, %v1107
      %v1172 = vpack.c.b16 %v1108, %v1108
      %v1173 = vpack.c.b16 %v1109, %v1109
      %v1174 = vpack.c.b16 %v1110, %v1110
      %v1175 = vpack.c.b16 %v1111, %v1111
      %v1176 = vpack.c.b16 %v1112, %v1112
      %v1177 = vpack.c.b16 %v1113, %v1113
      %v1178 = vpack.c.b16 %v1114, %v1114
      %v1179 = vpack.c.b16 %v1115, %v1115
      %v1180 = vpack.c.b16 %v1116, %v1116
      %v1181 = vpack.c.b16 %v1117, %v1117
      %v1182 = vpack.c.b16 %v1118, %v1118
      %v1183 = vpack.c.b16 %v1119, %v1119
      %v1184 = vpack.c.b16 %v1120, %v1120
      %v1185 = vpack.c.b16 %v1121, %v1121
      %v1186 = vpack.c.b16 %v1122, %v1122
      %v1187 = vpack.c.b16 %v1123, %v1123
      %v1188 = vpack.c.b16 %v1124, %v1124
      %v1189 = vpack.c.b16 %v1125, %v1125
      %v1190 = vpack.c.b16 %v1126, %v1126
      %v1191 = vpack.c.b16 %v1127, %v1127
      %v1192 = vpack.c.b16 %v1128, %v1128
      %v1193 = vpack.c.b16 %v1129, %v1129
      %v1194 = vpack.c.b16 %v1130, %v1130
      %v1195 = vpack.c.b16 %v1131, %v1131
      %v1196 = vpack.c.b16 %v1132, %v1132
      %v1197 = vpack.c.b16 %v1133, %v1133
      %v1198 = vpack.c.b16 %v1134, %v1134
      %v1199 = vpack.c.b16 %v1135, %v1135
      %v1200 = vpack.c.b16 %v1136, %v1136
      %v1201 = vpack.c.b16 %v1137, %v1137
      %v1202 = vpack.c.b16 %v1138, %v1138
      %v1203 = vpack.c.b16 %v1139, %v1139
      %v1204 = vpack.c.b16 %v1140, %v1140
      %v1205 = vpack.c.b16 %v1141, %v1141
      %v1206 = vpack.c.b16 %v1142, %v1142
      %v1207 = vpack.c.b16 %v1143, %v1143
      %v1208 = vpack.c.b16 %v1144, %v1144
      %v1209 = vpack.c.b16 %v1145, %v1145
      %v1210 = vpack.c.b16 %v1146, %v1146
      %v1211 = vpack.c.b16 %v1147, %v1147
      %v1212 = vpack.c.b16 %v1148, %v1148
      %v1213 = vpack.c.b16 %v1149, %v1149
      %v1214 = vpack.c.b16 %v1150, %v1150
      %v1215 = vpack.c.b16 %v1151, %v1151
      %v1216 = vpack.c.b16 %v1152, %v1152
      %v1217 = vpack.c.b16 %v1153, %v1153
      %v1218 = vpack.c.b16 %v1154, %v1154
      %v1219 = vpack.c.b16 %v1155, %v1155
      %1284 = vst [vmem:[%s179] sm:$0xf] %v1156
      %1285 = vst [vmem:[%s179 + $0x4] sm:$0xf] %v1157
      %1286 = vst [vmem:[%s179 + $0x8] sm:$0xf] %v1158
      %1287 = vst [vmem:[%s179 + $0xc] sm:$0xf] %v1159
      %1288 = vst [vmem:[%s179 + $0x10] sm:$0xf] %v1160
      %1289 = vst [vmem:[%s179 + $0x14] sm:$0xf] %v1161
      %1290 = vst [vmem:[%s179 + $0x18] sm:$0xf] %v1162
      %1291 = vst [vmem:[%s179 + $0x1c] sm:$0xf] %v1163
      %1292 = vst [vmem:[%s179 + $0x20] sm:$0xf] %v1164
      %1293 = vst [vmem:[%s179 + $0x24] sm:$0xf] %v1165
      %1294 = vst [vmem:[%s179 + $0x28] sm:$0xf] %v1166
      %1295 = vst [vmem:[%s179 + $0x2c] sm:$0xf] %v1167
      %1296 = vst [vmem:[%s179 + $0x30] sm:$0xf] %v1168
      %1297 = vst [vmem:[%s179 + $0x34] sm:$0xf] %v1169
      %1298 = vst [vmem:[%s179 + $0x38] sm:$0xf] %v1170
      %1299 = vst [vmem:[%s179 + $0x3c] sm:$0xf] %v1171
      %1300 = vst [vmem:[%s179 + $0x40] sm:$0xf] %v1172
      %1301 = vst [vmem:[%s179 + $0x44] sm:$0xf] %v1173
      %1302 = vst [vmem:[%s179 + $0x48] sm:$0xf] %v1174
      %1303 = vst [vmem:[%s179 + $0x4c] sm:$0xf] %v1175
      %1304 = vst [vmem:[%s179 + $0x50] sm:$0xf] %v1176
      %1305 = vst [vmem:[%s179 + $0x54] sm:$0xf] %v1177
      %1306 = vst [vmem:[%s179 + $0x58] sm:$0xf] %v1178
      %1307 = vst [vmem:[%s179 + $0x5c] sm:$0xf] %v1179
      %1308 = vst [vmem:[%s179 + $0x60] sm:$0xf] %v1180
      %1309 = vst [vmem:[%s179 + $0x64] sm:$0xf] %v1181
      %1310 = vst [vmem:[%s179 + $0x68] sm:$0xf] %v1182
      %1311 = vst [vmem:[%s179 + $0x6c] sm:$0xf] %v1183
      %1312 = vst [vmem:[%s179 + $0x70] sm:$0xf] %v1184
      %1313 = vst [vmem:[%s179 + $0x74] sm:$0xf] %v1185
      %1314 = vst [vmem:[%s179 + $0x78] sm:$0xf] %v1186
      %1315 = vst [vmem:[%s179 + $0x7c] sm:$0xf] %v1187
      %1316 = vst [vmem:[%s179 + $0x80] sm:$0xf] %v1188
      %1317 = vst [vmem:[%s179 + $0x84] sm:$0xf] %v1189
      %1318 = vst [vmem:[%s179 + $0x88] sm:$0xf] %v1190
      %1319 = vst [vmem:[%s179 + $0x8c] sm:$0xf] %v1191
      %1320 = vst [vmem:[%s179 + $0x90] sm:$0xf] %v1192
      %1321 = vst [vmem:[%s179 + $0x94] sm:$0xf] %v1193
      %1322 = vst [vmem:[%s179 + $0x98] sm:$0xf] %v1194
      %1323 = vst [vmem:[%s179 + $0x9c] sm:$0xf] %v1195
      %1324 = vst [vmem:[%s179 + $0xa0] sm:$0xf] %v1196
      %1325 = vst [vmem:[%s179 + $0xa4] sm:$0xf] %v1197
      %1326 = vst [vmem:[%s179 + $0xa8] sm:$0xf] %v1198
      %1327 = vst [vmem:[%s179 + $0xac] sm:$0xf] %v1199
      %1328 = vst [vmem:[%s179 + $0xb0] sm:$0xf] %v1200
      %1329 = vst [vmem:[%s179 + $0xb4] sm:$0xf] %v1201
      %1330 = vst [vmem:[%s179 + $0xb8] sm:$0xf] %v1202
      %1331 = vst [vmem:[%s179 + $0xbc] sm:$0xf] %v1203
      %1332 = vst [vmem:[%s179 + $0xc0] sm:$0xf] %v1204
      %1333 = vst [vmem:[%s179 + $0xc4] sm:$0xf] %v1205
      %1334 = vst [vmem:[%s179 + $0xc8] sm:$0xf] %v1206
      %1335 = vst [vmem:[%s179 + $0xcc] sm:$0xf] %v1207
      %1336 = vst [vmem:[%s179 + $0xd0] sm:$0xf] %v1208
      %1337 = vst [vmem:[%s179 + $0xd4] sm:$0xf] %v1209
      %1338 = vst [vmem:[%s179 + $0xd8] sm:$0xf] %v1210
      %1339 = vst [vmem:[%s179 + $0xdc] sm:$0xf] %v1211
      %1340 = vst [vmem:[%s179 + $0xe0] sm:$0xf] %v1212
      %1341 = vst [vmem:[%s179 + $0xe4] sm:$0xf] %v1213
      %1342 = vst [vmem:[%s179 + $0xe8] sm:$0xf] %v1214
      %1343 = vst [vmem:[%s179 + $0xec] sm:$0xf] %v1215
      %1344 = vst [vmem:[%s179 + $0xf0] sm:$0xf] %v1216
      %1345 = vst [vmem:[%s179 + $0xf4] sm:$0xf] %v1217
      %1346 = vst [vmem:[%s179 + $0xf8] sm:$0xf] %v1218
      %1347 = vst [vmem:[%s179 + $0xfc] sm:$0xf] %v1219
      %v1348 = vadd.f32 %v964, %v965
      %v1349 = vadd.f32 %v1348, %v966
      %v1350 = vadd.f32 %v1349, %v967
      %v1351 = vadd.f32 %v1350, %v968
      %v1352 = vadd.f32 %v1351, %v969
      %v1353 = vadd.f32 %v1352, %v970
      %v1354 = vadd.f32 %v1353, %v971
      %v1355 = vadd.f32 %v1354, %v972
      %v1356 = vadd.f32 %v1355, %v973
      %v1357 = vadd.f32 %v1356, %v974
      %v1358 = vadd.f32 %v1357, %v975
      %v1359 = vadd.f32 %v1358, %v976
      %v1360 = vadd.f32 %v1359, %v977
      %v1361 = vadd.f32 %v1360, %v978
      %v1362 = vadd.f32 %v1361, %v979
      %v1363 = vadd.f32 %v1362, %v980
      %v1364 = vadd.f32 %v1363, %v981
      %v1365 = vadd.f32 %v1364, %v982
      %v1366 = vadd.f32 %v1365, %v983
      %v1367 = vadd.f32 %v1366, %v984
      %v1368 = vadd.f32 %v1367, %v985
      %v1369 = vadd.f32 %v1368, %v986
      %v1370 = vadd.f32 %v1369, %v987
      %v1371 = vadd.f32 %v1370, %v988
      %v1372 = vadd.f32 %v1371, %v989
      %v1373 = vadd.f32 %v1372, %v990
      %v1374 = vadd.f32 %v1373, %v991
      %v1375 = vadd.f32 %v1374, %v992
      %v1376 = vadd.f32 %v1375, %v993
      %v1377 = vadd.f32 %v1376, %v994
      %v1378 = vadd.f32 %v1377, %v995
      %v1379 = vadd.f32 %v1378, %v996
      %v1380 = vadd.f32 %v1379, %v997
      %v1381 = vadd.f32 %v1380, %v998
      %v1382 = vadd.f32 %v1381, %v999
      %v1383 = vadd.f32 %v1382, %v1000
      %v1384 = vadd.f32 %v1383, %v1001
      %v1385 = vadd.f32 %v1384, %v1002
      %v1386 = vadd.f32 %v1385, %v1003
      %v1387 = vadd.f32 %v1386, %v1004
      %v1388 = vadd.f32 %v1387, %v1005
      %v1389 = vadd.f32 %v1388, %v1006
      %v1390 = vadd.f32 %v1389, %v1007
      %v1391 = vadd.f32 %v1390, %v1008
      %v1392 = vadd.f32 %v1391, %v1009
      %v1393 = vadd.f32 %v1392, %v1010
      %v1394 = vadd.f32 %v1393, %v1011
      %v1395 = vadd.f32 %v1394, %v1012
      %v1396 = vadd.f32 %v1395, %v1013
      %v1397 = vadd.f32 %v1396, %v1014
      %v1398 = vadd.f32 %v1397, %v1015
      %v1399 = vadd.f32 %v1398, %v1016
      %v1400 = vadd.f32 %v1399, %v1017
      %v1401 = vadd.f32 %v1400, %v1018
      %v1402 = vadd.f32 %v1401, %v1019
      %v1403 = vadd.f32 %v1402, %v1020
      %v1404 = vadd.f32 %v1403, %v1021
      %v1405 = vadd.f32 %v1404, %v1022
      %v1406 = vadd.f32 %v1405, %v1023
      %v1407 = vadd.f32 %v1406, %v1024
      %v1408 = vadd.f32 %v1407, %v1025
      %v1409 = vadd.f32 %v1408, %v1026
      %v1410 = vadd.f32 %v1409, %v1027
      %v1411 = vrot.slane %v1410, 4
      %v1412 = vadd.f32 %v1410, %v1411
      %v1413 = vrot.slane %v1412, 2
      %v1414 = vadd.f32 %v1412, %v1413
      %v1415 = vrot.slane %v1414, 1
      %v1416 = vadd.f32 %v1414, %v1415
      %1417 = vst [vmem:[%s184] sm:$0x1] %v1416
      %v1418 = vmul.f32 %v964, %v964
      %v1419 = vmul.f32 %v965, %v965
      %v1420 = vmul.f32 %v966, %v966
      %v1421 = vmul.f32 %v967, %v967
      %v1422 = vmul.f32 %v968, %v968
      %v1423 = vmul.f32 %v969, %v969
      %v1424 = vmul.f32 %v970, %v970
      %v1425 = vmul.f32 %v971, %v971
      %v1426 = vmul.f32 %v972, %v972
      %v1427 = vmul.f32 %v973, %v973
      %v1428 = vmul.f32 %v974, %v974
      %v1429 = vmul.f32 %v975, %v975
      %v1430 = vmul.f32 %v976, %v976
      %v1431 = vmul.f32 %v977, %v977
      %v1432 = vmul.f32 %v978, %v978
      %v1433 = vmul.f32 %v979, %v979
      %v1434 = vmul.f32 %v980, %v980
      %v1435 = vmul.f32 %v981, %v981
      %v1436 = vmul.f32 %v982, %v982
      %v1437 = vmul.f32 %v983, %v983
      %v1438 = vmul.f32 %v984, %v984
      %v1439 = vmul.f32 %v985, %v985
      %v1440 = vmul.f32 %v986, %v986
      %v1441 = vmul.f32 %v987, %v987
      %v1442 = vmul.f32 %v988, %v988
      %v1443 = vmul.f32 %v989, %v989
      %v1444 = vmul.f32 %v990, %v990
      %v1445 = vmul.f32 %v991, %v991
      %v1446 = vmul.f32 %v992, %v992
      %v1447 = vmul.f32 %v993, %v993
      %v1448 = vmul.f32 %v994, %v994
      %v1449 = vmul.f32 %v995, %v995
      %v1450 = vmul.f32 %v996, %v996
      %v1451 = vmul.f32 %v997, %v997
      %v1452 = vmul.f32 %v998, %v998
      %v1453 = vmul.f32 %v999, %v999
      %v1454 = vmul.f32 %v1000, %v1000
      %v1455 = vmul.f32 %v1001, %v1001
      %v1456 = vmul.f32 %v1002, %v1002
      %v1457 = vmul.f32 %v1003, %v1003
      %v1458 = vmul.f32 %v1004, %v1004
      %v1459 = vmul.f32 %v1005, %v1005
      %v1460 = vmul.f32 %v1006, %v1006
      %v1461 = vmul.f32 %v1007, %v1007
      %v1462 = vmul.f32 %v1008, %v1008
      %v1463 = vmul.f32 %v1009, %v1009
      %v1464 = vmul.f32 %v1010, %v1010
      %v1465 = vmul.f32 %v1011, %v1011
      %v1466 = vmul.f32 %v1012, %v1012
      %v1467 = vmul.f32 %v1013, %v1013
      %v1468 = vmul.f32 %v1014, %v1014
      %v1469 = vmul.f32 %v1015, %v1015
      %v1470 = vmul.f32 %v1016, %v1016
      %v1471 = vmul.f32 %v1017, %v1017
      %v1472 = vmul.f32 %v1018, %v1018
      %v1473 = vmul.f32 %v1019, %v1019
      %v1474 = vmul.f32 %v1020, %v1020
      %v1475 = vmul.f32 %v1021, %v1021
      %v1476 = vmul.f32 %v1022, %v1022
      %v1477 = vmul.f32 %v1023, %v1023
      %v1478 = vmul.f32 %v1024, %v1024
      %v1479 = vmul.f32 %v1025, %v1025
      %v1480 = vmul.f32 %v1026, %v1026
      %v1481 = vmul.f32 %v1027, %v1027
      %v1482 = vadd.f32 %v1418, %v1419
      %v1483 = vadd.f32 %v1482, %v1420
      %v1484 = vadd.f32 %v1483, %v1421
      %v1485 = vadd.f32 %v1484, %v1422
      %v1486 = vadd.f32 %v1485, %v1423
      %v1487 = vadd.f32 %v1486, %v1424
      %v1488 = vadd.f32 %v1487, %v1425
      %v1489 = vadd.f32 %v1488, %v1426
      %v1490 = vadd.f32 %v1489, %v1427
      %v1491 = vadd.f32 %v1490, %v1428
      %v1492 = vadd.f32 %v1491, %v1429
      %v1493 = vadd.f32 %v1492, %v1430
      %v1494 = vadd.f32 %v1493, %v1431
      %v1495 = vadd.f32 %v1494, %v1432
      %v1496 = vadd.f32 %v1495, %v1433
      %v1497 = vadd.f32 %v1496, %v1434
      %v1498 = vadd.f32 %v1497, %v1435
      %v1499 = vadd.f32 %v1498, %v1436
      %v1500 = vadd.f32 %v1499, %v1437
      %v1501 = vadd.f32 %v1500, %v1438
      %v1502 = vadd.f32 %v1501, %v1439
      %v1503 = vadd.f32 %v1502, %v1440
      %v1504 = vadd.f32 %v1503, %v1441
      %v1505 = vadd.f32 %v1504, %v1442
      %v1506 = vadd.f32 %v1505, %v1443
      %v1507 = vadd.f32 %v1506, %v1444
      %v1508 = vadd.f32 %v1507, %v1445
      %v1509 = vadd.f32 %v1508, %v1446
      %v1510 = vadd.f32 %v1509, %v1447
      %v1511 = vadd.f32 %v1510, %v1448
      %v1512 = vadd.f32 %v1511, %v1449
      %v1513 = vadd.f32 %v1512, %v1450
      %v1514 = vadd.f32 %v1513, %v1451
      %v1515 = vadd.f32 %v1514, %v1452
      %v1516 = vadd.f32 %v1515, %v1453
      %v1517 = vadd.f32 %v1516, %v1454
      %v1518 = vadd.f32 %v1517, %v1455
      %v1519 = vadd.f32 %v1518, %v1456
      %v1520 = vadd.f32 %v1519, %v1457
      %v1521 = vadd.f32 %v1520, %v1458
      %v1522 = vadd.f32 %v1521, %v1459
      %v1523 = vadd.f32 %v1522, %v1460
      %v1524 = vadd.f32 %v1523, %v1461
      %v1525 = vadd.f32 %v1524, %v1462
      %v1526 = vadd.f32 %v1525, %v1463
      %v1527 = vadd.f32 %v1526, %v1464
      %v1528 = vadd.f32 %v1527, %v1465
      %v1529 = vadd.f32 %v1528, %v1466
      %v1530 = vadd.f32 %v1529, %v1467
      %v1531 = vadd.f32 %v1530, %v1468
      %v1532 = vadd.f32 %v1531, %v1469
      %v1533 = vadd.f32 %v1532, %v1470
      %v1534 = vadd.f32 %v1533, %v1471
      %v1535 = vadd.f32 %v1534, %v1472
      %v1536 = vadd.f32 %v1535, %v1473
      %v1537 = vadd.f32 %v1536, %v1474
      %v1538 = vadd.f32 %v1537, %v1475
      %v1539 = vadd.f32 %v1538, %v1476
      %v1540 = vadd.f32 %v1539, %v1477
      %v1541 = vadd.f32 %v1540, %v1478
      %v1542 = vadd.f32 %v1541, %v1479
      %v1543 = vadd.f32 %v1542, %v1480
      %v1544 = vadd.f32 %v1543, %v1481
      %v1545 = vrot.slane %v1544, 4
      %v1546 = vadd.f32 %v1544, %v1545
      %v1547 = vrot.slane %v1546, 2
      %v1548 = vadd.f32 %v1546, %v1547
      %v1549 = vrot.slane %v1548, 1
      %v1550 = vadd.f32 %v1548, %v1549
      %1551 = vst [vmem:[%s184 + $0x1] sm:$0x1] %v1550
      %s1552 = smul.u32 64, %s15
      %p1553 = scmp.lt.s32.totalorder %s1552, 127
      %s1554 = scalar_select %p1553, %s1552, 127
      %s1555 = smul.addr %s1554, 4
      %s1556 = scalar_lea.vmem %s2, %s1555
      %p1557 = scmp.lt.s32.totalorder %s15, 1
      %s1558 = scalar_select %p1557, %s15, 1
      %s1559 = smul.addr %s1558, 2
      %s1560 = scalar_lea.vmem %s3, %s1559
      // Predicated region
      $region29: #{resblock_forward.9} parent=27 // pred_check
        %p1561 = pneg %p80
      $region30: #{resblock_forward.9} parent=27 // pred_check_branch
        %1563 = sbr.rel (%p1561) target = $region32
      $region31: #{resblock_forward.9} parent=27 // pred_region
        %s1564 = smul.u32 64, %s15
      $region32: #{resblock_forward.9} parent=27 // pred_fallthru
        _
      // Predicated region
      $region33: #{resblock_forward.9} parent=27 // pred_check
        %p1565 = pneg %p106
      $region34: #{resblock_forward.9} parent=27 // pred_check_branch
        %1567 = sbr.rel (%p1565) target = $region36
      $region35: #{resblock_forward.9} parent=27 // pred_region
        _
      $region36: #{resblock_forward.9} parent=27 // pred_fallthru
        _
    $region28: #{resblock_forward.9} parent=5 // pred_fallthru
      _
    %p1568 = scmp.le.s32.totalorder 2, %s10
    // Predicated region
    $region37: #{resblock_forward.9} parent=5 // pred_check
      %p1569 = pneg %p1568
    $region38: #{resblock_forward.9} parent=5 // pred_check_branch
      %1571 = sbr.rel (%p1569) target = $region40
    $region39: #{resblock_forward.9} parent=5 // pred_region
      %s1572 = ssub.s32 %s10, 2
      // Predicated region
      $region41: #{resblock_forward.9} parent=39 // pred_check
        %p1573 = pneg %p86
      $region42: #{resblock_forward.9} parent=39 // pred_check_branch
        %1575 = sbr.rel (%p1573) target = $region44
      $region43: #{resblock_forward.9} parent=39 // pred_region
        %s1576 = smul.u32 64, %s16
        %p1577 = scmp.lt.s32.totalorder %s1576, 127
        %s1578 = scalar_select %p1577, %s1576, 127
        %s1579 = smul.addr %s1578, 4
        %s1580 = scalar_lea.vmem %s2, %s1579
      $region44: #{resblock_forward.9} parent=39 // pred_fallthru
        _
      // Predicated region
      $region45: #{resblock_forward.9} parent=39 // pred_check
        %p1581 = pneg %p112
      $region46: #{resblock_forward.9} parent=39 // pred_check_branch
        %1583 = sbr.rel (%p1581) target = $region48
      $region47: #{resblock_forward.9} parent=39 // pred_region
        %p1584 = scmp.lt.s32.totalorder %s16, 1
        %s1585 = scalar_select %p1584, %s16, 1
        %s1586 = smul.addr %s1585, 2
        %s1587 = scalar_lea.vmem %s3, %s1586
      $region48: #{resblock_forward.9} parent=39 // pred_fallthru
        _
    $region40: #{resblock_forward.9} parent=5 // pred_fallthru
      _
  $region6: #{resblock_forward.9} parent=0 // loop_footer
    %s14 = sadd.s32 1, %s10
  $region7: #{resblock_forward.9} parent=0 // loop_footer_branch
    %9 = sbr.rel target = $region3
  $region8: #{resblock_forward.9} parent=0 // loop_exit
    _

// kernel: resblock_forward.10
$region0: #{resblock_forward.10}
  #allocation0 [shape = 'u32[]', space=smem, size = 0x4, offset = 0x4, fixed_abs, tag = 'smem constant byte address 0x4 - core index']
  #allocation1 [shape = 'u32[144,128]{1,0:T(1,128)}', space=vmem, size = 0x12000, scoped, tag = 'internal scratch']
  %s0 = inlined_call_operand.vmem [shape: bf16[1024,128], index: 0, kind: input, shape index: {}]
  %s1 = inlined_call_operand.vmem [shape: bf16[1024,128], index: 1, kind: input, shape index: {}]
  %s2 = inlined_call_operand.vmem [shape: f32[1,128], index: 2, kind: input, shape index: {}]
  %s3 = inlined_call_operand.vmem [shape: f32[1,128], index: 3, kind: input, shape index: {}]
  %s4 = inlined_call_operand.vmem [shape: f32[1,128], index: 4, kind: input, shape index: {}]
  %s5 = inlined_call_operand.vmem [shape: f32[1,128], index: 5, kind: input, shape index: {}]
  %s6 = inlined_call_operand.vmem [shape: f32[1024,128], index: 6, kind: output, shape index: {}]
  %s7 = sld [smem:[#allocation0]]
  $region57: #{resblock_forward.10} parent=0
    _
  %s9 = ssub.s32 1, %s7
  %s10 = scalar_select 0, %s9, %s7
  loop: start=0, step=1, limit=4
  $region2: #{resblock_forward.10} parent=0 // loop_pre_header
    _
  $region3: #{resblock_forward.10} parent=0 // loop_header
    %s12 = sphi 0, %s16
    %p13 = scmp.ge.s32.totalorder %s12, 4
    %s22 = sphi 0, %s24
    %s25 = sphi 0, %s22
    %s26 = sphi 0, %s25
    %s42 = sphi 0, %s26
    %s48 = sphi 0, %s50
    %s51 = sphi 0, %s48
    %s52 = sphi 0, %s51
    %s68 = sphi 0, %s52
    %s72 = sphi 0, %s72
    %s74 = sphi 0, %s72
    %s75 = sphi 0, %s74
    %s89 = sphi 0, %s75
    %s93 = sphi 0, %s93
    %s95 = sphi 0, %s93
    %s96 = sphi 0, %s95
    %s110 = sphi 0, %s96
    %s114 = sphi 0, %s114
    %s116 = sphi 0, %s114
    %s117 = sphi 0, %s116
    %s131 = sphi 0, %s117
    %s135 = sphi 0, %s135
    %s137 = sphi 0, %s135
    %s138 = sphi 0, %s137
    %s152 = sphi 0, %s138
    %s158 = sphi 0, %s160
    %s161 = sphi 0, %s158
    %s162 = sphi 0, %s161
    %s178 = sphi 0, %s162
  $region4: #{resblock_forward.10} parent=0 // loop_header_branch
    %15 = sbr.rel (%p13) target = $region8
  $region5: #{resblock_forward.10} parent=0 // loop_body
    %s17 = ssub.s32 %s12, 1
    %s18 = ssub.s32 %s12, 2
    %s19 = sadd.s32 %s12, 1
    %s20 = ssub.s32 %s12, %s19
    %p21 = scmp.eq.s32.totalorder %s20, 0
    %s23 = sadd.s32 %s22, 1
    %s24 = scalar_select %p21, %s22, %s23
    %p27 = pneg %p21
    %p28 = scmp.eq.s32.totalorder %s12, 1
    %p29 = por %p27, %p28
    %p30 = scmp.ne.s32.totalorder %s22, %s25
    %p31 = scmp.eq.s32.totalorder %s12, 0
    %p32 = por %p30, %p31
    %p33 = scmp.ne.s32.totalorder %s22, %s25
    %p34 = scmp.eq.s32.totalorder %s17, 1
    %p35 = por %p33, %p34
    %p36 = scmp.ne.s32.totalorder %s25, %s26
    %p37 = scmp.eq.s32.totalorder %s17, 0
    %p38 = por %p36, %p37
    %p39 = scmp.ne.s32.totalorder %s25, %s26
    %p40 = scmp.eq.s32.totalorder %s18, 1
    %p41 = por %p39, %p40
    %p43 = scmp.ne.s32.totalorder %s26, %s42
    %p44 = scmp.eq.s32.totalorder %s18, 0
    %p45 = por %p43, %p44
    %s46 = ssub.s32 %s12, %s19
    %p47 = scmp.eq.s32.totalorder %s46, 0
    %s49 = sadd.s32 %s48, 1
    %s50 = scalar_select %p47, %s48, %s49
    %p53 = pneg %p47
    %p54 = scmp.eq.s32.totalorder %s12, 1
    %p55 = por %p53, %p54
    %p56 = scmp.ne.s32.totalorder %s48, %s51
    %p57 = scmp.eq.s32.totalorder %s12, 0
    %p58 = por %p56, %p57
    %p59 = scmp.ne.s32.totalorder %s48, %s51
    %p60 = scmp.eq.s32.totalorder %s17, 1
    %p61 = por %p59, %p60
    %p62 = scmp.ne.s32.totalorder %s51, %s52
    %p63 = scmp.eq.s32.totalorder %s17, 0
    %p64 = por %p62, %p63
    %p65 = scmp.ne.s32.totalorder %s51, %s52
    %p66 = scmp.eq.s32.totalorder %s18, 1
    %p67 = por %p65, %p66
    %p69 = scmp.ne.s32.totalorder %s52, %s68
    %p70 = scmp.eq.s32.totalorder %s18, 0
    %p71 = por %p69, %p70
    %s73 = sadd.s32 %s72, 1
    %p76 = scmp.eq.s32.totalorder %s12, 1
    %p77 = scmp.ne.s32.totalorder %s72, %s74
    %p78 = scmp.eq.s32.totalorder %s12, 0
    %p79 = por %p77, %p78
    %p80 = scmp.ne.s32.totalorder %s72, %s74
    %p81 = scmp.eq.s32.totalorder %s17, 1
    %p82 = por %p80, %p81
    %p83 = scmp.ne.s32.totalorder %s74, %s75
    %p84 = scmp.eq.s32.totalorder %s17, 0
    %p85 = por %p83, %p84
    %p86 = scmp.ne.s32.totalorder %s74, %s75
    %p87 = scmp.eq.s32.totalorder %s18, 1
    %p88 = por %p86, %p87
    %p90 = scmp.ne.s32.totalorder %s75, %s89
    %p91 = scmp.eq.s32.totalorder %s18, 0
    %p92 = por %p90, %p91
    %s94 = sadd.s32 %s93, 1
    %p97 = scmp.eq.s32.totalorder %s12, 1
    %p98 = scmp.ne.s32.totalorder %s93, %s95
    %p99 = scmp.eq.s32.totalorder %s12, 0
    %p100 = por %p98, %p99
    %p101 = scmp.ne.s32.totalorder %s93, %s95
    %p102 = scmp.eq.s32.totalorder %s17, 1
    %p103 = por %p101, %p102
    %p104 = scmp.ne.s32.totalorder %s95, %s96
    %p105 = scmp.eq.s32.totalorder %s17, 0
    %p106 = por %p104, %p105
    %p107 = scmp.ne.s32.totalorder %s95, %s96
    %p108 = scmp.eq.s32.totalorder %s18, 1
    %p109 = por %p107, %p108
    %p111 = scmp.ne.s32.totalorder %s96, %s110
    %p112 = scmp.eq.s32.totalorder %s18, 0
    %p113 = por %p111, %p112
    %s115 = sadd.s32 %s114, 1
    %p118 = scmp.eq.s32.totalorder %s12, 1
    %p119 = scmp.ne.s32.totalorder %s114, %s116
    %p120 = scmp.eq.s32.totalorder %s12, 0
    %p121 = por %p119, %p120
    %p122 = scmp.ne.s32.totalorder %s114, %s116
    %p123 = scmp.eq.s32.totalorder %s17, 1
    %p124 = por %p122, %p123
    %p125 = scmp.ne.s32.totalorder %s116, %s117
    %p126 = scmp.eq.s32.totalorder %s17, 0
    %p127 = por %p125, %p126
    %p128 = scmp.ne.s32.totalorder %s116, %s117
    %p129 = scmp.eq.s32.totalorder %s18, 1
    %p130 = por %p128, %p129
    %p132 = scmp.ne.s32.totalorder %s117, %s131
    %p133 = scmp.eq.s32.totalorder %s18, 0
    %p134 = por %p132, %p133
    %s136 = sadd.s32 %s135, 1
    %p139 = scmp.eq.s32.totalorder %s12, 1
    %p140 = scmp.ne.s32.totalorder %s135, %s137
    %p141 = scmp.eq.s32.totalorder %s12, 0
    %p142 = por %p140, %p141
    %p143 = scmp.ne.s32.totalorder %s135, %s137
    %p144 = scmp.eq.s32.totalorder %s17, 1
    %p145 = por %p143, %p144
    %p146 = scmp.ne.s32.totalorder %s137, %s138
    %p147 = scmp.eq.s32.totalorder %s17, 0
    %p148 = por %p146, %p147
    %p149 = scmp.ne.s32.totalorder %s137, %s138
    %p150 = scmp.eq.s32.totalorder %s18, 1
    %p151 = por %p149, %p150
    %p153 = scmp.ne.s32.totalorder %s138, %s152
    %p154 = scmp.eq.s32.totalorder %s18, 0
    %p155 = por %p153, %p154
    %s156 = ssub.s32 %s12, %s19
    %p157 = scmp.eq.s32.totalorder %s156, 0
    %s159 = sadd.s32 %s158, 1
    %s160 = scalar_select %p157, %s158, %s159
    %p163 = pneg %p157
    %p164 = scmp.eq.s32.totalorder %s12, 1
    %p165 = por %p163, %p164
    %p166 = scmp.ne.s32.totalorder %s158, %s161
    %p167 = scmp.eq.s32.totalorder %s12, 0
    %p168 = por %p166, %p167
    %p169 = scmp.ne.s32.totalorder %s158, %s161
    %p170 = scmp.eq.s32.totalorder %s17, 1
    %p171 = por %p169, %p170
    %p172 = scmp.ne.s32.totalorder %s161, %s162
    %p173 = scmp.eq.s32.totalorder %s17, 0
    %p174 = por %p172, %p173
    %p175 = scmp.ne.s32.totalorder %s161, %s162
    %p176 = scmp.eq.s32.totalorder %s18, 1
    %p177 = por %p175, %p176
    %p179 = scmp.ne.s32.totalorder %s162, %s178
    %p180 = scmp.eq.s32.totalorder %s18, 0
    %p181 = por %p179, %p180
    %p182 = scmp.le.s32.totalorder 1, %s12
    %p183 = scmp.lt.s32.totalorder %s12, 3
    %p184 = pnand %p182, %p183
    %p185 = pneg %p184
    // Predicated region
    $region9: #{resblock_forward.10} parent=5 // pred_check
      _
    $region10: #{resblock_forward.10} parent=5 // pred_check_branch
      %187 = sbr.rel (%p184) target = $region12
    $region11: #{resblock_forward.10} parent=5 // pred_region
      %s188 = ssub.s32 %s12, 1
      // Predicated region
      $region13: #{resblock_forward.10} parent=11 // pred_check
        %p189 = pneg %p85
      $region14: #{resblock_forward.10} parent=11 // pred_check_branch
        %191 = sbr.rel (%p189) target = $region16
      $region15: #{resblock_forward.10} parent=11 // pred_region
        _
      $region16: #{resblock_forward.10} parent=11 // pred_fallthru
        _
      // Predicated region
      $region17: #{resblock_forward.10} parent=11 // pred_check
        %p192 = pneg %p106
      $region18: #{resblock_forward.10} parent=11 // pred_check_branch
        %194 = sbr.rel (%p192) target = $region20
      $region19: #{resblock_forward.10} parent=11 // pred_region
        _
      $region20: #{resblock_forward.10} parent=11 // pred_fallthru
        _
      // Predicated region
      $region21: #{resblock_forward.10} parent=11 // pred_check
        %p195 = pneg %p127
      $region22: #{resblock_forward.10} parent=11 // pred_check_branch
        %197 = sbr.rel (%p195) target = $region24
      $region23: #{resblock_forward.10} parent=11 // pred_region
        _
      $region24: #{resblock_forward.10} parent=11 // pred_fallthru
        _
      // Predicated region
      $region25: #{resblock_forward.10} parent=11 // pred_check
        %p198 = pneg %p148
      $region26: #{resblock_forward.10} parent=11 // pred_check_branch
        %200 = sbr.rel (%p198) target = $region28
      $region27: #{resblock_forward.10} parent=11 // pred_region
        _
      $region28: #{resblock_forward.10} parent=11 // pred_fallthru
        _
    $region12: #{resblock_forward.10} parent=5 // pred_fallthru
      _
    %p201 = scmp.lt.s32.totalorder %s12, 2
    // Predicated region
    $region29: #{resblock_forward.10} parent=5 // pred_check
      %p202 = pneg %p201
    $region30: #{resblock_forward.10} parent=5 // pred_check_branch
      %204 = sbr.rel (%p202) target = $region32
    $region31: #{resblock_forward.10} parent=5 // pred_region
      // Predicated region
      $region33: #{resblock_forward.10} parent=31 // pred_check
        %p205 = pneg %p32
      $region34: #{resblock_forward.10} parent=31 // pred_check_branch
        %207 = sbr.rel (%p205) target = $region36
      $region35: #{resblock_forward.10} parent=31 // pred_region
        %s208 = smul.u32 64, %s12
        %p209 = scmp.lt.s32.totalorder %s208, 127
        %s210 = scalar_select %p209, %s208, 127
        %s211 = smul.addr %s210, 4
        %s212 = scalar_lea.vmem %s0, %s211
        %s213 = smul.u32 64, %s12
      $region36: #{resblock_forward.10} parent=31 // pred_fallthru
        _
      // Predicated region
      $region37: #{resblock_forward.10} parent=31 // pred_check
        %p214 = pneg %p58
      $region38: #{resblock_forward.10} parent=31 // pred_check_branch
        %216 = sbr.rel (%p214) target = $region40
      $region39: #{resblock_forward.10} parent=31 // pred_region
        %s217 = smul.u32 64, %s12
        %p218 = scmp.lt.s32.totalorder %s217, 127
        %s219 = scalar_select %p218, %s217, 127
        %s220 = smul.addr %s219, 4
        %s221 = scalar_lea.vmem %s1, %s220
        %s222 = smul.u32 64, %s12
      $region40: #{resblock_forward.10} parent=31 // pred_fallthru
        _
    $region32: #{resblock_forward.10} parent=5 // pred_fallthru
      _
    %p223 = scmp.le.s32.totalorder 1, %s12
    %p224 = scmp.lt.s32.totalorder %s12, 3
    %p225 = pnand %p223, %p224
    %p226 = pneg %p225
    // Predicated region
    $region41: #{resblock_forward.10} parent=5 // pred_check
      _
    $region42: #{resblock_forward.10} parent=5 // pred_check_branch
      %228 = sbr.rel (%p225) target = $region44
    $region43: #{resblock_forward.10} parent=5 // pred_region
      %s229 = ssub.s32 %s12, 1
      %s230 = smul.u32 64, %s17
      %p231 = scmp.lt.s32.totalorder %s230, 127
      %s232 = scalar_select %p231, %s230, 127
      %s233 = smul.addr %s232, 4
      %s234 = scalar_lea.vmem %s0, %s233
      %p235 = pneg %p38
      %p236 = pneg %p35
      %s237 = smul.u32 64, %s17
      %p238 = scmp.lt.s32.totalorder %s237, 127
      %s239 = scalar_select %p238, %s237, 127
      %s240 = smul.addr %s239, 4
      %s241 = scalar_lea.vmem %s1, %s240
      %p242 = pneg %p64
      %p243 = pneg %p61
      %p244 = pneg %p85
      %p245 = pneg %p82
      %p246 = pneg %p106
      %p247 = pneg %p103
      %p248 = pneg %p127
      %p249 = pneg %p124
      %p250 = pneg %p148
      %p251 = pneg %p145
      %p252 = pneg %p174
      %p253 = pneg %p171
      %s254 = smul.u32 64, %s17
      %p255 = scmp.lt.s32.totalorder %s254, 127
      %s256 = scalar_select %p255, %s254, 127
      %s257 = smul.addr %s256, 8
      %s258 = scalar_lea.vmem %s6, %s257
      %s259 = smul.u32 64, %s17
      %p260 = scmp.lt.s32.totalorder %s259, 127
      %s261 = scalar_select %p260, %s259, 127
      %s262 = smul.addr %s261, 4
      %s263 = scalar_lea.vmem %s0, %s262
      %s264 = smul.u32 64, %s17
      %s265 = smul.u32 64, %s17
      %p266 = scmp.lt.s32.totalorder %s265, 127
      %s267 = scalar_select %p266, %s265, 127
      %s268 = smul.addr %s267, 4
      %s269 = scalar_lea.vmem %s1, %s268
      %s270 = smul.u32 64, %s17
      %s271 = smul.u32 64, %s17
      %p272 = scmp.lt.s32.totalorder %s271, 127
      %s273 = scalar_select %p272, %s271, 127
      %s274 = smul.addr %s273, 8
      %s275 = scalar_lea.vmem %s6, %s274
      %s276 = smul.u32 64, %s17
      %v277 = vld [vmem:[%s263] sm:$0xf]
      %v278 = vld [vmem:[%s263 + $0x4] sm:$0xf]
      %v279 = vld [vmem:[%s263 + $0x8] sm:$0xf]
      %v280 = vld [vmem:[%s263 + $0xc] sm:$0xf]
      %v281 = vld [vmem:[%s263 + $0x10] sm:$0xf]
      %v282 = vld [vmem:[%s263 + $0x14] sm:$0xf]
      %v283 = vld [vmem:[%s263 + $0x18] sm:$0xf]
      %v284 = vld [vmem:[%s263 + $0x1c] sm:$0xf]
      %v285 = vld [vmem:[%s263 + $0x20] sm:$0xf]
      %v286 = vld [vmem:[%s263 + $0x24] sm:$0xf]
      %v287 = vld [vmem:[%s263 + $0x28] sm:$0xf]
      %v288 = vld [vmem:[%s263 + $0x2c] sm:$0xf]
      %v289 = vld [vmem:[%s263 + $0x30] sm:$0xf]
      %v290 = vld [vmem:[%s263 + $0x34] sm:$0xf]
      %v291 = vld [vmem:[%s263 + $0x38] sm:$0xf]
      %v292 = vld [vmem:[%s263 + $0x3c] sm:$0xf]
      %v293 = vld [vmem:[%s263 + $0x40] sm:$0xf]
      %v294 = vld [vmem:[%s263 + $0x44] sm:$0xf]
      %v295 = vld [vmem:[%s263 + $0x48] sm:$0xf]
      %v296 = vld [vmem:[%s263 + $0x4c] sm:$0xf]
      %v297 = vld [vmem:[%s263 + $0x50] sm:$0xf]
      %v298 = vld [vmem:[%s263 + $0x54] sm:$0xf]
      %v299 = vld [vmem:[%s263 + $0x58] sm:$0xf]
      %v300 = vld [vmem:[%s263 + $0x5c] sm:$0xf]
      %v301 = vld [vmem:[%s263 + $0x60] sm:$0xf]
      %v302 = vld [vmem:[%s263 + $0x64] sm:$0xf]
      %v303 = vld [vmem:[%s263 + $0x68] sm:$0xf]
      %v304 = vld [vmem:[%s263 + $0x6c] sm:$0xf]
      %v305 = vld [vmem:[%s263 + $0x70] sm:$0xf]
      %v306 = vld [vmem:[%s263 + $0x74] sm:$0xf]
      %v307 = vld [vmem:[%s263 + $0x78] sm:$0xf]
      %v308 = vld [vmem:[%s263 + $0x7c] sm:$0xf]
      %v309 = vld [vmem:[%s263 + $0x80] sm:$0xf]
      %v310 = vld [vmem:[%s263 + $0x84] sm:$0xf]
      %v311 = vld [vmem:[%s263 + $0x88] sm:$0xf]
      %v312 = vld [vmem:[%s263 + $0x8c] sm:$0xf]
      %v313 = vld [vmem:[%s263 + $0x90] sm:$0xf]
      %v314 = vld [vmem:[%s263 + $0x94] sm:$0xf]
      %v315 = vld [vmem:[%s263 + $0x98] sm:$0xf]
      %v316 = vld [vmem:[%s263 + $0x9c] sm:$0xf]
      %v317 = vld [vmem:[%s263 + $0xa0] sm:$0xf]
      %v318 = vld [vmem:[%s263 + $0xa4] sm:$0xf]
      %v319 = vld [vmem:[%s263 + $0xa8] sm:$0xf]
      %v320 = vld [vmem:[%s263 + $0xac] sm:$0xf]
      %v321 = vld [vmem:[%s263 + $0xb0] sm:$0xf]
      %v322 = vld [vmem:[%s263 + $0xb4] sm:$0xf]
      %v323 = vld [vmem:[%s263 + $0xb8] sm:$0xf]
      %v324 = vld [vmem:[%s263 + $0xbc] sm:$0xf]
      %v325 = vld [vmem:[%s263 + $0xc0] sm:$0xf]
      %v326 = vld [vmem:[%s263 + $0xc4] sm:$0xf]
      %v327 = vld [vmem:[%s263 + $0xc8] sm:$0xf]
      %v328 = vld [vmem:[%s263 + $0xcc] sm:$0xf]
      %v329 = vld [vmem:[%s263 + $0xd0] sm:$0xf]
      %v330 = vld [vmem:[%s263 + $0xd4] sm:$0xf]
      %v331 = vld [vmem:[%s263 + $0xd8] sm:$0xf]
      %v332 = vld [vmem:[%s263 + $0xdc] sm:$0xf]
      %v333 = vld [vmem:[%s263 + $0xe0] sm:$0xf]
      %v334 = vld [vmem:[%s263 + $0xe4] sm:$0xf]
      %v335 = vld [vmem:[%s263 + $0xe8] sm:$0xf]
      %v336 = vld [vmem:[%s263 + $0xec] sm:$0xf]
      %v337 = vld [vmem:[%s263 + $0xf0] sm:$0xf]
      %v338 = vld [vmem:[%s263 + $0xf4] sm:$0xf]
      %v339 = vld [vmem:[%s263 + $0xf8] sm:$0xf]
      %v340 = vld [vmem:[%s263 + $0xfc] sm:$0xf]
      %v341 = vunpack.c.l.bf16 %v277
      %v342 = vunpack.c.l.bf16 %v278
      %v343 = vunpack.c.l.bf16 %v279
      %v344 = vunpack.c.l.bf16 %v280
      %v345 = vunpack.c.l.bf16 %v281
      %v346 = vunpack.c.l.bf16 %v282
      %v347 = vunpack.c.l.bf16 %v283
      %v348 = vunpack.c.l.bf16 %v284
      %v349 = vunpack.c.l.bf16 %v285
      %v350 = vunpack.c.l.bf16 %v286
      %v351 = vunpack.c.l.bf16 %v287
      %v352 = vunpack.c.l.bf16 %v288
      %v353 = vunpack.c.l.bf16 %v289
      %v354 = vunpack.c.l.bf16 %v290
      %v355 = vunpack.c.l.bf16 %v291
      %v356 = vunpack.c.l.bf16 %v292
      %v357 = vunpack.c.l.bf16 %v293
      %v358 = vunpack.c.l.bf16 %v294
      %v359 = vunpack.c.l.bf16 %v295
      %v360 = vunpack.c.l.bf16 %v296
      %v361 = vunpack.c.l.bf16 %v297
      %v362 = vunpack.c.l.bf16 %v298
      %v363 = vunpack.c.l.bf16 %v299
      %v364 = vunpack.c.l.bf16 %v300
      %v365 = vunpack.c.l.bf16 %v301
      %v366 = vunpack.c.l.bf16 %v302
      %v367 = vunpack.c.l.bf16 %v303
      %v368 = vunpack.c.l.bf16 %v304
      %v369 = vunpack.c.l.bf16 %v305
      %v370 = vunpack.c.l.bf16 %v306
      %v371 = vunpack.c.l.bf16 %v307
      %v372 = vunpack.c.l.bf16 %v308
      %v373 = vunpack.c.l.bf16 %v309
      %v374 = vunpack.c.l.bf16 %v310
      %v375 = vunpack.c.l.bf16 %v311
      %v376 = vunpack.c.l.bf16 %v312
      %v377 = vunpack.c.l.bf16 %v313
      %v378 = vunpack.c.l.bf16 %v314
      %v379 = vunpack.c.l.bf16 %v315
      %v380 = vunpack.c.l.bf16 %v316
      %v381 = vunpack.c.l.bf16 %v317
      %v382 = vunpack.c.l.bf16 %v318
      %v383 = vunpack.c.l.bf16 %v319
      %v384 = vunpack.c.l.bf16 %v320
      %v385 = vunpack.c.l.bf16 %v321
      %v386 = vunpack.c.l.bf16 %v322
      %v387 = vunpack.c.l.bf16 %v323
      %v388 = vunpack.c.l.bf16 %v324
      %v389 = vunpack.c.l.bf16 %v325
      %v390 = vunpack.c.l.bf16 %v326
      %v391 = vunpack.c.l.bf16 %v327
      %v392 = vunpack.c.l.bf16 %v328
      %v393 = vunpack.c.l.bf16 %v329
      %v394 = vunpack.c.l.bf16 %v330
      %v395 = vunpack.c.l.bf16 %v331
      %v396 = vunpack.c.l.bf16 %v332
      %v397 = vunpack.c.l.bf16 %v333
      %v398 = vunpack.c.l.bf16 %v334
      %v399 = vunpack.c.l.bf16 %v335
      %v400 = vunpack.c.l.bf16 %v336
      %v401 = vunpack.c.l.bf16 %v337
      %v402 = vunpack.c.l.bf16 %v338
      %v403 = vunpack.c.l.bf16 %v339
      %v404 = vunpack.c.l.bf16 %v340
      %v405 = vld [vmem:[%s269] sm:$0xf]
      %v406 = vld [vmem:[%s269 + $0x4] sm:$0xf]
      %v407 = vld [vmem:[%s269 + $0x8] sm:$0xf]
      %v408 = vld [vmem:[%s269 + $0xc] sm:$0xf]
      %v409 = vld [vmem:[%s269 + $0x10] sm:$0xf]
      %v410 = vld [vmem:[%s269 + $0x14] sm:$0xf]
      %v411 = vld [vmem:[%s269 + $0x18] sm:$0xf]
      %v412 = vld [vmem:[%s269 + $0x1c] sm:$0xf]
      %v413 = vld [vmem:[%s269 + $0x20] sm:$0xf]
      %v414 = vld [vmem:[%s269 + $0x24] sm:$0xf]
      %v415 = vld [vmem:[%s269 + $0x28] sm:$0xf]
      %v416 = vld [vmem:[%s269 + $0x2c] sm:$0xf]
      %v417 = vld [vmem:[%s269 + $0x30] sm:$0xf]
      %v418 = vld [vmem:[%s269 + $0x34] sm:$0xf]
      %v419 = vld [vmem:[%s269 + $0x38] sm:$0xf]
      %v420 = vld [vmem:[%s269 + $0x3c] sm:$0xf]
      %v421 = vld [vmem:[%s269 + $0x40] sm:$0xf]
      %v422 = vld [vmem:[%s269 + $0x44] sm:$0xf]
      %v423 = vld [vmem:[%s269 + $0x48] sm:$0xf]
      %v424 = vld [vmem:[%s269 + $0x4c] sm:$0xf]
      %v425 = vld [vmem:[%s269 + $0x50] sm:$0xf]
      %v426 = vld [vmem:[%s269 + $0x54] sm:$0xf]
      %v427 = vld [vmem:[%s269 + $0x58] sm:$0xf]
      %v428 = vld [vmem:[%s269 + $0x5c] sm:$0xf]
      %v429 = vld [vmem:[%s269 + $0x60] sm:$0xf]
      %v430 = vld [vmem:[%s269 + $0x64] sm:$0xf]
      %v431 = vld [vmem:[%s269 + $0x68] sm:$0xf]
      %v432 = vld [vmem:[%s269 + $0x6c] sm:$0xf]
      %v433 = vld [vmem:[%s269 + $0x70] sm:$0xf]
      %v434 = vld [vmem:[%s269 + $0x74] sm:$0xf]
      %v435 = vld [vmem:[%s269 + $0x78] sm:$0xf]
      %v436 = vld [vmem:[%s269 + $0x7c] sm:$0xf]
      %v437 = vld [vmem:[%s269 + $0x80] sm:$0xf]
      %v438 = vld [vmem:[%s269 + $0x84] sm:$0xf]
      %v439 = vld [vmem:[%s269 + $0x88] sm:$0xf]
      %v440 = vld [vmem:[%s269 + $0x8c] sm:$0xf]
      %v441 = vld [vmem:[%s269 + $0x90] sm:$0xf]
      %v442 = vld [vmem:[%s269 + $0x94] sm:$0xf]
      %v443 = vld [vmem:[%s269 + $0x98] sm:$0xf]
      %v444 = vld [vmem:[%s269 + $0x9c] sm:$0xf]
      %v445 = vld [vmem:[%s269 + $0xa0] sm:$0xf]
      %v446 = vld [vmem:[%s269 + $0xa4] sm:$0xf]
      %v447 = vld [vmem:[%s269 + $0xa8] sm:$0xf]
      %v448 = vld [vmem:[%s269 + $0xac] sm:$0xf]
      %v449 = vld [vmem:[%s269 + $0xb0] sm:$0xf]
      %v450 = vld [vmem:[%s269 + $0xb4] sm:$0xf]
      %v451 = vld [vmem:[%s269 + $0xb8] sm:$0xf]
      %v452 = vld [vmem:[%s269 + $0xbc] sm:$0xf]
      %v453 = vld [vmem:[%s269 + $0xc0] sm:$0xf]
      %v454 = vld [vmem:[%s269 + $0xc4] sm:$0xf]
      %v455 = vld [vmem:[%s269 + $0xc8] sm:$0xf]
      %v456 = vld [vmem:[%s269 + $0xcc] sm:$0xf]
      %v457 = vld [vmem:[%s269 + $0xd0] sm:$0xf]
      %v458 = vld [vmem:[%s269 + $0xd4] sm:$0xf]
      %v459 = vld [vmem:[%s269 + $0xd8] sm:$0xf]
      %v460 = vld [vmem:[%s269 + $0xdc] sm:$0xf]
      %v461 = vld [vmem:[%s269 + $0xe0] sm:$0xf]
      %v462 = vld [vmem:[%s269 + $0xe4] sm:$0xf]
      %v463 = vld [vmem:[%s269 + $0xe8] sm:$0xf]
      %v464 = vld [vmem:[%s269 + $0xec] sm:$0xf]
      %v465 = vld [vmem:[%s269 + $0xf0] sm:$0xf]
      %v466 = vld [vmem:[%s269 + $0xf4] sm:$0xf]
      %v467 = vld [vmem:[%s269 + $0xf8] sm:$0xf]
      %v468 = vld [vmem:[%s269 + $0xfc] sm:$0xf]
      %v469 = vunpack.c.l.bf16 %v405
      %v470 = vunpack.c.l.bf16 %v406
      %v471 = vunpack.c.l.bf16 %v407
      %v472 = vunpack.c.l.bf16 %v408
      %v473 = vunpack.c.l.bf16 %v409
      %v474 = vunpack.c.l.bf16 %v410
      %v475 = vunpack.c.l.bf16 %v411
      %v476 = vunpack.c.l.bf16 %v412
      %v477 = vunpack.c.l.bf16 %v413
      %v478 = vunpack.c.l.bf16 %v414
      %v479 = vunpack.c.l.bf16 %v415
      %v480 = vunpack.c.l.bf16 %v416
      %v481 = vunpack.c.l.bf16 %v417
      %v482 = vunpack.c.l.bf16 %v418
      %v483 = vunpack.c.l.bf16 %v419
      %v484 = vunpack.c.l.bf16 %v420
      %v485 = vunpack.c.l.bf16 %v421
      %v486 = vunpack.c.l.bf16 %v422
      %v487 = vunpack.c.l.bf16 %v423
      %v488 = vunpack.c.l.bf16 %v424
      %v489 = vunpack.c.l.bf16 %v425
      %v490 = vunpack.c.l.bf16 %v426
      %v491 = vunpack.c.l.bf16 %v427
      %v492 = vunpack.c.l.bf16 %v428
      %v493 = vunpack.c.l.bf16 %v429
      %v494 = vunpack.c.l.bf16 %v430
      %v495 = vunpack.c.l.bf16 %v431
      %v496 = vunpack.c.l.bf16 %v432
      %v497 = vunpack.c.l.bf16 %v433
      %v498 = vunpack.c.l.bf16 %v434
      %v499 = vunpack.c.l.bf16 %v435
      %v500 = vunpack.c.l.bf16 %v436
      %v501 = vunpack.c.l.bf16 %v437
      %v502 = vunpack.c.l.bf16 %v438
      %v503 = vunpack.c.l.bf16 %v439
      %v504 = vunpack.c.l.bf16 %v440
      %v505 = vunpack.c.l.bf16 %v441
      %v506 = vunpack.c.l.bf16 %v442
      %v507 = vunpack.c.l.bf16 %v443
      %v508 = vunpack.c.l.bf16 %v444
      %v509 = vunpack.c.l.bf16 %v445
      %v510 = vunpack.c.l.bf16 %v446
      %v511 = vunpack.c.l.bf16 %v447
      %v512 = vunpack.c.l.bf16 %v448
      %v513 = vunpack.c.l.bf16 %v449
      %v514 = vunpack.c.l.bf16 %v450
      %v515 = vunpack.c.l.bf16 %v451
      %v516 = vunpack.c.l.bf16 %v452
      %v517 = vunpack.c.l.bf16 %v453
      %v518 = vunpack.c.l.bf16 %v454
      %v519 = vunpack.c.l.bf16 %v455
      %v520 = vunpack.c.l.bf16 %v456
      %v521 = vunpack.c.l.bf16 %v457
      %v522 = vunpack.c.l.bf16 %v458
      %v523 = vunpack.c.l.bf16 %v459
      %v524 = vunpack.c.l.bf16 %v460
      %v525 = vunpack.c.l.bf16 %v461
      %v526 = vunpack.c.l.bf16 %v462
      %v527 = vunpack.c.l.bf16 %v463
      %v528 = vunpack.c.l.bf16 %v464
      %v529 = vunpack.c.l.bf16 %v465
      %v530 = vunpack.c.l.bf16 %v466
      %v531 = vunpack.c.l.bf16 %v467
      %v532 = vunpack.c.l.bf16 %v468
      %v533 = vld [vmem:[%s2] sm:$0x1]
      %v535 = vlaneseq
      %v536 = vshrl.u32 %v535, 7
      %v537 = vsub.s32 0, %v536
      %v538 = vrot.slane %v533, %v537
      %v540 = vmul.f32 %v341, %v538
      %v541 = vmul.f32 %v342, %v538
      %v542 = vmul.f32 %v343, %v538
      %v543 = vmul.f32 %v344, %v538
      %v544 = vmul.f32 %v345, %v538
      %v545 = vmul.f32 %v346, %v538
      %v546 = vmul.f32 %v347, %v538
      %v547 = vmul.f32 %v348, %v538
      %v548 = vmul.f32 %v349, %v538
      %v549 = vmul.f32 %v350, %v538
      %v550 = vmul.f32 %v351, %v538
      %v551 = vmul.f32 %v352, %v538
      %v552 = vmul.f32 %v353, %v538
      %v553 = vmul.f32 %v354, %v538
      %v554 = vmul.f32 %v355, %v538
      %v555 = vmul.f32 %v356, %v538
      %v556 = vmul.f32 %v357, %v538
      %v557 = vmul.f32 %v358, %v538
      %v558 = vmul.f32 %v359, %v538
      %v559 = vmul.f32 %v360, %v538
      %v560 = vmul.f32 %v361, %v538
      %v561 = vmul.f32 %v362, %v538
      %v562 = vmul.f32 %v363, %v538
      %v563 = vmul.f32 %v364, %v538
      %v564 = vmul.f32 %v365, %v538
      %v565 = vmul.f32 %v366, %v538
      %v566 = vmul.f32 %v367, %v538
      %v567 = vmul.f32 %v368, %v538
      %v568 = vmul.f32 %v369, %v538
      %v569 = vmul.f32 %v370, %v538
      %v570 = vmul.f32 %v371, %v538
      %v571 = vmul.f32 %v372, %v538
      %v572 = vmul.f32 %v373, %v538
      %v573 = vmul.f32 %v374, %v538
      %v574 = vmul.f32 %v375, %v538
      %v575 = vmul.f32 %v376, %v538
      %v576 = vmul.f32 %v377, %v538
      %v577 = vmul.f32 %v378, %v538
      %v578 = vmul.f32 %v379, %v538
      %v579 = vmul.f32 %v380, %v538
      %v580 = vmul.f32 %v381, %v538
      %v581 = vmul.f32 %v382, %v538
      %v582 = vmul.f32 %v383, %v538
      %v583 = vmul.f32 %v384, %v538
      %v584 = vmul.f32 %v385, %v538
      %v585 = vmul.f32 %v386, %v538
      %v586 = vmul.f32 %v387, %v538
      %v587 = vmul.f32 %v388, %v538
      %v588 = vmul.f32 %v389, %v538
      %v589 = vmul.f32 %v390, %v538
      %v590 = vmul.f32 %v391, %v538
      %v591 = vmul.f32 %v392, %v538
      %v592 = vmul.f32 %v393, %v538
      %v593 = vmul.f32 %v394, %v538
      %v594 = vmul.f32 %v395, %v538
      %v595 = vmul.f32 %v396, %v538
      %v596 = vmul.f32 %v397, %v538
      %v597 = vmul.f32 %v398, %v538
      %v598 = vmul.f32 %v399, %v538
      %v599 = vmul.f32 %v400, %v538
      %v600 = vmul.f32 %v401, %v538
      %v601 = vmul.f32 %v402, %v538
      %v602 = vmul.f32 %v403, %v538
      %v603 = vmul.f32 %v404, %v538
      %v604 = vld [vmem:[%s3] sm:$0x1]
      %v606 = vlaneseq
      %v607 = vshrl.u32 %v606, 7
      %v608 = vsub.s32 0, %v607
      %v609 = vrot.slane %v604, %v608
      %v611 = vadd.f32 %v540, %v609
      %v612 = vadd.f32 %v541, %v609
      %v613 = vadd.f32 %v542, %v609
      %v614 = vadd.f32 %v543, %v609
      %v615 = vadd.f32 %v544, %v609
      %v616 = vadd.f32 %v545, %v609
      %v617 = vadd.f32 %v546, %v609
      %v618 = vadd.f32 %v547, %v609
      %v619 = vadd.f32 %v548, %v609
      %v620 = vadd.f32 %v549, %v609
      %v621 = vadd.f32 %v550, %v609
      %v622 = vadd.f32 %v551, %v609
      %v623 = vadd.f32 %v552, %v609
      %v624 = vadd.f32 %v553, %v609
      %v625 = vadd.f32 %v554, %v609
      %v626 = vadd.f32 %v555, %v609
      %v627 = vadd.f32 %v556, %v609
      %v628 = vadd.f32 %v557, %v609
      %v629 = vadd.f32 %v558, %v609
      %v630 = vadd.f32 %v559, %v609
      %v631 = vadd.f32 %v560, %v609
      %v632 = vadd.f32 %v561, %v609
      %v633 = vadd.f32 %v562, %v609
      %v634 = vadd.f32 %v563, %v609
      %v635 = vadd.f32 %v564, %v609
      %v636 = vadd.f32 %v565, %v609
      %v637 = vadd.f32 %v566, %v609
      %v638 = vadd.f32 %v567, %v609
      %v639 = vadd.f32 %v568, %v609
      %v640 = vadd.f32 %v569, %v609
      %v641 = vadd.f32 %v570, %v609
      %v642 = vadd.f32 %v571, %v609
      %v643 = vadd.f32 %v572, %v609
      %v644 = vadd.f32 %v573, %v609
      %v645 = vadd.f32 %v574, %v609
      %v646 = vadd.f32 %v575, %v609
      %v647 = vadd.f32 %v576, %v609
      %v648 = vadd.f32 %v577, %v609
      %v649 = vadd.f32 %v578, %v609
      %v650 = vadd.f32 %v579, %v609
      %v651 = vadd.f32 %v580, %v609
      %v652 = vadd.f32 %v581, %v609
      %v653 = vadd.f32 %v582, %v609
      %v654 = vadd.f32 %v583, %v609
      %v655 = vadd.f32 %v584, %v609
      %v656 = vadd.f32 %v585, %v609
      %v657 = vadd.f32 %v586, %v609
      %v658 = vadd.f32 %v587, %v609
      %v659 = vadd.f32 %v588, %v609
      %v660 = vadd.f32 %v589, %v609
      %v661 = vadd.f32 %v590, %v609
      %v662 = vadd.f32 %v591, %v609
      %v663 = vadd.f32 %v592, %v609
      %v664 = vadd.f32 %v593, %v609
      %v665 = vadd.f32 %v594, %v609
      %v666 = vadd.f32 %v595, %v609
      %v667 = vadd.f32 %v596, %v609
      %v668 = vadd.f32 %v597, %v609
      %v669 = vadd.f32 %v598, %v609
      %v670 = vadd.f32 %v599, %v609
      %v671 = vadd.f32 %v600, %v609
      %v672 = vadd.f32 %v601, %v609
      %v673 = vadd.f32 %v602, %v609
      %v674 = vadd.f32 %v603, %v609
      %v675 = vld [vmem:[%s4] sm:$0x1]
      %v677 = vlaneseq
      %v678 = vshrl.u32 %v677, 7
      %v679 = vsub.s32 0, %v678
      %v680 = vrot.slane %v675, %v679
      %v682 = vmul.f32 %v469, %v680
      %v683 = vmul.f32 %v470, %v680
      %v684 = vmul.f32 %v471, %v680
      %v685 = vmul.f32 %v472, %v680
      %v686 = vmul.f32 %v473, %v680
      %v687 = vmul.f32 %v474, %v680
      %v688 = vmul.f32 %v475, %v680
      %v689 = vmul.f32 %v476, %v680
      %v690 = vmul.f32 %v477, %v680
      %v691 = vmul.f32 %v478, %v680
      %v692 = vmul.f32 %v479, %v680
      %v693 = vmul.f32 %v480, %v680
      %v694 = vmul.f32 %v481, %v680
      %v695 = vmul.f32 %v482, %v680
      %v696 = vmul.f32 %v483, %v680
      %v697 = vmul.f32 %v484, %v680
      %v698 = vmul.f32 %v485, %v680
      %v699 = vmul.f32 %v486, %v680
      %v700 = vmul.f32 %v487, %v680
      %v701 = vmul.f32 %v488, %v680
      %v702 = vmul.f32 %v489, %v680
      %v703 = vmul.f32 %v490, %v680
      %v704 = vmul.f32 %v491, %v680
      %v705 = vmul.f32 %v492, %v680
      %v706 = vmul.f32 %v493, %v680
      %v707 = vmul.f32 %v494, %v680
      %v708 = vmul.f32 %v495, %v680
      %v709 = vmul.f32 %v496, %v680
      %v710 = vmul.f32 %v497, %v680
      %v711 = vmul.f32 %v498, %v680
      %v712 = vmul.f32 %v499, %v680
      %v713 = vmul.f32 %v500, %v680
      %v714 = vmul.f32 %v501, %v680
      %v715 = vmul.f32 %v502, %v680
      %v716 = vmul.f32 %v503, %v680
      %v717 = vmul.f32 %v504, %v680
      %v718 = vmul.f32 %v505, %v680
      %v719 = vmul.f32 %v506, %v680
      %v720 = vmul.f32 %v507, %v680
      %v721 = vmul.f32 %v508, %v680
      %v722 = vmul.f32 %v509, %v680
      %v723 = vmul.f32 %v510, %v680
      %v724 = vmul.f32 %v511, %v680
      %v725 = vmul.f32 %v512, %v680
      %v726 = vmul.f32 %v513, %v680
      %v727 = vmul.f32 %v514, %v680
      %v728 = vmul.f32 %v515, %v680
      %v729 = vmul.f32 %v516, %v680
      %v730 = vmul.f32 %v517, %v680
      %v731 = vmul.f32 %v518, %v680
      %v732 = vmul.f32 %v519, %v680
      %v733 = vmul.f32 %v520, %v680
      %v734 = vmul.f32 %v521, %v680
      %v735 = vmul.f32 %v522, %v680
      %v736 = vmul.f32 %v523, %v680
      %v737 = vmul.f32 %v524, %v680
      %v738 = vmul.f32 %v525, %v680
      %v739 = vmul.f32 %v526, %v680
      %v740 = vmul.f32 %v527, %v680
      %v741 = vmul.f32 %v528, %v680
      %v742 = vmul.f32 %v529, %v680
      %v743 = vmul.f32 %v530, %v680
      %v744 = vmul.f32 %v531, %v680
      %v745 = vmul.f32 %v532, %v680
      %v746 = vadd.f32 %v611, %v682
      %v747 = vadd.f32 %v612, %v683
      %v748 = vadd.f32 %v613, %v684
      %v749 = vadd.f32 %v614, %v685
      %v750 = vadd.f32 %v615, %v686
      %v751 = vadd.f32 %v616, %v687
      %v752 = vadd.f32 %v617, %v688
      %v753 = vadd.f32 %v618, %v689
      %v754 = vadd.f32 %v619, %v690
      %v755 = vadd.f32 %v620, %v691
      %v756 = vadd.f32 %v621, %v692
      %v757 = vadd.f32 %v622, %v693
      %v758 = vadd.f32 %v623, %v694
      %v759 = vadd.f32 %v624, %v695
      %v760 = vadd.f32 %v625, %v696
      %v761 = vadd.f32 %v626, %v697
      %v762 = vadd.f32 %v627, %v698
      %v763 = vadd.f32 %v628, %v699
      %v764 = vadd.f32 %v629, %v700
      %v765 = vadd.f32 %v630, %v701
      %v766 = vadd.f32 %v631, %v702
      %v767 = vadd.f32 %v632, %v703
      %v768 = vadd.f32 %v633, %v704
      %v769 = vadd.f32 %v634, %v705
      %v770 = vadd.f32 %v635, %v706
      %v771 = vadd.f32 %v636, %v707
      %v772 = vadd.f32 %v637, %v708
      %v773 = vadd.f32 %v638, %v709
      %v774 = vadd.f32 %v639, %v710
      %v775 = vadd.f32 %v640, %v711
      %v776 = vadd.f32 %v641, %v712
      %v777 = vadd.f32 %v642, %v713
      %v778 = vadd.f32 %v643, %v714
      %v779 = vadd.f32 %v644, %v715
      %v780 = vadd.f32 %v645, %v716
      %v781 = vadd.f32 %v646, %v717
      %v782 = vadd.f32 %v647, %v718
      %v783 = vadd.f32 %v648, %v719
      %v784 = vadd.f32 %v649, %v720
      %v785 = vadd.f32 %v650, %v721
      %v786 = vadd.f32 %v651, %v722
      %v787 = vadd.f32 %v652, %v723
      %v788 = vadd.f32 %v653, %v724
      %v789 = vadd.f32 %v654, %v725
      %v790 = vadd.f32 %v655, %v726
      %v791 = vadd.f32 %v656, %v727
      %v792 = vadd.f32 %v657, %v728
      %v793 = vadd.f32 %v658, %v729
      %v794 = vadd.f32 %v659, %v730
      %v795 = vadd.f32 %v660, %v731
      %v796 = vadd.f32 %v661, %v732
      %v797 = vadd.f32 %v662, %v733
      %v798 = vadd.f32 %v663, %v734
      %v799 = vadd.f32 %v664, %v735
      %v800 = vadd.f32 %v665, %v736
      %v801 = vadd.f32 %v666, %v737
      %v802 = vadd.f32 %v667, %v738
      %v803 = vadd.f32 %v668, %v739
      %v804 = vadd.f32 %v669, %v740
      %v805 = vadd.f32 %v670, %v741
      %v806 = vadd.f32 %v671, %v742
      %v807 = vadd.f32 %v672, %v743
      %v808 = vadd.f32 %v673, %v744
      %v809 = vadd.f32 %v674, %v745
      %v810 = vld [vmem:[%s5] sm:$0x1]
      %v812 = vlaneseq
      %v813 = vshrl.u32 %v812, 7
      %v814 = vsub.s32 0, %v813
      %v815 = vrot.slane %v810, %v814
      %v817 = vadd.f32 %v746, %v815
      %v818 = vadd.f32 %v747, %v815
      %v819 = vadd.f32 %v748, %v815
      %v820 = vadd.f32 %v749, %v815
      %v821 = vadd.f32 %v750, %v815
      %v822 = vadd.f32 %v751, %v815
      %v823 = vadd.f32 %v752, %v815
      %v824 = vadd.f32 %v753, %v815
      %v825 = vadd.f32 %v754, %v815
      %v826 = vadd.f32 %v755, %v815
      %v827 = vadd.f32 %v756, %v815
      %v828 = vadd.f32 %v757, %v815
      %v829 = vadd.f32 %v758, %v815
      %v830 = vadd.f32 %v759, %v815
      %v831 = vadd.f32 %v760, %v815
      %v832 = vadd.f32 %v761, %v815
      %v833 = vadd.f32 %v762, %v815
      %v834 = vadd.f32 %v763, %v815
      %v835 = vadd.f32 %v764, %v815
      %v836 = vadd.f32 %v765, %v815
      %v837 = vadd.f32 %v766, %v815
      %v838 = vadd.f32 %v767, %v815
      %v839 = vadd.f32 %v768, %v815
      %v840 = vadd.f32 %v769, %v815
      %v841 = vadd.f32 %v770, %v815
      %v842 = vadd.f32 %v771, %v815
      %v843 = vadd.f32 %v772, %v815
      %v844 = vadd.f32 %v773, %v815
      %v845 = vadd.f32 %v774, %v815
      %v846 = vadd.f32 %v775, %v815
      %v847 = vadd.f32 %v776, %v815
      %v848 = vadd.f32 %v777, %v815
      %v849 = vadd.f32 %v778, %v815
      %v850 = vadd.f32 %v779, %v815
      %v851 = vadd.f32 %v780, %v815
      %v852 = vadd.f32 %v781, %v815
      %v853 = vadd.f32 %v782, %v815
      %v854 = vadd.f32 %v783, %v815
      %v855 = vadd.f32 %v784, %v815
      %v856 = vadd.f32 %v785, %v815
      %v857 = vadd.f32 %v786, %v815
      %v858 = vadd.f32 %v787, %v815
      %v859 = vadd.f32 %v788, %v815
      %v860 = vadd.f32 %v789, %v815
      %v861 = vadd.f32 %v790, %v815
      %v862 = vadd.f32 %v791, %v815
      %v863 = vadd.f32 %v792, %v815
      %v864 = vadd.f32 %v793, %v815
      %v865 = vadd.f32 %v794, %v815
      %v866 = vadd.f32 %v795, %v815
      %v867 = vadd.f32 %v796, %v815
      %v868 = vadd.f32 %v797, %v815
      %v869 = vadd.f32 %v798, %v815
      %v870 = vadd.f32 %v799, %v815
      %v871 = vadd.f32 %v800, %v815
      %v872 = vadd.f32 %v801, %v815
      %v873 = vadd.f32 %v802, %v815
      %v874 = vadd.f32 %v803, %v815
      %v875 = vadd.f32 %v804, %v815
      %v876 = vadd.f32 %v805, %v815
      %v877 = vadd.f32 %v806, %v815
      %v878 = vadd.f32 %v807, %v815
      %v879 = vadd.f32 %v808, %v815
      %v880 = vadd.f32 %v809, %v815
      %881 = vst [vmem:[%s275] sm:$0xff] %v817
      %882 = vst [vmem:[%s275 + $0x8] sm:$0xff] %v818
      %883 = vst [vmem:[%s275 + $0x10] sm:$0xff] %v819
      %884 = vst [vmem:[%s275 + $0x18] sm:$0xff] %v820
      %885 = vst [vmem:[%s275 + $0x20] sm:$0xff] %v821
      %886 = vst [vmem:[%s275 + $0x28] sm:$0xff] %v822
      %887 = vst [vmem:[%s275 + $0x30] sm:$0xff] %v823
      %888 = vst [vmem:[%s275 + $0x38] sm:$0xff] %v824
      %889 = vst [vmem:[%s275 + $0x40] sm:$0xff] %v825
      %890 = vst [vmem:[%s275 + $0x48] sm:$0xff] %v826
      %891 = vst [vmem:[%s275 + $0x50] sm:$0xff] %v827
      %892 = vst [vmem:[%s275 + $0x58] sm:$0xff] %v828
      %893 = vst [vmem:[%s275 + $0x60] sm:$0xff] %v829
      %894 = vst [vmem:[%s275 + $0x68] sm:$0xff] %v830
      %895 = vst [vmem:[%s275 + $0x70] sm:$0xff] %v831
      %896 = vst [vmem:[%s275 + $0x78] sm:$0xff] %v832
      %897 = vst [vmem:[%s275 + $0x80] sm:$0xff] %v833
      %898 = vst [vmem:[%s275 + $0x88] sm:$0xff] %v834
      %899 = vst [vmem:[%s275 + $0x90] sm:$0xff] %v835
      %900 = vst [vmem:[%s275 + $0x98] sm:$0xff] %v836
      %901 = vst [vmem:[%s275 + $0xa0] sm:$0xff] %v837
      %902 = vst [vmem:[%s275 + $0xa8] sm:$0xff] %v838
      %903 = vst [vmem:[%s275 + $0xb0] sm:$0xff] %v839
      %904 = vst [vmem:[%s275 + $0xb8] sm:$0xff] %v840
      %905 = vst [vmem:[%s275 + $0xc0] sm:$0xff] %v841
      %906 = vst [vmem:[%s275 + $0xc8] sm:$0xff] %v842
      %907 = vst [vmem:[%s275 + $0xd0] sm:$0xff] %v843
      %908 = vst [vmem:[%s275 + $0xd8] sm:$0xff] %v844
      %909 = vst [vmem:[%s275 + $0xe0] sm:$0xff] %v845
      %910 = vst [vmem:[%s275 + $0xe8] sm:$0xff] %v846
      %911 = vst [vmem:[%s275 + $0xf0] sm:$0xff] %v847
      %912 = vst [vmem:[%s275 + $0xf8] sm:$0xff] %v848
      %913 = vst [vmem:[%s275 + $0x100] sm:$0xff] %v849
      %914 = vst [vmem:[%s275 + $0x108] sm:$0xff] %v850
      %915 = vst [vmem:[%s275 + $0x110] sm:$0xff] %v851
      %916 = vst [vmem:[%s275 + $0x118] sm:$0xff] %v852
      %917 = vst [vmem:[%s275 + $0x120] sm:$0xff] %v853
      %918 = vst [vmem:[%s275 + $0x128] sm:$0xff] %v854
      %919 = vst [vmem:[%s275 + $0x130] sm:$0xff] %v855
      %920 = vst [vmem:[%s275 + $0x138] sm:$0xff] %v856
      %921 = vst [vmem:[%s275 + $0x140] sm:$0xff] %v857
      %922 = vst [vmem:[%s275 + $0x148] sm:$0xff] %v858
      %923 = vst [vmem:[%s275 + $0x150] sm:$0xff] %v859
      %924 = vst [vmem:[%s275 + $0x158] sm:$0xff] %v860
      %925 = vst [vmem:[%s275 + $0x160] sm:$0xff] %v861
      %926 = vst [vmem:[%s275 + $0x168] sm:$0xff] %v862
      %927 = vst [vmem:[%s275 + $0x170] sm:$0xff] %v863
      %928 = vst [vmem:[%s275 + $0x178] sm:$0xff] %v864
      %929 = vst [vmem:[%s275 + $0x180] sm:$0xff] %v865
      %930 = vst [vmem:[%s275 + $0x188] sm:$0xff] %v866
      %931 = vst [vmem:[%s275 + $0x190] sm:$0xff] %v867
      %932 = vst [vmem:[%s275 + $0x198] sm:$0xff] %v868
      %933 = vst [vmem:[%s275 + $0x1a0] sm:$0xff] %v869
      %934 = vst [vmem:[%s275 + $0x1a8] sm:$0xff] %v870
      %935 = vst [vmem:[%s275 + $0x1b0] sm:$0xff] %v871
      %936 = vst [vmem:[%s275 + $0x1b8] sm:$0xff] %v872
      %937 = vst [vmem:[%s275 + $0x1c0] sm:$0xff] %v873
      %938 = vst [vmem:[%s275 + $0x1c8] sm:$0xff] %v874
      %939 = vst [vmem:[%s275 + $0x1d0] sm:$0xff] %v875
      %940 = vst [vmem:[%s275 + $0x1d8] sm:$0xff] %v876
      %941 = vst [vmem:[%s275 + $0x1e0] sm:$0xff] %v877
      %942 = vst [vmem:[%s275 + $0x1e8] sm:$0xff] %v878
      %943 = vst [vmem:[%s275 + $0x1f0] sm:$0xff] %v879
      %944 = vst [vmem:[%s275 + $0x1f8] sm:$0xff] %v880
      %s945 = smul.u32 64, %s17
      %p946 = scmp.lt.s32.totalorder %s945, 127
      %s947 = scalar_select %p946, %s945, 127
      %s948 = smul.addr %s947, 8
      %s949 = scalar_lea.vmem %s6, %s948
      // Predicated region
      $region45: #{resblock_forward.10} parent=43 // pred_check
        %p950 = pneg %p171
      $region46: #{resblock_forward.10} parent=43 // pred_check_branch
        %952 = sbr.rel (%p950) target = $region48
      $region47: #{resblock_forward.10} parent=43 // pred_region
        %s953 = smul.u32 64, %s17
      $region48: #{resblock_forward.10} parent=43 // pred_fallthru
        _
    $region44: #{resblock_forward.10} parent=5 // pred_fallthru
      _
    %p954 = scmp.le.s32.totalorder 2, %s12
    // Predicated region
    $region49: #{resblock_forward.10} parent=5 // pred_check
      %p955 = pneg %p954
    $region50: #{resblock_forward.10} parent=5 // pred_check_branch
      %957 = sbr.rel (%p955) target = $region52
    $region51: #{resblock_forward.10} parent=5 // pred_region
      %s958 = ssub.s32 %s12, 2
      // Predicated region
      $region53: #{resblock_forward.10} parent=51 // pred_check
        %p959 = pneg %p177
      $region54: #{resblock_forward.10} parent=51 // pred_check_branch
        %961 = sbr.rel (%p959) target = $region56
      $region55: #{resblock_forward.10} parent=51 // pred_region
        %s962 = smul.u32 64, %s18
        %p963 = scmp.lt.s32.totalorder %s962, 127
        %s964 = scalar_select %p963, %s962, 127
        %s965 = smul.addr %s964, 8
        %s966 = scalar_lea.vmem %s6, %s965
      $region56: #{resblock_forward.10} parent=51 // pred_fallthru
        _
    $region52: #{resblock_forward.10} parent=5 // pred_fallthru
      _
  $region6: #{resblock_forward.10} parent=0 // loop_footer
    %s16 = sadd.s32 1, %s12
  $region7: #{resblock_forward.10} parent=0 // loop_footer_branch
    %11 = sbr.rel target = $region3
  $region8: #{resblock_forward.10} parent=0 // loop_exit
    _

// kernel: resblock_forward.11
$region0: #{resblock_forward.11}
  #allocation0 [shape = 'u32[]', space=smem, size = 0x4, offset = 0x4, fixed_abs, tag = 'smem constant byte address 0x4 - core index']
  #allocation1 [shape = 'u32[144,128]{1,0:T(1,128)}', space=vmem, size = 0x12000, scoped, tag = 'internal scratch']
  %s0 = inlined_call_operand.vmem [shape: bf16[256,224], index: 0, kind: input, shape index: {}]
  %s1 = inlined_call_operand.vmem [shape: bf16[224,128], index: 1, kind: input, shape index: {}]
  %s2 = inlined_call_operand.hbm [shape: f32[256,128], index: 2, kind: output, shape index: {}]
  %s3 = sld [smem:[#allocation0]]
  $region41: #{resblock_forward.11} parent=0
    _
  %s5 = ssub.s32 1, %s3
  %s6 = scalar_select 0, %s5, %s3
  $region1: #{resblock_forward.11} parent=0
    #allocation2 [shape = 'u8[131072]{0}', space=vmem, size = 0x20000, scoped, tag = 'output window, operand 0']
    #allocation3 [shape = 's32[2]{0}', space=sflag, size = 0x8, scoped, tag = 'scoped memory for resblock_forward.11']
    %7 = vsyncpa [#allocation3], 0
    %s8 = scalar_lea.sflag [#allocation3], 1
    %9 = vsyncpa %s8, 0
    loop: start=0, step=1, limit=4
    $region2: #{resblock_forward.11} parent=1 // loop_pre_header
      _
    $region3: #{resblock_forward.11} parent=1 // loop_header
      %s11 = sphi 0, %s15
      %p12 = scmp.ge.s32.totalorder %s11, 4
      %s21 = sphi 0, %s23
      %s24 = sphi 0, %s21
      %s25 = sphi 0, %s24
      %s41 = sphi 0, %s25
      %s45 = sphi 0, %s45
      %s47 = sphi 0, %s45
      %s48 = sphi 0, %s47
      %s62 = sphi 0, %s48
      %s68 = sphi 0, %s70
      %s71 = sphi 0, %s68
      %s72 = sphi 0, %s71
      %s88 = sphi 0, %s72
    $region4: #{resblock_forward.11} parent=1 // loop_header_branch
      %14 = sbr.rel (%p12) target = $region8
    $region5: #{resblock_forward.11} parent=1 // loop_body
      %s16 = ssub.s32 %s11, 1
      %s17 = ssub.s32 %s11, 2
      %s18 = sadd.s32 %s11, 1
      %s19 = ssub.s32 %s11, %s18
      %p20 = scmp.eq.s32.totalorder %s19, 0
      %s22 = sadd.s32 %s21, 1
      %s23 = scalar_select %p20, %s21, %s22
      %p26 = pneg %p20
      %p27 = scmp.eq.s32.totalorder %s11, 1
      %p28 = por %p26, %p27
      %p29 = scmp.ne.s32.totalorder %s21, %s24
      %p30 = scmp.eq.s32.totalorder %s11, 0
      %p31 = por %p29, %p30
      %p32 = scmp.ne.s32.totalorder %s21, %s24
      %p33 = scmp.eq.s32.totalorder %s16, 1
      %p34 = por %p32, %p33
      %p35 = scmp.ne.s32.totalorder %s24, %s25
      %p36 = scmp.eq.s32.totalorder %s16, 0
      %p37 = por %p35, %p36
      %p38 = scmp.ne.s32.totalorder %s24, %s25
      %p39 = scmp.eq.s32.totalorder %s17, 1
      %p40 = por %p38, %p39
      %p42 = scmp.ne.s32.totalorder %s25, %s41
      %p43 = scmp.eq.s32.totalorder %s17, 0
      %p44 = por %p42, %p43
      %s46 = sadd.s32 %s45, 1
      %p49 = scmp.eq.s32.totalorder %s11, 1
      %p50 = scmp.ne.s32.totalorder %s45, %s47
      %p51 = scmp.eq.s32.totalorder %s11, 0
      %p52 = por %p50, %p51
      %p53 = scmp.ne.s32.totalorder %s45, %s47
      %p54 = scmp.eq.s32.totalorder %s16, 1
      %p55 = por %p53, %p54
      %p56 = scmp.ne.s32.totalorder %s47, %s48
      %p57 = scmp.eq.s32.totalorder %s16, 0
      %p58 = por %p56, %p57
      %p59 = scmp.ne.s32.totalorder %s47, %s48
      %p60 = scmp.eq.s32.totalorder %s17, 1
      %p61 = por %p59, %p60
      %p63 = scmp.ne.s32.totalorder %s48, %s62
      %p64 = scmp.eq.s32.totalorder %s17, 0
      %p65 = por %p63, %p64
      %s66 = ssub.s32 %s11, %s18
      %p67 = scmp.eq.s32.totalorder %s66, 0
      %s69 = sadd.s32 %s68, 1
      %s70 = scalar_select %p67, %s68, %s69
      %p73 = pneg %p67
      %p74 = scmp.eq.s32.totalorder %s11, 1
      %p75 = por %p73, %p74
      %p76 = scmp.ne.s32.totalorder %s68, %s71
      %p77 = scmp.eq.s32.totalorder %s11, 0
      %p78 = por %p76, %p77
      %p79 = scmp.ne.s32.totalorder %s68, %s71
      %p80 = scmp.eq.s32.totalorder %s16, 1
      %p81 = por %p79, %p80
      %p82 = scmp.ne.s32.totalorder %s71, %s72
      %p83 = scmp.eq.s32.totalorder %s16, 0
      %p84 = por %p82, %p83
      %p85 = scmp.ne.s32.totalorder %s71, %s72
      %p86 = scmp.eq.s32.totalorder %s17, 1
      %p87 = por %p85, %p86
      %p89 = scmp.ne.s32.totalorder %s72, %s88
      %p90 = scmp.eq.s32.totalorder %s17, 0
      %p91 = por %p89, %p90
      %p92 = scmp.le.s32.totalorder 1, %s11
      %p93 = scmp.lt.s32.totalorder %s11, 3
      %p94 = pnand %p92, %p93
      %p95 = pneg %p94
      // Predicated region
      $region9: #{resblock_forward.11} parent=5 // pred_check
        _
      $region10: #{resblock_forward.11} parent=5 // pred_check_branch
        %97 = sbr.rel (%p94) target = $region12
      $region11: #{resblock_forward.11} parent=5 // pred_region
        %s98 = ssub.s32 %s11, 1
        // Predicated region
        $region13: #{resblock_forward.11} parent=11 // pred_check
          %p99 = pneg %p58
        $region14: #{resblock_forward.11} parent=11 // pred_check_branch
          %101 = sbr.rel (%p99) target = $region16
        $region15: #{resblock_forward.11} parent=11 // pred_region
          _
        $region16: #{resblock_forward.11} parent=11 // pred_fallthru
          _
      $region12: #{resblock_forward.11} parent=5 // pred_fallthru
        _
      %p102 = scmp.lt.s32.totalorder %s11, 2
      // Predicated region
      $region17: #{resblock_forward.11} parent=5 // pred_check
        %p103 = pneg %p102
      $region18: #{resblock_forward.11} parent=5 // pred_check_branch
        %105 = sbr.rel (%p103) target = $region20
      $region19: #{resblock_forward.11} parent=5 // pred_region
        // Predicated region
        $region21: #{resblock_forward.11} parent=19 // pred_check
          %p106 = pneg %p31
        $region22: #{resblock_forward.11} parent=19 // pred_check_branch
          %108 = sbr.rel (%p106) target = $region24
        $region23: #{resblock_forward.11} parent=19 // pred_region
          %s109 = smul.u32 16, %s11
          %p110 = scmp.lt.s32.totalorder %s109, 31
          %s111 = scalar_select %p110, %s109, 31
          %s112 = smul.addr %s111, 2
          %s113 = smul.addr %s112, 4
          %s114 = scalar_lea.vmem %s0, %s113
          %s115 = smul.u32 16, %s11
        $region24: #{resblock_forward.11} parent=19 // pred_fallthru
          _
      $region20: #{resblock_forward.11} parent=5 // pred_fallthru
        _
      %p116 = scmp.le.s32.totalorder 1, %s11
      %p117 = scmp.lt.s32.totalorder %s11, 3
      %p118 = pnand %p116, %p117
      %p119 = pneg %p118
      // Predicated region
      $region25: #{resblock_forward.11} parent=5 // pred_check
        _
      $region26: #{resblock_forward.11} parent=5 // pred_check_branch
        %121 = sbr.rel (%p118) target = $region28
      $region27: #{resblock_forward.11} parent=5 // pred_region
        %s122 = ssub.s32 %s11, 1
        %s123 = smul.u32 16, %s16
        %p124 = scmp.lt.s32.totalorder %s123, 31
        %s125 = scalar_select %p124, %s123, 31
        %s126 = smul.addr %s125, 2
        %s127 = smul.addr %s126, 4
        %s128 = scalar_lea.vmem %s0, %s127
        %p129 = pneg %p37
        %p130 = pneg %p34
        %p131 = pneg %p58
        %p132 = pneg %p55
        %p133 = pneg %p84
        %p134 = pneg %p81
        %s135 = sand.u32 %s71, 1
        %s136 = scalar_lea.sflag [#allocation3], %s135
        %s137 = sand.u32 %s71, 1
        %s138 = smul.addr %s137, 128
        %s139 = scalar_lea.vmem [#allocation2], %s138
        %s140 = smul.u32 16, %s16
        %p141 = scmp.lt.s32.totalorder %s140, 31
        %s142 = scalar_select %p141, %s140, 31
        %s143 = smul.addr %s142, 2
        %s144 = smul.addr %s143, 4
        %s145 = scalar_lea.vmem %s0, %s144
        %s146 = smul.u32 16, %s16
        %s147 = smul.u32 16, %s16
        %v149 = vld [vmem:[%s145] sm:$0xff]
        %v150 = vld [vmem:[%s145 + $0x8] sm:$0xff]
        %v151 = vld [vmem:[%s145 + $0x10] sm:$0xff]
        %v152 = vld [vmem:[%s145 + $0x18] sm:$0xff]
        %v153 = vld [vmem:[%s145 + $0x20] sm:$0xff]
        %v154 = vld [vmem:[%s145 + $0x28] sm:$0xff]
        %v155 = vld [vmem:[%s145 + $0x30] sm:$0xff]
        %v156 = vld [vmem:[%s145 + $0x38] sm:$0xff]
        %v157 = vld [vmem:[%s145 + $0x40] sm:$0xff]
        %v158 = vld [vmem:[%s145 + $0x48] sm:$0xff]
        %v159 = vld [vmem:[%s145 + $0x50] sm:$0xff]
        %v160 = vld [vmem:[%s145 + $0x58] sm:$0xff]
        %v161 = vld [vmem:[%s145 + $0x60] sm:$0xff]
        %v162 = vld [vmem:[%s145 + $0x68] sm:$0xff]
        %v163 = vld [vmem:[%s145 + $0x70] sm:$0xff]
        %v164 = vld [vmem:[%s145 + $0x78] sm:$0xff]
        %v165 = vld [vmem:[%s1] sm:$0xf]
        %v166 = vld [vmem:[%s1 + $0x4] sm:$0xf]
        %v167 = vld [vmem:[%s1 + $0x8] sm:$0xf]
        %v168 = vld [vmem:[%s1 + $0xc] sm:$0xf]
        %v169 = vld [vmem:[%s1 + $0x10] sm:$0xf]
        %v170 = vld [vmem:[%s1 + $0x14] sm:$0xf]
        %v171 = vld [vmem:[%s1 + $0x18] sm:$0xf]
        %v172 = vld [vmem:[%s1 + $0x1c] sm:$0xf]
        %v173 = vld [vmem:[%s1 + $0x20] sm:$0xf]
        %v174 = vld [vmem:[%s1 + $0x24] sm:$0xf]
        %v175 = vld [vmem:[%s1 + $0x28] sm:$0xf]
        %v176 = vld [vmem:[%s1 + $0x2c] sm:$0xf]
        %v177 = vld [vmem:[%s1 + $0x30] sm:$0xf]
        %v178 = vld [vmem:[%s1 + $0x34] sm:$0xf]
        %v179 = vld [vmem:[%s1 + $0x38] sm:$0xf]
        %v180 = vld [vmem:[%s1 + $0x3c] sm:$0xf]
        %v181 = vld [vmem:[%s1 + $0x40] sm:$0xf]
        %v182 = vld [vmem:[%s1 + $0x44] sm:$0xf]
        %v183 = vld [vmem:[%s1 + $0x48] sm:$0xf]
        %v184 = vld [vmem:[%s1 + $0x4c] sm:$0xf]
        %v185 = vld [vmem:[%s1 + $0x50] sm:$0xf]
        %v186 = vld [vmem:[%s1 + $0x54] sm:$0xf]
        %v187 = vld [vmem:[%s1 + $0x58] sm:$0xf]
        %v188 = vld [vmem:[%s1 + $0x5c] sm:$0xf]
        %v189 = vld [vmem:[%s1 + $0x60] sm:$0xf]
        %v190 = vld [vmem:[%s1 + $0x64] sm:$0xf]
        %v191 = vld [vmem:[%s1 + $0x68] sm:$0xf]
        %v192 = vld [vmem:[%s1 + $0x6c] sm:$0xf]
        %v209 = vunpack.c.l.b16 %v149
        %v210 = vunpack.c.h.b16 %v149
        %v211 = vunpack.c.l.b16 %v150
        %v212 = vunpack.c.h.b16 %v150
        %v213 = vunpack.c.l.b16 %v151
        %v214 = vunpack.c.h.b16 %v151
        %v215 = vunpack.c.l.b16 %v152
        %v216 = vunpack.c.h.b16 %v152
        %v217 = vunpack.c.l.b16 %v153
        %v218 = vunpack.c.h.b16 %v153
        %v219 = vunpack.c.l.b16 %v154
        %v220 = vunpack.c.h.b16 %v154
        %v221 = vunpack.c.l.b16 %v155
        %v222 = vunpack.c.h.b16 %v155
        %v223 = vunpack.c.l.b16 %v156
        %v224 = vunpack.c.h.b16 %v156
        %v225 = vunpack.c.l.b16 %v157
        %v226 = vunpack.c.h.b16 %v157
        %v227 = vunpack.c.l.b16 %v158
        %v228 = vunpack.c.h.b16 %v158
        %v229 = vunpack.c.l.b16 %v159
        %v230 = vunpack.c.h.b16 %v159
        %v231 = vunpack.c.l.b16 %v160
        %v232 = vunpack.c.h.b16 %v160
        %v233 = vunpack.c.l.b16 %v161
        %v234 = vunpack.c.h.b16 %v161
        %v235 = vunpack.c.l.b16 %v162
        %v236 = vunpack.c.h.b16 %v162
        %v237 = vunpack.c.l.b16 %v163
        %v238 = vunpack.c.h.b16 %v163
        %v239 = vunpack.c.l.b16 %v164
        %v240 = vunpack.c.h.b16 %v164
        %v241 = vpack.c.b16 %v211, %v209
        %v242 = vpack.c.b16 %v212, %v210
        %v243 = vpack.c.b16 %v215, %v213
        %v244 = vpack.c.b16 %v216, %v214
        %v245 = vpack.c.b16 %v219, %v217
        %v246 = vpack.c.b16 %v220, %v218
        %v247 = vpack.c.b16 %v223, %v221
        %v248 = vpack.c.b16 %v224, %v222
        %v249 = vpack.c.b16 %v227, %v225
        %v250 = vpack.c.b16 %v228, %v226
        %v251 = vpack.c.b16 %v231, %v229
        %v252 = vpack.c.b16 %v232, %v230
        %v253 = vpack.c.b16 %v235, %v233
        %v254 = vpack.c.b16 %v236, %v234
        %v255 = vpack.c.b16 %v239, %v237
        %v256 = vpack.c.b16 %v240, %v238
        %v293 = vunpack.c.l.b16 %v165
        %v294 = vunpack.c.l.b16 %v166
        %v295 = vunpack.c.l.b16 %v167
        %v296 = vunpack.c.l.b16 %v168
        %v297 = vunpack.c.l.b16 %v169
        %v298 = vunpack.c.l.b16 %v170
        %v299 = vunpack.c.l.b16 %v171
        %v300 = vunpack.c.l.b16 %v172
        %v301 = vunpack.c.l.b16 %v173
        %v302 = vunpack.c.l.b16 %v174
        %v303 = vunpack.c.l.b16 %v175
        %v304 = vunpack.c.l.b16 %v176
        %v305 = vunpack.c.l.b16 %v177
        %v306 = vunpack.c.l.b16 %v178
        %v307 = vunpack.c.l.b16 %v179
        %v308 = vunpack.c.l.b16 %v180
        %v309 = vunpack.c.l.b16 %v181
        %v310 = vunpack.c.l.b16 %v182
        %v311 = vunpack.c.l.b16 %v183
        %v312 = vunpack.c.l.b16 %v184
        %v313 = vunpack.c.l.b16 %v185
        %v314 = vunpack.c.l.b16 %v186
        %v315 = vunpack.c.l.b16 %v187
        %v316 = vunpack.c.l.b16 %v188
        %v317 = vunpack.c.l.b16 %v189
        %v318 = vunpack.c.l.b16 %v190
        %v319 = vunpack.c.l.b16 %v191
        %v320 = vunpack.c.l.b16 %v192
        %v321 = vpack.c.b16 %v294, %v293
        %v322 = vpack.c.b16 %v296, %v295
        %v323 = vpack.c.b16 %v298, %v297
        %v324 = vpack.c.b16 %v300, %v299
        %v325 = vpack.c.b16 %v302, %v301
        %v326 = vpack.c.b16 %v304, %v303
        %v327 = vpack.c.b16 %v306, %v305
        %v328 = vpack.c.b16 %v308, %v307
        %v329 = vpack.c.b16 %v310, %v309
        %v330 = vpack.c.b16 %v312, %v311
        %v331 = vpack.c.b16 %v314, %v313
        %v332 = vpack.c.b16 %v316, %v315
        %v333 = vpack.c.b16 %v318, %v317
        %v334 = vpack.c.b16 %v320, %v319
        %vm349 = vcmask 785408
        %v351 = vsel %vm349, %v242, 0
        %v354 = vsel %vm349, %v244, 0
        %v357 = vsel %vm349, %v246, 0
        %v360 = vsel %vm349, %v248, 0
        %v363 = vsel %vm349, %v250, 0
        %v366 = vsel %vm349, %v252, 0
        %v369 = vsel %vm349, %v254, 0
        %v372 = vsel %vm349, %v256, 0
        %374 = vmatprep.subr.bf16.mxu0 0
        %375 = vmatpush1.bf16.msra.mxu0 %v321
        %376 = vmatprep.subr.bf16.mxu0 0
        %377 = vmatpush1.bf16.msra.mxu0 %v322
        %378 = vmatprep.subr.bf16.mxu0 0
        %379 = vmatpush1.bf16.msra.mxu0 %v323
        %380 = vmatprep.subr.bf16.mxu0 0
        %381 = vmatpush1.bf16.msra.mxu0 %v324
        %382 = vmatprep.subr.bf16.mxu0 0
        %383 = vmatpush1.bf16.msra.mxu0 %v325
        %384 = vmatprep.subr.bf16.mxu0 0
        %385 = vmatpush1.bf16.msra.mxu0 %v326
        %386 = vmatprep.subr.bf16.mxu0 0
        %387 = vmatpush1.bf16.msra.mxu0 %v327
        %388 = vmatprep.subr.bf16.mxu0 0
        %389 = vmatpush1.bf16.msra.mxu0 %v328
        %390 = vmatprep.subr.bf16.mxu0 0
        %391 = vmatpush1.bf16.msra.mxu0 %v329
        %392 = vmatprep.subr.bf16.mxu0 0
        %393 = vmatpush1.bf16.msra.mxu0 %v330
        %394 = vmatprep.subr.bf16.mxu0 0
        %395 = vmatpush1.bf16.msra.mxu0 %v331
        %396 = vmatprep.subr.bf16.mxu0 0
        %397 = vmatpush1.bf16.msra.mxu0 %v332
        %398 = vmatprep.subr.bf16.mxu0 0
        %399 = vmatpush1.bf16.msra.mxu0 %v333
        %400 = vmatprep.subr.bf16.mxu0 0
        %401 = vmatpush1.bf16.msra.mxu0 %v334
        %402 = vmatprep.subr.bf16.mxu0 0
        %403 = vmatpush1.bf16.msra.mxu0 0
        %404 = vmatprep.subr.bf16.mxu0 0
        %405 = vmatpush1.bf16.msra.mxu0 0
        %406 = vmatprep.mubr.bf16.mxu0 %v351
        %407 = vmatmul.mubr.bf16.gmra.mrb[0].mxu0 %v241
        %v408 = vpop.f32.mrb[0].mxu0
        %v409 = vadd.f32 0.0, %v408
        %v410 = vpop.f32.mrb[0].mxu0
        %v411 = vpop.f32.mrb[0].mxu0
        %v412 = vadd.f32 0.0, %v411
        %v413 = vpop.f32.mrb[0].mxu0
        %414 = vmatprep.mubr.bf16.mxu0 %v354
        %415 = vmatmul.mubr.bf16.gmra.mrb[0].mxu0 %v243
        %v416 = vpop.f32.mrb[0].mxu0
        %v417 = vadd.f32 0.0, %v416
        %v418 = vpop.f32.mrb[0].mxu0
        %v419 = vpop.f32.mrb[0].mxu0
        %v420 = vadd.f32 0.0, %v419
        %v421 = vpop.f32.mrb[0].mxu0
        %422 = vmatprep.mubr.bf16.mxu0 %v357
        %423 = vmatmul.mubr.bf16.gmra.mrb[0].mxu0 %v245
        %v424 = vpop.f32.mrb[0].mxu0
        %v425 = vadd.f32 0.0, %v424
        %v426 = vpop.f32.mrb[0].mxu0
        %v427 = vpop.f32.mrb[0].mxu0
        %v428 = vadd.f32 0.0, %v427
        %v429 = vpop.f32.mrb[0].mxu0
        %430 = vmatprep.mubr.bf16.mxu0 %v360
        %431 = vmatmul.mubr.bf16.gmra.mrb[0].mxu0 %v247
        %v432 = vpop.f32.mrb[0].mxu0
        %v433 = vadd.f32 0.0, %v432
        %v434 = vpop.f32.mrb[0].mxu0
        %v435 = vpop.f32.mrb[0].mxu0
        %v436 = vadd.f32 0.0, %v435
        %v437 = vpop.f32.mrb[0].mxu0
        %438 = vmatprep.mubr.bf16.mxu0 %v363
        %439 = vmatmul.mubr.bf16.gmra.mrb[0].mxu0 %v249
        %v440 = vpop.f32.mrb[0].mxu0
        %v441 = vadd.f32 0.0, %v440
        %v442 = vpop.f32.mrb[0].mxu0
        %v443 = vpop.f32.mrb[0].mxu0
        %v444 = vadd.f32 0.0, %v443
        %v445 = vpop.f32.mrb[0].mxu0
        %446 = vmatprep.mubr.bf16.mxu0 %v366
        %447 = vmatmul.mubr.bf16.gmra.mrb[0].mxu0 %v251
        %v448 = vpop.f32.mrb[0].mxu0
        %v449 = vadd.f32 0.0, %v448
        %v450 = vpop.f32.mrb[0].mxu0
        %v451 = vpop.f32.mrb[0].mxu0
        %v452 = vadd.f32 0.0, %v451
        %v453 = vpop.f32.mrb[0].mxu0
        %454 = vmatprep.mubr.bf16.mxu0 %v369
        %455 = vmatmul.mubr.bf16.gmra.mrb[0].mxu0 %v253
        %v456 = vpop.f32.mrb[0].mxu0
        %v457 = vadd.f32 0.0, %v456
        %v458 = vpop.f32.mrb[0].mxu0
        %v459 = vpop.f32.mrb[0].mxu0
        %v460 = vadd.f32 0.0, %v459
        %v461 = vpop.f32.mrb[0].mxu0
        %462 = vmatprep.mubr.bf16.mxu0 %v372
        %463 = vmatmul.mubr.bf16.gmra.mrb[0].mxu0 %v255
        %v464 = vpop.f32.mrb[0].mxu0
        %v465 = vadd.f32 0.0, %v464
        %v466 = vpop.f32.mrb[0].mxu0
        %v467 = vpop.f32.mrb[0].mxu0
        %v468 = vadd.f32 0.0, %v467
        %v469 = vpop.f32.mrb[0].mxu0
        %470 = vdwg.mxu0
        %471 = vst [vmem:[%s139] sm:$0xff] %v409
        %472 = vst [vmem:[%s139 + $0x8] sm:$0xff] %v412
        %473 = vst [vmem:[%s139 + $0x10] sm:$0xff] %v417
        %474 = vst [vmem:[%s139 + $0x18] sm:$0xff] %v420
        %475 = vst [vmem:[%s139 + $0x20] sm:$0xff] %v425
        %476 = vst [vmem:[%s139 + $0x28] sm:$0xff] %v428
        %477 = vst [vmem:[%s139 + $0x30] sm:$0xff] %v433
        %478 = vst [vmem:[%s139 + $0x38] sm:$0xff] %v436
        %479 = vst [vmem:[%s139 + $0x40] sm:$0xff] %v441
        %480 = vst [vmem:[%s139 + $0x48] sm:$0xff] %v444
        %481 = vst [vmem:[%s139 + $0x50] sm:$0xff] %v449
        %482 = vst [vmem:[%s139 + $0x58] sm:$0xff] %v452
        %483 = vst [vmem:[%s139 + $0x60] sm:$0xff] %v457
        %484 = vst [vmem:[%s139 + $0x68] sm:$0xff] %v460
        %485 = vst [vmem:[%s139 + $0x70] sm:$0xff] %v465
        %486 = vst [vmem:[%s139 + $0x78] sm:$0xff] %v468
        %s487 = sand.u32 %s71, 1
        %s488 = scalar_lea.sflag [#allocation3], %s487
        %s489 = sand.u32 %s71, 1
        %s490 = smul.addr %s489, 128
        %s491 = scalar_lea.vmem [#allocation2], %s490
        // Predicated region
        $region29: #{resblock_forward.11} parent=27 // pred_check
          %p492 = pneg %p81
        $region30: #{resblock_forward.11} parent=27 // pred_check_branch
          %494 = sbr.rel (%p492) target = $region32
        $region31: #{resblock_forward.11} parent=27 // pred_region
          %s495 = smul.u32 16, %s16
          %s497 = ssub.s32 2048, 2048
          %498 = vsyncadd %s488, %s497
          %s499 = smul.addr %s495, 128
          %s500 = scalar_lea.hbm %s2, %s499
          %s501 = sshll.u32 %s491, 4
          %s502 = int_to_ptr.vmem [resolvable:$true] %s501
          %507 = dma.vmem_to_hbm [thread:$0]  %s502, 2048, %s500, %s488, 128, 128, 8
        $region32: #{resblock_forward.11} parent=27 // pred_fallthru
          _
      $region28: #{resblock_forward.11} parent=5 // pred_fallthru
        _
      %p508 = scmp.le.s32.totalorder 2, %s11
      // Predicated region
      $region33: #{resblock_forward.11} parent=5 // pred_check
        %p509 = pneg %p508
      $region34: #{resblock_forward.11} parent=5 // pred_check_branch
        %511 = sbr.rel (%p509) target = $region36
      $region35: #{resblock_forward.11} parent=5 // pred_region
        %s512 = ssub.s32 %s11, 2
        // Predicated region
        $region37: #{resblock_forward.11} parent=35 // pred_check
          %p513 = pneg %p87
        $region38: #{resblock_forward.11} parent=35 // pred_check_branch
          %515 = sbr.rel (%p513) target = $region40
        $region39: #{resblock_forward.11} parent=35 // pred_region
          %s516 = sand.u32 %s72, 1
          %s517 = scalar_lea.sflag [#allocation3], %s516
          %s518 = sand.u32 %s72, 1
          %s519 = smul.addr %s518, 128
          %s520 = scalar_lea.vmem [#allocation2], %s519
          %521 = dma.done %s517, 2048
        $region40: #{resblock_forward.11} parent=35 // pred_fallthru
          _
      $region36: #{resblock_forward.11} parent=5 // pred_fallthru
        _
    $region6: #{resblock_forward.11} parent=1 // loop_footer
      %s15 = sadd.s32 1, %s11
    $region7: #{resblock_forward.11} parent=1 // loop_footer_branch
      %10 = sbr.rel target = $region3
    $region8: #{resblock_forward.11} parent=1 // loop_exit
      _
    %522 = vsyncpa [#allocation3], 1
    %s523 = scalar_lea.sflag [#allocation3], 1
    %524 = vsyncpa %s523, 1

</llo_original>
